<compile_context>
chip_gen: v7x
topology: tpu7x:2x2x1
jax: 0.10.0
libtpu: 0.0.40
codegen_flags: <defaults>
</compile_context>

<pallas_src>
import numpy as np

import jax
import jax.numpy as jnp
from jax.experimental import pallas as pl
from jax.experimental.pallas import tpu as pltpu

N_PRIMITIVES = 10  # ['none','max_pool_3x3','avg_pool_3x3','skip_connect','sep_conv_3x3',
                   #  'sep_conv_5x5','dil_conv_3x3','dil_conv_5x5','conv_1x1','conv_3x3']

# Static row layout of the per-tap depthwise weight rows (i-major, j-minor per conv).
DW_OFF = {"sep3_dw1": 0, "sep3_dw2": 9, "sep5_dw1": 18, "sep5_dw2": 43,
          "dil3_dw": 68, "dil5_dw": 77}
N_DW_ROWS = 102
PW_IDX = {"sep3_pw1": 0, "sep3_pw2": 1, "sep5_pw1": 2, "sep5_pw2": 3,
          "dil3_pw": 4, "dil5_pw": 5, "c11": 6}


# ----------------------------- wrapper glue (layout / parameter packing) -----

def _pack(x):
    # (N, C, H, W) -> (H, C*N*W) with lane = c*(N*W) + n*W + w.
    n, c, h, w = x.shape
    return jnp.transpose(x, (2, 1, 0, 3)).reshape(h, c * n * w)


def _unpack(p, n, c, h, w):
    return jnp.transpose(p.reshape(h, c, n, w), (2, 1, 0, 3))


def _lane_mask_np(cs, N, C, W):
    # 1.0 where the tap read (w + cs) stays inside [0, W) of its own image row.
    L = C * N * W
    wpos = np.arange(L) % W
    return ((wpos + cs >= 0) & (wpos + cs < W)).astype(np.float32)


def _dw_rows(wdw, k, pad, dil, N, C, W):
    # Per-tap (1, L) rows: depthwise weight broadcast over its channel's lane block,
    # multiplied by the lane-validity mask of that tap's column shift.
    L = C * N * W
    cidx = np.arange(L) // (N * W)
    rows = []
    for i in range(k):
        for j in range(k):
            cs = j * dil - pad
            lm = jnp.asarray(_lane_mask_np(cs, N, C, W))
            rows.append(wdw[:, 0, i, j][cidx] * lm)
    return jnp.stack(rows)                                   # (k*k, L)


def _cmix_rows(w, N, C, W):
    # 1x1-conv channel mixing as C per-lane weight rows: row d multiplies the input
    # lane-rolled by d*(N*W); wrow_d[l] = w[c_out(l), (c_out(l)-d) mod C].
    L = C * N * W
    co = np.arange(L) // (N * W)
    wm = w[:, :, 0, 0]
    rows = [wm[co, (co - d) % C] for d in range(C)]
    return jnp.stack(rows)                                   # (C, L)


def _c33_rows(w, N, C, W):
    # Dense 3x3 conv: per-(tap, d) weight rows applied BEFORE the channel roll
    # (rolls of the C accumulators are hoisted to the end of the op):
    #   u[(i,j),d][l] = w[(c(l)+d) mod C, c(l), i, j] * lane_mask(cs_j)[l]
    L = C * N * W
    co = np.arange(L) // (N * W)
    rows = []
    for i in range(3):
        for j in range(3):
            lm = jnp.asarray(_lane_mask_np(j - 1, N, C, W))
            for d in range(C):
                rows.append(w[(co + d) % C, co, i, j] * lm)
    return jnp.stack(rows)                                   # (9*C, L)


def _bn_stat_mat(N, C, H, W):
    # (L, L) block-averaging matrix: (row of lane sums) @ S = per-channel mean
    # broadcast back over that channel's lane block.
    L = C * N * W
    blk = N * W
    lane = np.arange(L)
    same_ch = (lane[:, None] // blk == lane[None, :] // blk).astype(np.float32)
    return same_ch / float(N * H * W)


# ----------------------------- kernel ----------------------------------------

def make_mixed_op_kernel(N, C, H, W):
    L = N * C * W
    blk = N * W
    eps = 1e-5
    BIG = 1e30
    f32 = jnp.float32

    def kernel(aw_ref, x_ref, wpos_ref, dwm_ref, cmx_ref, c33_ref, smat_ref, out_ref):
        x = x_ref[...]                                        # (H, L) lane-dense f32
        rx = jnp.maximum(x, 0.0)                              # relu(x), in-kernel
        wpos = wpos_ref[...]                                  # (1, L): w position per lane
        rows = jax.lax.broadcasted_iota(jnp.int32, (H, L), 0)

        # --- roll helpers: shifted tap operands without halo slabs ----------
        def rshift(src, rs):
            # value at (h + rs, l); rows shifted past the image border read 0
            if rs == 0:
                return src
            v = pltpu.roll(src, (-rs) % H, 0)
            m = rows < (H - rs) if rs > 0 else rows >= (-rs)
            return jnp.where(m, v, 0.0)

        def lshift(src, cs):
            # value at (h, l + cs); lane validity handled by folded weight rows / masks
            if cs == 0:
                return src
            return pltpu.roll(src, (-cs) % L, 1)

        def row_mask_f(rs):                                   # (H, L) f32 validity
            m = rows < (H - rs) if rs > 0 else rows >= (-rs)
            return jnp.where(m, 1.0, 0.0)

        def lane_mask_f(cs):                                  # (1, L) f32 validity
            m = wpos < float(W - cs) if cs > 0 else wpos >= float(-cs)
            return jnp.where(m, 1.0, 0.0)

        # --- conv / BN building blocks ---------------------------------------
        def dwconv(src, ksz, pad, dil, base):
            # Depthwise conv, all channels at once; lane validity is folded into the
            # per-tap weight rows, row validity via the hoisted rshift per i.
            acc = None
            idx = 0
            for i in range(ksz):
                r = rshift(src, i * dil - pad)
                for j in range(ksz):
                    term = dwm_ref[pl.ds(base + idx, 1), :] * lshift(r, j * dil - pad)
                    acc = term if acc is None else acc + term
                    idx += 1
            return acc

        def chan_mix(t, conv_idx):
            # 1x1 conv over channels: C aligned lane-rolls (multiples of blk) + FMAs.
            out = None
            for d in range(C):
                v = t if d == 0 else pltpu.roll(t, d * blk, 1)
                term = cmx_ref[pl.ds(conv_idx * C + d, 1), :] * v
                out = term if out is None else out + term
            return out

        def stat_rows(v):
            return [jnp.sum(v, axis=0, keepdims=True),
                    jnp.sum(v * v, axis=0, keepdims=True)]

        def bn_apply(v, st, b, gain):
            # BatchNorm2d(affine=False), training-mode batch stats; `gain` folds the
            # DARTS architecture weight into the BN scale.
            mean = st[2 * b:2 * b + 1, :]
            ex2 = st[2 * b + 1:2 * b + 2, :]
            var = jnp.maximum(ex2 - mean * mean, 0.0)
            return (v - mean) * (gain * jax.lax.rsqrt(var + eps))

        # op 3: skip_connect (Identity).  op 0 'none' contributes exactly 0 -> omitted.
        total = aw_ref[3] * x

        # ---- ops 1 & 2: max/avg pool 3x3 (stride 1, pad 1), shared shifted x ----
        mp = None
        ap = None
        cnt = None
        for i in range(3):
            rs = i - 1
            xr = rshift(x, rs)
            rmf = row_mask_f(rs) if rs != 0 else None
            for j in range(3):
                cs = j - 1
                opnd = lshift(xr, cs)
                lmf = lane_mask_f(cs) if cs != 0 else None
                if rmf is None and lmf is None:
                    valid = None                              # centre tap: always valid
                elif rmf is None:
                    valid = lmf
                elif lmf is None:
                    valid = rmf
                else:
                    valid = rmf * lmf
                # max pool: invalid taps -> -BIG (PyTorch pads max pool with -inf)
                mv = opnd if valid is None else opnd + (valid - 1.0) * BIG
                mp = mv if mp is None else jnp.maximum(mp, mv)
                # avg pool: sum of valid taps / valid count (count_include_pad=False)
                av = opnd if valid is None else opnd * valid
                ap = av if ap is None else ap + av
                cnt = (1.0 if cnt is None else cnt + 1.0) if valid is None else \
                      (valid if cnt is None else cnt + valid)
        ap = ap / cnt

        # ---- stage A: pools + inner halves of the separable convs ----------
        s3i = chan_mix(dwconv(rx, 3, 1, 1, DW_OFF["sep3_dw1"]), PW_IDX["sep3_pw1"])
        s5i = chan_mix(dwconv(rx, 5, 2, 1, DW_OFF["sep5_dw1"]), PW_IDX["sep5_pw1"])
        lhs_a = jnp.concatenate(stat_rows(mp) + stat_rows(ap) +
                                stat_rows(s3i) + stat_rows(s5i), axis=0)     # (8, L)
        st_a = jnp.dot(lhs_a, smat_ref[...], preferred_element_type=f32)
        total = total + bn_apply(mp, st_a, 0, aw_ref[1])
        total = total + bn_apply(ap, st_a, 1, aw_ref[2])
        t3 = jnp.maximum(bn_apply(s3i, st_a, 2, 1.0), 0.0)
        t5 = jnp.maximum(bn_apply(s5i, st_a, 3, 1.0), 0.0)

        # ---- stage B: remaining conv branches -------------------------------
        s3o = chan_mix(dwconv(t3, 3, 1, 1, DW_OFF["sep3_dw2"]), PW_IDX["sep3_pw2"])
        s5o = chan_mix(dwconv(t5, 5, 2, 1, DW_OFF["sep5_dw2"]), PW_IDX["sep5_pw2"])
        d3 = chan_mix(dwconv(rx, 3, 2, 2, DW_OFF["dil3_dw"]), PW_IDX["dil3_pw"])
        d5 = chan_mix(dwconv(rx, 5, 4, 2, DW_OFF["dil5_dw"]), PW_IDX["dil5_pw"])
        c11v = chan_mix(rx, PW_IDX["c11"])

        # op 9: conv_3x3 (ReLU -> 3x3 conv, pad 1): per-tap lane-masked weight rows,
        # the C channel rolls are hoisted onto the accumulators.
        accs = [None] * C
        for i in range(3):
            r = rshift(rx, i - 1)
            for j in range(3):
                s = lshift(r, j - 1)
                for d in range(C):
                    term = c33_ref[pl.ds((i * 3 + j) * C + d, 1), :] * s
                    accs[d] = term if accs[d] is None else accs[d] + term
        c33v = accs[0]
        for d in range(1, C):
            c33v = c33v + pltpu.roll(accs[d], d * blk, 1)

        zrows = jnp.zeros((4, L), f32)
        lhs_b = jnp.concatenate(stat_rows(s3o) + stat_rows(s5o) + stat_rows(d3) +
                                stat_rows(d5) + stat_rows(c11v) + stat_rows(c33v) +
                                [zrows], axis=0)                              # (16, L)
        st_b = jnp.dot(lhs_b, smat_ref[...], preferred_element_type=f32)
        total = total + bn_apply(s3o, st_b, 0, aw_ref[4])
        total = total + bn_apply(s5o, st_b, 1, aw_ref[5])
        total = total + bn_apply(d3, st_b, 2, aw_ref[6])
        total = total + bn_apply(d5, st_b, 3, aw_ref[7])
        total = total + bn_apply(c11v, st_b, 4, aw_ref[8])
        total = total + bn_apply(c33v, st_b, 5, aw_ref[9])

        out_ref[...] = total                                  # single lane-dense store

    return kernel


# ----------------------------- forward wrapper -------------------------------

def mixed_op_forward(x, arch_weights, params):
    """x: (N, C, H, W) f32; arch_weights: (10,) f32; params: PyTorch-shaped conv weights."""
    N, C, H, W = x.shape
    L = C * N * W
    x = x.astype(jnp.float32)

    xpk = _pack(x)                                                     # (H, L)
    wpos = jnp.asarray((np.arange(L) % W).astype(np.float32)).reshape(1, L)
    smat = jnp.asarray(_bn_stat_mat(N, C, H, W))                       # (L, L)

    dwm = jnp.concatenate([
        _dw_rows(params["sep3_dw1"], 3, 1, 1, N, C, W),
        _dw_rows(params["sep3_dw2"], 3, 1, 1, N, C, W),
        _dw_rows(params["sep5_dw1"], 5, 2, 1, N, C, W),
        _dw_rows(params["sep5_dw2"], 5, 2, 1, N, C, W),
        _dw_rows(params["dil3_dw"], 3, 2, 2, N, C, W),
        _dw_rows(params["dil5_dw"], 5, 4, 2, N, C, W),
    ], axis=0)                                                         # (102, L)
    cmx = jnp.concatenate([
        _cmix_rows(params["sep3_pw1"], N, C, W),
        _cmix_rows(params["sep3_pw2"], N, C, W),
        _cmix_rows(params["sep5_pw1"], N, C, W),
        _cmix_rows(params["sep5_pw2"], N, C, W),
        _cmix_rows(params["dil3_pw"], N, C, W),
        _cmix_rows(params["dil5_pw"], N, C, W),
        _cmix_rows(params["c11_w"], N, C, W),
    ], axis=0)                                                         # (7*C, L)
    c33 = _c33_rows(params["c33_w"], N, C, W)                          # (9*C, L)

    kernel = make_mixed_op_kernel(N, C, H, W)
    vm = pl.BlockSpec(memory_space=pltpu.MemorySpace.VMEM)
    out_packed = pl.pallas_call(
        kernel,
        out_shape=jax.ShapeDtypeStruct((H, L), jnp.float32),
        in_specs=[
            pl.BlockSpec(memory_space=pltpu.MemorySpace.SMEM),  # architecture weights
            vm,   # x packed (lane-dense)
            vm,   # per-lane w-position (for in-kernel lane-validity masks)
            vm,   # depthwise-conv tap weight rows (lane masks folded in)
            vm,   # 1x1-conv channel-mix weight rows
            vm,   # dense 3x3-conv channel-mix weight rows
            vm,   # BN block-averaging matrix
        ],
        out_specs=vm,
    )(arch_weights.astype(jnp.float32), xpk, wpos, dwm, cmx, c33, smat)
    return _unpack(out_packed, N, C, H, W)


if __name__ == "__main__":
    N, C, H, W = 2, 4, 16, 16
    key = jax.random.PRNGKey(0)
    keys = jax.random.split(key, 20)

    x = jax.random.normal(keys[0], (N, C, H, W), jnp.float32)

    def mk(i, shape):
        return 0.1 * jax.random.normal(keys[i], shape, jnp.float32)

    params = {
        "sep3_dw1": mk(1, (C, 1, 3, 3)), "sep3_pw1": mk(2, (C, C, 1, 1)),
        "sep3_dw2": mk(3, (C, 1, 3, 3)), "sep3_pw2": mk(4, (C, C, 1, 1)),
        "sep5_dw1": mk(5, (C, 1, 5, 5)), "sep5_pw1": mk(6, (C, C, 1, 1)),
        "sep5_dw2": mk(7, (C, 1, 5, 5)), "sep5_pw2": mk(8, (C, C, 1, 1)),
        "dil3_dw": mk(9, (C, 1, 3, 3)), "dil3_pw": mk(10, (C, C, 1, 1)),
        "dil5_dw": mk(11, (C, 1, 5, 5)), "dil5_pw": mk(12, (C, C, 1, 1)),
        "c11_w": mk(13, (C, C, 1, 1)), "c33_w": mk(14, (C, C, 3, 3)),
    }
    alpha = jax.random.normal(keys[15], (N_PRIMITIVES,), jnp.float32)
    weights = jax.nn.softmax(alpha)                     # DARTS architecture weights

    fwd = jax.jit(mixed_op_forward)
    y = fwd(x, weights, params)
    jax.block_until_ready(y)
    assert y.shape == (N, C, H, W)
    assert bool(jnp.all(jnp.isfinite(y)))
    print("KERNEL_OK")
</pallas_src>

<mosaic_0001>
module attributes {stable_mosaic.version = 11 : i64} {
  func.func @kernel(%arg0: memref<10xf32, #tpu.memory_space<smem>>, %arg1: memref<16x128xf32, #tpu.memory_space<vmem>>, %arg2: memref<1x128xf32, #tpu.memory_space<vmem>>, %arg3: memref<102x128xf32, #tpu.memory_space<vmem>>, %arg4: memref<28x128xf32, #tpu.memory_space<vmem>>, %arg5: memref<36x128xf32, #tpu.memory_space<vmem>>, %arg6: memref<128x128xf32, #tpu.memory_space<vmem>>, %arg7: memref<16x128xf32, #tpu.memory_space<vmem>>) attributes {dimension_semantics = [], scalar_prefetch = 0 : i64, scratch_operands = 0 : i64, tpu.core_type = #tpu.core_type<tc>} {
    %c0 = arith.constant 0 : index
    %c0_0 = arith.constant 0 : index
    %0 = vector.load %arg1[%c0, %c0_0] : memref<16x128xf32, #tpu.memory_space<vmem>>, vector<16x128xf32>
    %cst = arith.constant 0.000000e+00 : f32
    %1 = vector.broadcast %cst : f32 to vector<16x128xf32>
    %2 = arith.maximumf %0, %1 : vector<16x128xf32>
    %c0_1 = arith.constant 0 : index
    %c0_2 = arith.constant 0 : index
    %3 = vector.load %arg2[%c0_1, %c0_2] : memref<1x128xf32, #tpu.memory_space<vmem>>, vector<1x128xf32>
    %4 = tpu.iota {dimensions = array<i32: 0>} : vector<16x128xi32>
    %c3 = arith.constant 3 : index
    %5 = memref.load %arg0[%c3] : memref<10xf32, #tpu.memory_space<smem>>
    %6 = vector.broadcast %5 : f32 to vector<16x128xf32>
    %7 = arith.mulf %6, %0 : vector<16x128xf32>
    %c1_i32 = arith.constant 1 : i32
    %8 = tpu.dynamic_rotate %0 by %c1_i32 dim 0 : vector<16x128xf32>, i32 -> vector<16x128xf32>
    %c1_i32_3 = arith.constant 1 : i32
    %9 = vector.broadcast %c1_i32_3 : i32 to vector<16x128xi32>
    %10 = arith.cmpi sge, %4, %9 : vector<16x128xi32>
    %cst_4 = arith.constant 0.000000e+00 : f32
    %11 = vector.broadcast %cst_4 : f32 to vector<16x128xf32>
    %12 = arith.select %10, %8, %11 : vector<16x128xi1>, vector<16x128xf32>
    %c1_i32_5 = arith.constant 1 : i32
    %13 = vector.broadcast %c1_i32_5 : i32 to vector<16x128xi32>
    %14 = arith.cmpi sge, %4, %13 : vector<16x128xi32>
    %cst_6 = arith.constant 1.000000e+00 : f32
    %cst_7 = arith.constant 0.000000e+00 : f32
    %15 = vector.broadcast %cst_6 : f32 to vector<16x128xf32>
    %16 = vector.broadcast %cst_7 : f32 to vector<16x128xf32>
    %17 = arith.select %14, %15, %16 : vector<16x128xi1>, vector<16x128xf32>
    %c1_i32_8 = arith.constant 1 : i32
    %18 = tpu.dynamic_rotate %12 by %c1_i32_8 dim 1 : vector<16x128xf32>, i32 -> vector<16x128xf32>
    %cst_9 = arith.constant 1.000000e+00 : f32
    %19 = vector.broadcast %cst_9 : f32 to vector<1x128xf32>
    %20 = arith.cmpf oge, %3, %19 : vector<1x128xf32>
    %cst_10 = arith.constant 1.000000e+00 : f32
    %cst_11 = arith.constant 0.000000e+00 : f32
    %21 = vector.broadcast %cst_10 : f32 to vector<1x128xf32>
    %22 = vector.broadcast %cst_11 : f32 to vector<1x128xf32>
    %23 = arith.select %20, %21, %22 : vector<1x128xi1>, vector<1x128xf32>
    %24 = vector.broadcast %23 : vector<1x128xf32> to vector<16x128xf32>
    %25 = arith.mulf %17, %24 : vector<16x128xf32>
    %cst_12 = arith.constant 1.000000e+00 : f32
    %26 = vector.broadcast %cst_12 : f32 to vector<16x128xf32>
    %27 = arith.subf %25, %26 : vector<16x128xf32>
    %cst_13 = arith.constant 1.000000e+30 : f32
    %28 = vector.broadcast %cst_13 : f32 to vector<16x128xf32>
    %29 = arith.mulf %27, %28 : vector<16x128xf32>
    %30 = arith.addf %18, %29 : vector<16x128xf32>
    %31 = arith.mulf %18, %25 : vector<16x128xf32>
    %cst_14 = arith.constant 1.000000e+00 : f32
    %32 = vector.broadcast %cst_14 : f32 to vector<16x128xf32>
    %33 = arith.subf %17, %32 : vector<16x128xf32>
    %cst_15 = arith.constant 1.000000e+30 : f32
    %34 = vector.broadcast %cst_15 : f32 to vector<16x128xf32>
    %35 = arith.mulf %33, %34 : vector<16x128xf32>
    %36 = arith.addf %12, %35 : vector<16x128xf32>
    %37 = arith.maximumf %30, %36 : vector<16x128xf32>
    %38 = arith.mulf %12, %17 : vector<16x128xf32>
    %39 = arith.addf %31, %38 : vector<16x128xf32>
    %40 = arith.addf %25, %17 : vector<16x128xf32>
    %c127_i32 = arith.constant 127 : i32
    %41 = tpu.dynamic_rotate %12 by %c127_i32 dim 1 : vector<16x128xf32>, i32 -> vector<16x128xf32>
    %cst_16 = arith.constant 1.500000e+01 : f32
    %42 = vector.broadcast %cst_16 : f32 to vector<1x128xf32>
    %43 = arith.cmpf olt, %3, %42 : vector<1x128xf32>
    %cst_17 = arith.constant 1.000000e+00 : f32
    %cst_18 = arith.constant 0.000000e+00 : f32
    %44 = vector.broadcast %cst_17 : f32 to vector<1x128xf32>
    %45 = vector.broadcast %cst_18 : f32 to vector<1x128xf32>
    %46 = arith.select %43, %44, %45 : vector<1x128xi1>, vector<1x128xf32>
    %47 = vector.broadcast %46 : vector<1x128xf32> to vector<16x128xf32>
    %48 = arith.mulf %17, %47 : vector<16x128xf32>
    %cst_19 = arith.constant 1.000000e+00 : f32
    %49 = vector.broadcast %cst_19 : f32 to vector<16x128xf32>
    %50 = arith.subf %48, %49 : vector<16x128xf32>
    %cst_20 = arith.constant 1.000000e+30 : f32
    %51 = vector.broadcast %cst_20 : f32 to vector<16x128xf32>
    %52 = arith.mulf %50, %51 : vector<16x128xf32>
    %53 = arith.addf %41, %52 : vector<16x128xf32>
    %54 = arith.maximumf %37, %53 : vector<16x128xf32>
    %55 = arith.mulf %41, %48 : vector<16x128xf32>
    %56 = arith.addf %39, %55 : vector<16x128xf32>
    %57 = arith.addf %40, %48 : vector<16x128xf32>
    %c1_i32_21 = arith.constant 1 : i32
    %58 = tpu.dynamic_rotate %0 by %c1_i32_21 dim 1 : vector<16x128xf32>, i32 -> vector<16x128xf32>
    %cst_22 = arith.constant 1.000000e+00 : f32
    %59 = vector.broadcast %cst_22 : f32 to vector<1x128xf32>
    %60 = arith.cmpf oge, %3, %59 : vector<1x128xf32>
    %cst_23 = arith.constant 1.000000e+00 : f32
    %cst_24 = arith.constant 0.000000e+00 : f32
    %61 = vector.broadcast %cst_23 : f32 to vector<1x128xf32>
    %62 = vector.broadcast %cst_24 : f32 to vector<1x128xf32>
    %63 = arith.select %60, %61, %62 : vector<1x128xi1>, vector<1x128xf32>
    %cst_25 = arith.constant 1.000000e+00 : f32
    %64 = vector.broadcast %cst_25 : f32 to vector<1x128xf32>
    %65 = arith.subf %63, %64 : vector<1x128xf32>
    %cst_26 = arith.constant 1.000000e+30 : f32
    %66 = vector.broadcast %cst_26 : f32 to vector<1x128xf32>
    %67 = arith.mulf %65, %66 : vector<1x128xf32>
    %68 = vector.broadcast %67 : vector<1x128xf32> to vector<16x128xf32>
    %69 = arith.addf %58, %68 : vector<16x128xf32>
    %70 = arith.maximumf %54, %69 : vector<16x128xf32>
    %71 = vector.broadcast %63 : vector<1x128xf32> to vector<16x128xf32>
    %72 = arith.mulf %58, %71 : vector<16x128xf32>
    %73 = arith.addf %56, %72 : vector<16x128xf32>
    %74 = vector.broadcast %63 : vector<1x128xf32> to vector<16x128xf32>
    %75 = arith.addf %57, %74 : vector<16x128xf32>
    %76 = arith.maximumf %70, %0 : vector<16x128xf32>
    %77 = arith.addf %73, %0 : vector<16x128xf32>
    %cst_27 = arith.constant 1.000000e+00 : f32
    %78 = vector.broadcast %cst_27 : f32 to vector<16x128xf32>
    %79 = arith.addf %75, %78 : vector<16x128xf32>
    %c127_i32_28 = arith.constant 127 : i32
    %80 = tpu.dynamic_rotate %0 by %c127_i32_28 dim 1 : vector<16x128xf32>, i32 -> vector<16x128xf32>
    %cst_29 = arith.constant 1.500000e+01 : f32
    %81 = vector.broadcast %cst_29 : f32 to vector<1x128xf32>
    %82 = arith.cmpf olt, %3, %81 : vector<1x128xf32>
    %cst_30 = arith.constant 1.000000e+00 : f32
    %cst_31 = arith.constant 0.000000e+00 : f32
    %83 = vector.broadcast %cst_30 : f32 to vector<1x128xf32>
    %84 = vector.broadcast %cst_31 : f32 to vector<1x128xf32>
    %85 = arith.select %82, %83, %84 : vector<1x128xi1>, vector<1x128xf32>
    %cst_32 = arith.constant 1.000000e+00 : f32
    %86 = vector.broadcast %cst_32 : f32 to vector<1x128xf32>
    %87 = arith.subf %85, %86 : vector<1x128xf32>
    %cst_33 = arith.constant 1.000000e+30 : f32
    %88 = vector.broadcast %cst_33 : f32 to vector<1x128xf32>
    %89 = arith.mulf %87, %88 : vector<1x128xf32>
    %90 = vector.broadcast %89 : vector<1x128xf32> to vector<16x128xf32>
    %91 = arith.addf %80, %90 : vector<16x128xf32>
    %92 = arith.maximumf %76, %91 : vector<16x128xf32>
    %93 = vector.broadcast %85 : vector<1x128xf32> to vector<16x128xf32>
    %94 = arith.mulf %80, %93 : vector<16x128xf32>
    %95 = arith.addf %77, %94 : vector<16x128xf32>
    %96 = vector.broadcast %85 : vector<1x128xf32> to vector<16x128xf32>
    %97 = arith.addf %79, %96 : vector<16x128xf32>
    %c15_i32 = arith.constant 15 : i32
    %98 = tpu.dynamic_rotate %0 by %c15_i32 dim 0 : vector<16x128xf32>, i32 -> vector<16x128xf32>
    %c15_i32_34 = arith.constant 15 : i32
    %99 = vector.broadcast %c15_i32_34 : i32 to vector<16x128xi32>
    %100 = arith.cmpi slt, %4, %99 : vector<16x128xi32>
    %cst_35 = arith.constant 0.000000e+00 : f32
    %101 = vector.broadcast %cst_35 : f32 to vector<16x128xf32>
    %102 = arith.select %100, %98, %101 : vector<16x128xi1>, vector<16x128xf32>
    %c15_i32_36 = arith.constant 15 : i32
    %103 = vector.broadcast %c15_i32_36 : i32 to vector<16x128xi32>
    %104 = arith.cmpi slt, %4, %103 : vector<16x128xi32>
    %cst_37 = arith.constant 1.000000e+00 : f32
    %cst_38 = arith.constant 0.000000e+00 : f32
    %105 = vector.broadcast %cst_37 : f32 to vector<16x128xf32>
    %106 = vector.broadcast %cst_38 : f32 to vector<16x128xf32>
    %107 = arith.select %104, %105, %106 : vector<16x128xi1>, vector<16x128xf32>
    %c1_i32_39 = arith.constant 1 : i32
    %108 = tpu.dynamic_rotate %102 by %c1_i32_39 dim 1 : vector<16x128xf32>, i32 -> vector<16x128xf32>
    %cst_40 = arith.constant 1.000000e+00 : f32
    %109 = vector.broadcast %cst_40 : f32 to vector<1x128xf32>
    %110 = arith.cmpf oge, %3, %109 : vector<1x128xf32>
    %cst_41 = arith.constant 1.000000e+00 : f32
    %cst_42 = arith.constant 0.000000e+00 : f32
    %111 = vector.broadcast %cst_41 : f32 to vector<1x128xf32>
    %112 = vector.broadcast %cst_42 : f32 to vector<1x128xf32>
    %113 = arith.select %110, %111, %112 : vector<1x128xi1>, vector<1x128xf32>
    %114 = vector.broadcast %113 : vector<1x128xf32> to vector<16x128xf32>
    %115 = arith.mulf %107, %114 : vector<16x128xf32>
    %cst_43 = arith.constant 1.000000e+00 : f32
    %116 = vector.broadcast %cst_43 : f32 to vector<16x128xf32>
    %117 = arith.subf %115, %116 : vector<16x128xf32>
    %cst_44 = arith.constant 1.000000e+30 : f32
    %118 = vector.broadcast %cst_44 : f32 to vector<16x128xf32>
    %119 = arith.mulf %117, %118 : vector<16x128xf32>
    %120 = arith.addf %108, %119 : vector<16x128xf32>
    %121 = arith.maximumf %92, %120 : vector<16x128xf32>
    %122 = arith.mulf %108, %115 : vector<16x128xf32>
    %123 = arith.addf %95, %122 : vector<16x128xf32>
    %124 = arith.addf %97, %115 : vector<16x128xf32>
    %cst_45 = arith.constant 1.000000e+00 : f32
    %125 = vector.broadcast %cst_45 : f32 to vector<16x128xf32>
    %126 = arith.subf %107, %125 : vector<16x128xf32>
    %cst_46 = arith.constant 1.000000e+30 : f32
    %127 = vector.broadcast %cst_46 : f32 to vector<16x128xf32>
    %128 = arith.mulf %126, %127 : vector<16x128xf32>
    %129 = arith.addf %102, %128 : vector<16x128xf32>
    %130 = arith.maximumf %121, %129 : vector<16x128xf32>
    %131 = arith.mulf %102, %107 : vector<16x128xf32>
    %132 = arith.addf %123, %131 : vector<16x128xf32>
    %133 = arith.addf %124, %107 : vector<16x128xf32>
    %c127_i32_47 = arith.constant 127 : i32
    %134 = tpu.dynamic_rotate %102 by %c127_i32_47 dim 1 : vector<16x128xf32>, i32 -> vector<16x128xf32>
    %cst_48 = arith.constant 1.500000e+01 : f32
    %135 = vector.broadcast %cst_48 : f32 to vector<1x128xf32>
    %136 = arith.cmpf olt, %3, %135 : vector<1x128xf32>
    %cst_49 = arith.constant 1.000000e+00 : f32
    %cst_50 = arith.constant 0.000000e+00 : f32
    %137 = vector.broadcast %cst_49 : f32 to vector<1x128xf32>
    %138 = vector.broadcast %cst_50 : f32 to vector<1x128xf32>
    %139 = arith.select %136, %137, %138 : vector<1x128xi1>, vector<1x128xf32>
    %140 = vector.broadcast %139 : vector<1x128xf32> to vector<16x128xf32>
    %141 = arith.mulf %107, %140 : vector<16x128xf32>
    %cst_51 = arith.constant 1.000000e+00 : f32
    %142 = vector.broadcast %cst_51 : f32 to vector<16x128xf32>
    %143 = arith.subf %141, %142 : vector<16x128xf32>
    %cst_52 = arith.constant 1.000000e+30 : f32
    %144 = vector.broadcast %cst_52 : f32 to vector<16x128xf32>
    %145 = arith.mulf %143, %144 : vector<16x128xf32>
    %146 = arith.addf %134, %145 : vector<16x128xf32>
    %147 = arith.maximumf %130, %146 : vector<16x128xf32>
    %148 = arith.mulf %134, %141 : vector<16x128xf32>
    %149 = arith.addf %132, %148 : vector<16x128xf32>
    %150 = arith.addf %133, %141 : vector<16x128xf32>
    %151 = arith.divf %149, %150 : vector<16x128xf32>
    %c1_i32_53 = arith.constant 1 : i32
    %152 = tpu.dynamic_rotate %2 by %c1_i32_53 dim 0 : vector<16x128xf32>, i32 -> vector<16x128xf32>
    %c1_i32_54 = arith.constant 1 : i32
    %153 = vector.broadcast %c1_i32_54 : i32 to vector<16x128xi32>
    %154 = arith.cmpi sge, %4, %153 : vector<16x128xi32>
    %cst_55 = arith.constant 0.000000e+00 : f32
    %155 = vector.broadcast %cst_55 : f32 to vector<16x128xf32>
    %156 = arith.select %154, %152, %155 : vector<16x128xi1>, vector<16x128xf32>
    %c0_56 = arith.constant 0 : index
    %c0_57 = arith.constant 0 : index
    %157 = vector.load %arg3[%c0_56, %c0_57] : memref<102x128xf32, #tpu.memory_space<vmem>>, vector<1x128xf32>
    %c1_i32_58 = arith.constant 1 : i32
    %158 = tpu.dynamic_rotate %156 by %c1_i32_58 dim 1 : vector<16x128xf32>, i32 -> vector<16x128xf32>
    %159 = vector.broadcast %157 : vector<1x128xf32> to vector<16x128xf32>
    %160 = arith.mulf %159, %158 : vector<16x128xf32>
    %c1 = arith.constant 1 : index
    %c0_59 = arith.constant 0 : index
    %161 = vector.load %arg3[%c1, %c0_59] : memref<102x128xf32, #tpu.memory_space<vmem>>, vector<1x128xf32>
    %162 = vector.broadcast %161 : vector<1x128xf32> to vector<16x128xf32>
    %163 = arith.mulf %162, %156 : vector<16x128xf32>
    %164 = arith.addf %160, %163 : vector<16x128xf32>
    %c2 = arith.constant 2 : index
    %c0_60 = arith.constant 0 : index
    %165 = vector.load %arg3[%c2, %c0_60] : memref<102x128xf32, #tpu.memory_space<vmem>>, vector<1x128xf32>
    %c127_i32_61 = arith.constant 127 : i32
    %166 = tpu.dynamic_rotate %156 by %c127_i32_61 dim 1 : vector<16x128xf32>, i32 -> vector<16x128xf32>
    %167 = vector.broadcast %165 : vector<1x128xf32> to vector<16x128xf32>
    %168 = arith.mulf %167, %166 : vector<16x128xf32>
    %169 = arith.addf %164, %168 : vector<16x128xf32>
    %c3_62 = arith.constant 3 : index
    %c0_63 = arith.constant 0 : index
    %170 = vector.load %arg3[%c3_62, %c0_63] : memref<102x128xf32, #tpu.memory_space<vmem>>, vector<1x128xf32>
    %c1_i32_64 = arith.constant 1 : i32
    %171 = tpu.dynamic_rotate %2 by %c1_i32_64 dim 1 : vector<16x128xf32>, i32 -> vector<16x128xf32>
    %172 = vector.broadcast %170 : vector<1x128xf32> to vector<16x128xf32>
    %173 = arith.mulf %172, %171 : vector<16x128xf32>
    %174 = arith.addf %169, %173 : vector<16x128xf32>
    %c4 = arith.constant 4 : index
    %c0_65 = arith.constant 0 : index
    %175 = vector.load %arg3[%c4, %c0_65] : memref<102x128xf32, #tpu.memory_space<vmem>>, vector<1x128xf32>
    %176 = vector.broadcast %175 : vector<1x128xf32> to vector<16x128xf32>
    %177 = arith.mulf %176, %2 : vector<16x128xf32>
    %178 = arith.addf %174, %177 : vector<16x128xf32>
    %c5 = arith.constant 5 : index
    %c0_66 = arith.constant 0 : index
    %179 = vector.load %arg3[%c5, %c0_66] : memref<102x128xf32, #tpu.memory_space<vmem>>, vector<1x128xf32>
    %c127_i32_67 = arith.constant 127 : i32
    %180 = tpu.dynamic_rotate %2 by %c127_i32_67 dim 1 : vector<16x128xf32>, i32 -> vector<16x128xf32>
    %181 = vector.broadcast %179 : vector<1x128xf32> to vector<16x128xf32>
    %182 = arith.mulf %181, %180 : vector<16x128xf32>
    %183 = arith.addf %178, %182 : vector<16x128xf32>
    %c15_i32_68 = arith.constant 15 : i32
    %184 = tpu.dynamic_rotate %2 by %c15_i32_68 dim 0 : vector<16x128xf32>, i32 -> vector<16x128xf32>
    %c15_i32_69 = arith.constant 15 : i32
    %185 = vector.broadcast %c15_i32_69 : i32 to vector<16x128xi32>
    %186 = arith.cmpi slt, %4, %185 : vector<16x128xi32>
    %cst_70 = arith.constant 0.000000e+00 : f32
    %187 = vector.broadcast %cst_70 : f32 to vector<16x128xf32>
    %188 = arith.select %186, %184, %187 : vector<16x128xi1>, vector<16x128xf32>
    %c6 = arith.constant 6 : index
    %c0_71 = arith.constant 0 : index
    %189 = vector.load %arg3[%c6, %c0_71] : memref<102x128xf32, #tpu.memory_space<vmem>>, vector<1x128xf32>
    %c1_i32_72 = arith.constant 1 : i32
    %190 = tpu.dynamic_rotate %188 by %c1_i32_72 dim 1 : vector<16x128xf32>, i32 -> vector<16x128xf32>
    %191 = vector.broadcast %189 : vector<1x128xf32> to vector<16x128xf32>
    %192 = arith.mulf %191, %190 : vector<16x128xf32>
    %193 = arith.addf %183, %192 : vector<16x128xf32>
    %c7 = arith.constant 7 : index
    %c0_73 = arith.constant 0 : index
    %194 = vector.load %arg3[%c7, %c0_73] : memref<102x128xf32, #tpu.memory_space<vmem>>, vector<1x128xf32>
    %195 = vector.broadcast %194 : vector<1x128xf32> to vector<16x128xf32>
    %196 = arith.mulf %195, %188 : vector<16x128xf32>
    %197 = arith.addf %193, %196 : vector<16x128xf32>
    %c8 = arith.constant 8 : index
    %c0_74 = arith.constant 0 : index
    %198 = vector.load %arg3[%c8, %c0_74] : memref<102x128xf32, #tpu.memory_space<vmem>>, vector<1x128xf32>
    %c127_i32_75 = arith.constant 127 : i32
    %199 = tpu.dynamic_rotate %188 by %c127_i32_75 dim 1 : vector<16x128xf32>, i32 -> vector<16x128xf32>
    %200 = vector.broadcast %198 : vector<1x128xf32> to vector<16x128xf32>
    %201 = arith.mulf %200, %199 : vector<16x128xf32>
    %202 = arith.addf %197, %201 : vector<16x128xf32>
    %c0_76 = arith.constant 0 : index
    %c0_77 = arith.constant 0 : index
    %203 = vector.load %arg4[%c0_76, %c0_77] : memref<28x128xf32, #tpu.memory_space<vmem>>, vector<1x128xf32>
    %204 = vector.broadcast %203 : vector<1x128xf32> to vector<16x128xf32>
    %205 = arith.mulf %204, %202 : vector<16x128xf32>
    %c32_i32 = arith.constant 32 : i32
    %206 = tpu.dynamic_rotate %202 by %c32_i32 dim 1 : vector<16x128xf32>, i32 -> vector<16x128xf32>
    %c1_78 = arith.constant 1 : index
    %c0_79 = arith.constant 0 : index
    %207 = vector.load %arg4[%c1_78, %c0_79] : memref<28x128xf32, #tpu.memory_space<vmem>>, vector<1x128xf32>
    %208 = vector.broadcast %207 : vector<1x128xf32> to vector<16x128xf32>
    %209 = arith.mulf %208, %206 : vector<16x128xf32>
    %210 = arith.addf %205, %209 : vector<16x128xf32>
    %c64_i32 = arith.constant 64 : i32
    %211 = tpu.dynamic_rotate %202 by %c64_i32 dim 1 : vector<16x128xf32>, i32 -> vector<16x128xf32>
    %c2_80 = arith.constant 2 : index
    %c0_81 = arith.constant 0 : index
    %212 = vector.load %arg4[%c2_80, %c0_81] : memref<28x128xf32, #tpu.memory_space<vmem>>, vector<1x128xf32>
    %213 = vector.broadcast %212 : vector<1x128xf32> to vector<16x128xf32>
    %214 = arith.mulf %213, %211 : vector<16x128xf32>
    %215 = arith.addf %210, %214 : vector<16x128xf32>
    %c96_i32 = arith.constant 96 : i32
    %216 = tpu.dynamic_rotate %202 by %c96_i32 dim 1 : vector<16x128xf32>, i32 -> vector<16x128xf32>
    %c3_82 = arith.constant 3 : index
    %c0_83 = arith.constant 0 : index
    %217 = vector.load %arg4[%c3_82, %c0_83] : memref<28x128xf32, #tpu.memory_space<vmem>>, vector<1x128xf32>
    %218 = vector.broadcast %217 : vector<1x128xf32> to vector<16x128xf32>
    %219 = arith.mulf %218, %216 : vector<16x128xf32>
    %220 = arith.addf %215, %219 : vector<16x128xf32>
    %c2_i32 = arith.constant 2 : i32
    %221 = tpu.dynamic_rotate %2 by %c2_i32 dim 0 : vector<16x128xf32>, i32 -> vector<16x128xf32>
    %c2_i32_84 = arith.constant 2 : i32
    %222 = vector.broadcast %c2_i32_84 : i32 to vector<16x128xi32>
    %223 = arith.cmpi sge, %4, %222 : vector<16x128xi32>
    %cst_85 = arith.constant 0.000000e+00 : f32
    %224 = vector.broadcast %cst_85 : f32 to vector<16x128xf32>
    %225 = arith.select %223, %221, %224 : vector<16x128xi1>, vector<16x128xf32>
    %c18 = arith.constant 18 : index
    %c0_86 = arith.constant 0 : index
    %226 = vector.load %arg3[%c18, %c0_86] : memref<102x128xf32, #tpu.memory_space<vmem>>, vector<1x128xf32>
    %c2_i32_87 = arith.constant 2 : i32
    %227 = tpu.dynamic_rotate %225 by %c2_i32_87 dim 1 : vector<16x128xf32>, i32 -> vector<16x128xf32>
    %228 = vector.broadcast %226 : vector<1x128xf32> to vector<16x128xf32>
    %229 = arith.mulf %228, %227 : vector<16x128xf32>
    %c19 = arith.constant 19 : index
    %c0_88 = arith.constant 0 : index
    %230 = vector.load %arg3[%c19, %c0_88] : memref<102x128xf32, #tpu.memory_space<vmem>>, vector<1x128xf32>
    %c1_i32_89 = arith.constant 1 : i32
    %231 = tpu.dynamic_rotate %225 by %c1_i32_89 dim 1 : vector<16x128xf32>, i32 -> vector<16x128xf32>
    %232 = vector.broadcast %230 : vector<1x128xf32> to vector<16x128xf32>
    %233 = arith.mulf %232, %231 : vector<16x128xf32>
    %234 = arith.addf %229, %233 : vector<16x128xf32>
    %c20 = arith.constant 20 : index
    %c0_90 = arith.constant 0 : index
    %235 = vector.load %arg3[%c20, %c0_90] : memref<102x128xf32, #tpu.memory_space<vmem>>, vector<1x128xf32>
    %236 = vector.broadcast %235 : vector<1x128xf32> to vector<16x128xf32>
    %237 = arith.mulf %236, %225 : vector<16x128xf32>
    %238 = arith.addf %234, %237 : vector<16x128xf32>
    %c21 = arith.constant 21 : index
    %c0_91 = arith.constant 0 : index
    %239 = vector.load %arg3[%c21, %c0_91] : memref<102x128xf32, #tpu.memory_space<vmem>>, vector<1x128xf32>
    %c127_i32_92 = arith.constant 127 : i32
    %240 = tpu.dynamic_rotate %225 by %c127_i32_92 dim 1 : vector<16x128xf32>, i32 -> vector<16x128xf32>
    %241 = vector.broadcast %239 : vector<1x128xf32> to vector<16x128xf32>
    %242 = arith.mulf %241, %240 : vector<16x128xf32>
    %243 = arith.addf %238, %242 : vector<16x128xf32>
    %c22 = arith.constant 22 : index
    %c0_93 = arith.constant 0 : index
    %244 = vector.load %arg3[%c22, %c0_93] : memref<102x128xf32, #tpu.memory_space<vmem>>, vector<1x128xf32>
    %c126_i32 = arith.constant 126 : i32
    %245 = tpu.dynamic_rotate %225 by %c126_i32 dim 1 : vector<16x128xf32>, i32 -> vector<16x128xf32>
    %246 = vector.broadcast %244 : vector<1x128xf32> to vector<16x128xf32>
    %247 = arith.mulf %246, %245 : vector<16x128xf32>
    %248 = arith.addf %243, %247 : vector<16x128xf32>
    %c1_i32_94 = arith.constant 1 : i32
    %249 = tpu.dynamic_rotate %2 by %c1_i32_94 dim 0 : vector<16x128xf32>, i32 -> vector<16x128xf32>
    %c1_i32_95 = arith.constant 1 : i32
    %250 = vector.broadcast %c1_i32_95 : i32 to vector<16x128xi32>
    %251 = arith.cmpi sge, %4, %250 : vector<16x128xi32>
    %cst_96 = arith.constant 0.000000e+00 : f32
    %252 = vector.broadcast %cst_96 : f32 to vector<16x128xf32>
    %253 = arith.select %251, %249, %252 : vector<16x128xi1>, vector<16x128xf32>
    %c23 = arith.constant 23 : index
    %c0_97 = arith.constant 0 : index
    %254 = vector.load %arg3[%c23, %c0_97] : memref<102x128xf32, #tpu.memory_space<vmem>>, vector<1x128xf32>
    %c2_i32_98 = arith.constant 2 : i32
    %255 = tpu.dynamic_rotate %253 by %c2_i32_98 dim 1 : vector<16x128xf32>, i32 -> vector<16x128xf32>
    %256 = vector.broadcast %254 : vector<1x128xf32> to vector<16x128xf32>
    %257 = arith.mulf %256, %255 : vector<16x128xf32>
    %258 = arith.addf %248, %257 : vector<16x128xf32>
    %c24 = arith.constant 24 : index
    %c0_99 = arith.constant 0 : index
    %259 = vector.load %arg3[%c24, %c0_99] : memref<102x128xf32, #tpu.memory_space<vmem>>, vector<1x128xf32>
    %c1_i32_100 = arith.constant 1 : i32
    %260 = tpu.dynamic_rotate %253 by %c1_i32_100 dim 1 : vector<16x128xf32>, i32 -> vector<16x128xf32>
    %261 = vector.broadcast %259 : vector<1x128xf32> to vector<16x128xf32>
    %262 = arith.mulf %261, %260 : vector<16x128xf32>
    %263 = arith.addf %258, %262 : vector<16x128xf32>
    %c25 = arith.constant 25 : index
    %c0_101 = arith.constant 0 : index
    %264 = vector.load %arg3[%c25, %c0_101] : memref<102x128xf32, #tpu.memory_space<vmem>>, vector<1x128xf32>
    %265 = vector.broadcast %264 : vector<1x128xf32> to vector<16x128xf32>
    %266 = arith.mulf %265, %253 : vector<16x128xf32>
    %267 = arith.addf %263, %266 : vector<16x128xf32>
    %c26 = arith.constant 26 : index
    %c0_102 = arith.constant 0 : index
    %268 = vector.load %arg3[%c26, %c0_102] : memref<102x128xf32, #tpu.memory_space<vmem>>, vector<1x128xf32>
    %c127_i32_103 = arith.constant 127 : i32
    %269 = tpu.dynamic_rotate %253 by %c127_i32_103 dim 1 : vector<16x128xf32>, i32 -> vector<16x128xf32>
    %270 = vector.broadcast %268 : vector<1x128xf32> to vector<16x128xf32>
    %271 = arith.mulf %270, %269 : vector<16x128xf32>
    %272 = arith.addf %267, %271 : vector<16x128xf32>
    %c27 = arith.constant 27 : index
    %c0_104 = arith.constant 0 : index
    %273 = vector.load %arg3[%c27, %c0_104] : memref<102x128xf32, #tpu.memory_space<vmem>>, vector<1x128xf32>
    %c126_i32_105 = arith.constant 126 : i32
    %274 = tpu.dynamic_rotate %253 by %c126_i32_105 dim 1 : vector<16x128xf32>, i32 -> vector<16x128xf32>
    %275 = vector.broadcast %273 : vector<1x128xf32> to vector<16x128xf32>
    %276 = arith.mulf %275, %274 : vector<16x128xf32>
    %277 = arith.addf %272, %276 : vector<16x128xf32>
    %c28 = arith.constant 28 : index
    %c0_106 = arith.constant 0 : index
    %278 = vector.load %arg3[%c28, %c0_106] : memref<102x128xf32, #tpu.memory_space<vmem>>, vector<1x128xf32>
    %c2_i32_107 = arith.constant 2 : i32
    %279 = tpu.dynamic_rotate %2 by %c2_i32_107 dim 1 : vector<16x128xf32>, i32 -> vector<16x128xf32>
    %280 = vector.broadcast %278 : vector<1x128xf32> to vector<16x128xf32>
    %281 = arith.mulf %280, %279 : vector<16x128xf32>
    %282 = arith.addf %277, %281 : vector<16x128xf32>
    %c29 = arith.constant 29 : index
    %c0_108 = arith.constant 0 : index
    %283 = vector.load %arg3[%c29, %c0_108] : memref<102x128xf32, #tpu.memory_space<vmem>>, vector<1x128xf32>
    %c1_i32_109 = arith.constant 1 : i32
    %284 = tpu.dynamic_rotate %2 by %c1_i32_109 dim 1 : vector<16x128xf32>, i32 -> vector<16x128xf32>
    %285 = vector.broadcast %283 : vector<1x128xf32> to vector<16x128xf32>
    %286 = arith.mulf %285, %284 : vector<16x128xf32>
    %287 = arith.addf %282, %286 : vector<16x128xf32>
    %c30 = arith.constant 30 : index
    %c0_110 = arith.constant 0 : index
    %288 = vector.load %arg3[%c30, %c0_110] : memref<102x128xf32, #tpu.memory_space<vmem>>, vector<1x128xf32>
    %289 = vector.broadcast %288 : vector<1x128xf32> to vector<16x128xf32>
    %290 = arith.mulf %289, %2 : vector<16x128xf32>
    %291 = arith.addf %287, %290 : vector<16x128xf32>
    %c31 = arith.constant 31 : index
    %c0_111 = arith.constant 0 : index
    %292 = vector.load %arg3[%c31, %c0_111] : memref<102x128xf32, #tpu.memory_space<vmem>>, vector<1x128xf32>
    %c127_i32_112 = arith.constant 127 : i32
    %293 = tpu.dynamic_rotate %2 by %c127_i32_112 dim 1 : vector<16x128xf32>, i32 -> vector<16x128xf32>
    %294 = vector.broadcast %292 : vector<1x128xf32> to vector<16x128xf32>
    %295 = arith.mulf %294, %293 : vector<16x128xf32>
    %296 = arith.addf %291, %295 : vector<16x128xf32>
    %c32 = arith.constant 32 : index
    %c0_113 = arith.constant 0 : index
    %297 = vector.load %arg3[%c32, %c0_113] : memref<102x128xf32, #tpu.memory_space<vmem>>, vector<1x128xf32>
    %c126_i32_114 = arith.constant 126 : i32
    %298 = tpu.dynamic_rotate %2 by %c126_i32_114 dim 1 : vector<16x128xf32>, i32 -> vector<16x128xf32>
    %299 = vector.broadcast %297 : vector<1x128xf32> to vector<16x128xf32>
    %300 = arith.mulf %299, %298 : vector<16x128xf32>
    %301 = arith.addf %296, %300 : vector<16x128xf32>
    %c15_i32_115 = arith.constant 15 : i32
    %302 = tpu.dynamic_rotate %2 by %c15_i32_115 dim 0 : vector<16x128xf32>, i32 -> vector<16x128xf32>
    %c15_i32_116 = arith.constant 15 : i32
    %303 = vector.broadcast %c15_i32_116 : i32 to vector<16x128xi32>
    %304 = arith.cmpi slt, %4, %303 : vector<16x128xi32>
    %cst_117 = arith.constant 0.000000e+00 : f32
    %305 = vector.broadcast %cst_117 : f32 to vector<16x128xf32>
    %306 = arith.select %304, %302, %305 : vector<16x128xi1>, vector<16x128xf32>
    %c33 = arith.constant 33 : index
    %c0_118 = arith.constant 0 : index
    %307 = vector.load %arg3[%c33, %c0_118] : memref<102x128xf32, #tpu.memory_space<vmem>>, vector<1x128xf32>
    %c2_i32_119 = arith.constant 2 : i32
    %308 = tpu.dynamic_rotate %306 by %c2_i32_119 dim 1 : vector<16x128xf32>, i32 -> vector<16x128xf32>
    %309 = vector.broadcast %307 : vector<1x128xf32> to vector<16x128xf32>
    %310 = arith.mulf %309, %308 : vector<16x128xf32>
    %311 = arith.addf %301, %310 : vector<16x128xf32>
    %c34 = arith.constant 34 : index
    %c0_120 = arith.constant 0 : index
    %312 = vector.load %arg3[%c34, %c0_120] : memref<102x128xf32, #tpu.memory_space<vmem>>, vector<1x128xf32>
    %c1_i32_121 = arith.constant 1 : i32
    %313 = tpu.dynamic_rotate %306 by %c1_i32_121 dim 1 : vector<16x128xf32>, i32 -> vector<16x128xf32>
    %314 = vector.broadcast %312 : vector<1x128xf32> to vector<16x128xf32>
    %315 = arith.mulf %314, %313 : vector<16x128xf32>
    %316 = arith.addf %311, %315 : vector<16x128xf32>
    %c35 = arith.constant 35 : index
    %c0_122 = arith.constant 0 : index
    %317 = vector.load %arg3[%c35, %c0_122] : memref<102x128xf32, #tpu.memory_space<vmem>>, vector<1x128xf32>
    %318 = vector.broadcast %317 : vector<1x128xf32> to vector<16x128xf32>
    %319 = arith.mulf %318, %306 : vector<16x128xf32>
    %320 = arith.addf %316, %319 : vector<16x128xf32>
    %c36 = arith.constant 36 : index
    %c0_123 = arith.constant 0 : index
    %321 = vector.load %arg3[%c36, %c0_123] : memref<102x128xf32, #tpu.memory_space<vmem>>, vector<1x128xf32>
    %c127_i32_124 = arith.constant 127 : i32
    %322 = tpu.dynamic_rotate %306 by %c127_i32_124 dim 1 : vector<16x128xf32>, i32 -> vector<16x128xf32>
    %323 = vector.broadcast %321 : vector<1x128xf32> to vector<16x128xf32>
    %324 = arith.mulf %323, %322 : vector<16x128xf32>
    %325 = arith.addf %320, %324 : vector<16x128xf32>
    %c37 = arith.constant 37 : index
    %c0_125 = arith.constant 0 : index
    %326 = vector.load %arg3[%c37, %c0_125] : memref<102x128xf32, #tpu.memory_space<vmem>>, vector<1x128xf32>
    %c126_i32_126 = arith.constant 126 : i32
    %327 = tpu.dynamic_rotate %306 by %c126_i32_126 dim 1 : vector<16x128xf32>, i32 -> vector<16x128xf32>
    %328 = vector.broadcast %326 : vector<1x128xf32> to vector<16x128xf32>
    %329 = arith.mulf %328, %327 : vector<16x128xf32>
    %330 = arith.addf %325, %329 : vector<16x128xf32>
    %c14_i32 = arith.constant 14 : i32
    %331 = tpu.dynamic_rotate %2 by %c14_i32 dim 0 : vector<16x128xf32>, i32 -> vector<16x128xf32>
    %c14_i32_127 = arith.constant 14 : i32
    %332 = vector.broadcast %c14_i32_127 : i32 to vector<16x128xi32>
    %333 = arith.cmpi slt, %4, %332 : vector<16x128xi32>
    %cst_128 = arith.constant 0.000000e+00 : f32
    %334 = vector.broadcast %cst_128 : f32 to vector<16x128xf32>
    %335 = arith.select %333, %331, %334 : vector<16x128xi1>, vector<16x128xf32>
    %c38 = arith.constant 38 : index
    %c0_129 = arith.constant 0 : index
    %336 = vector.load %arg3[%c38, %c0_129] : memref<102x128xf32, #tpu.memory_space<vmem>>, vector<1x128xf32>
    %c2_i32_130 = arith.constant 2 : i32
    %337 = tpu.dynamic_rotate %335 by %c2_i32_130 dim 1 : vector<16x128xf32>, i32 -> vector<16x128xf32>
    %338 = vector.broadcast %336 : vector<1x128xf32> to vector<16x128xf32>
    %339 = arith.mulf %338, %337 : vector<16x128xf32>
    %340 = arith.addf %330, %339 : vector<16x128xf32>
    %c39 = arith.constant 39 : index
    %c0_131 = arith.constant 0 : index
    %341 = vector.load %arg3[%c39, %c0_131] : memref<102x128xf32, #tpu.memory_space<vmem>>, vector<1x128xf32>
    %c1_i32_132 = arith.constant 1 : i32
    %342 = tpu.dynamic_rotate %335 by %c1_i32_132 dim 1 : vector<16x128xf32>, i32 -> vector<16x128xf32>
    %343 = vector.broadcast %341 : vector<1x128xf32> to vector<16x128xf32>
    %344 = arith.mulf %343, %342 : vector<16x128xf32>
    %345 = arith.addf %340, %344 : vector<16x128xf32>
    %c40 = arith.constant 40 : index
    %c0_133 = arith.constant 0 : index
    %346 = vector.load %arg3[%c40, %c0_133] : memref<102x128xf32, #tpu.memory_space<vmem>>, vector<1x128xf32>
    %347 = vector.broadcast %346 : vector<1x128xf32> to vector<16x128xf32>
    %348 = arith.mulf %347, %335 : vector<16x128xf32>
    %349 = arith.addf %345, %348 : vector<16x128xf32>
    %c41 = arith.constant 41 : index
    %c0_134 = arith.constant 0 : index
    %350 = vector.load %arg3[%c41, %c0_134] : memref<102x128xf32, #tpu.memory_space<vmem>>, vector<1x128xf32>
    %c127_i32_135 = arith.constant 127 : i32
    %351 = tpu.dynamic_rotate %335 by %c127_i32_135 dim 1 : vector<16x128xf32>, i32 -> vector<16x128xf32>
    %352 = vector.broadcast %350 : vector<1x128xf32> to vector<16x128xf32>
    %353 = arith.mulf %352, %351 : vector<16x128xf32>
    %354 = arith.addf %349, %353 : vector<16x128xf32>
    %c42 = arith.constant 42 : index
    %c0_136 = arith.constant 0 : index
    %355 = vector.load %arg3[%c42, %c0_136] : memref<102x128xf32, #tpu.memory_space<vmem>>, vector<1x128xf32>
    %c126_i32_137 = arith.constant 126 : i32
    %356 = tpu.dynamic_rotate %335 by %c126_i32_137 dim 1 : vector<16x128xf32>, i32 -> vector<16x128xf32>
    %357 = vector.broadcast %355 : vector<1x128xf32> to vector<16x128xf32>
    %358 = arith.mulf %357, %356 : vector<16x128xf32>
    %359 = arith.addf %354, %358 : vector<16x128xf32>
    %c8_138 = arith.constant 8 : index
    %c0_139 = arith.constant 0 : index
    %360 = vector.load %arg4[%c8_138, %c0_139] : memref<28x128xf32, #tpu.memory_space<vmem>>, vector<1x128xf32>
    %361 = vector.broadcast %360 : vector<1x128xf32> to vector<16x128xf32>
    %362 = arith.mulf %361, %359 : vector<16x128xf32>
    %c32_i32_140 = arith.constant 32 : i32
    %363 = tpu.dynamic_rotate %359 by %c32_i32_140 dim 1 : vector<16x128xf32>, i32 -> vector<16x128xf32>
    %c9 = arith.constant 9 : index
    %c0_141 = arith.constant 0 : index
    %364 = vector.load %arg4[%c9, %c0_141] : memref<28x128xf32, #tpu.memory_space<vmem>>, vector<1x128xf32>
    %365 = vector.broadcast %364 : vector<1x128xf32> to vector<16x128xf32>
    %366 = arith.mulf %365, %363 : vector<16x128xf32>
    %367 = arith.addf %362, %366 : vector<16x128xf32>
    %c64_i32_142 = arith.constant 64 : i32
    %368 = tpu.dynamic_rotate %359 by %c64_i32_142 dim 1 : vector<16x128xf32>, i32 -> vector<16x128xf32>
    %c10 = arith.constant 10 : index
    %c0_143 = arith.constant 0 : index
    %369 = vector.load %arg4[%c10, %c0_143] : memref<28x128xf32, #tpu.memory_space<vmem>>, vector<1x128xf32>
    %370 = vector.broadcast %369 : vector<1x128xf32> to vector<16x128xf32>
    %371 = arith.mulf %370, %368 : vector<16x128xf32>
    %372 = arith.addf %367, %371 : vector<16x128xf32>
    %c96_i32_144 = arith.constant 96 : i32
    %373 = tpu.dynamic_rotate %359 by %c96_i32_144 dim 1 : vector<16x128xf32>, i32 -> vector<16x128xf32>
    %c11 = arith.constant 11 : index
    %c0_145 = arith.constant 0 : index
    %374 = vector.load %arg4[%c11, %c0_145] : memref<28x128xf32, #tpu.memory_space<vmem>>, vector<1x128xf32>
    %375 = vector.broadcast %374 : vector<1x128xf32> to vector<16x128xf32>
    %376 = arith.mulf %375, %373 : vector<16x128xf32>
    %377 = arith.addf %372, %376 : vector<16x128xf32>
    %cst_146 = arith.constant dense<0.000000e+00> : vector<128xf32>
    %378 = vector.multi_reduction <add>, %147, %cst_146 [0] : vector<16x128xf32> to vector<128xf32>
    %379 = vector.shape_cast %378 : vector<128xf32> to vector<1x128xf32>
    %380 = arith.mulf %147, %147 : vector<16x128xf32>
    %cst_147 = arith.constant dense<0.000000e+00> : vector<128xf32>
    %381 = vector.multi_reduction <add>, %380, %cst_147 [0] : vector<16x128xf32> to vector<128xf32>
    %382 = vector.shape_cast %381 : vector<128xf32> to vector<1x128xf32>
    %cst_148 = arith.constant dense<0.000000e+00> : vector<128xf32>
    %383 = vector.multi_reduction <add>, %151, %cst_148 [0] : vector<16x128xf32> to vector<128xf32>
    %384 = vector.shape_cast %383 : vector<128xf32> to vector<1x128xf32>
    %385 = arith.mulf %151, %151 : vector<16x128xf32>
    %cst_149 = arith.constant dense<0.000000e+00> : vector<128xf32>
    %386 = vector.multi_reduction <add>, %385, %cst_149 [0] : vector<16x128xf32> to vector<128xf32>
    %387 = vector.shape_cast %386 : vector<128xf32> to vector<1x128xf32>
    %cst_150 = arith.constant dense<0.000000e+00> : vector<128xf32>
    %388 = vector.multi_reduction <add>, %220, %cst_150 [0] : vector<16x128xf32> to vector<128xf32>
    %389 = vector.shape_cast %388 : vector<128xf32> to vector<1x128xf32>
    %390 = arith.mulf %220, %220 : vector<16x128xf32>
    %cst_151 = arith.constant dense<0.000000e+00> : vector<128xf32>
    %391 = vector.multi_reduction <add>, %390, %cst_151 [0] : vector<16x128xf32> to vector<128xf32>
    %392 = vector.shape_cast %391 : vector<128xf32> to vector<1x128xf32>
    %cst_152 = arith.constant dense<0.000000e+00> : vector<128xf32>
    %393 = vector.multi_reduction <add>, %377, %cst_152 [0] : vector<16x128xf32> to vector<128xf32>
    %394 = vector.shape_cast %393 : vector<128xf32> to vector<1x128xf32>
    %395 = arith.mulf %377, %377 : vector<16x128xf32>
    %cst_153 = arith.constant dense<0.000000e+00> : vector<128xf32>
    %396 = vector.multi_reduction <add>, %395, %cst_153 [0] : vector<16x128xf32> to vector<128xf32>
    %397 = vector.shape_cast %396 : vector<128xf32> to vector<1x128xf32>
    %398 = tpu.concatenate %379, %382, %384, %387, %389, %392, %394, %397 in 0 : vector<1x128xf32>, vector<1x128xf32>, vector<1x128xf32>, vector<1x128xf32>, vector<1x128xf32>, vector<1x128xf32>, vector<1x128xf32>, vector<1x128xf32> -> vector<8x128xf32>
    %c0_154 = arith.constant 0 : index
    %c0_155 = arith.constant 0 : index
    %399 = vector.load %arg6[%c0_154, %c0_155] : memref<128x128xf32, #tpu.memory_space<vmem>>, vector<128x128xf32>
    %cst_156 = arith.constant dense<0.000000e+00> : vector<8x128xf32>
    %400 = tpu.matmul %398, %399, %cst_156 {dimension_numbers = #tpu.dot_dimension_numbers<[1], [0], [0], [1], [0, 0, 1, 1], [], []>} : vector<8x128xf32>, vector<128x128xf32>, vector<8x128xf32> -> vector<8x128xf32>
    %c1_157 = arith.constant 1 : index
    %401 = memref.load %arg0[%c1_157] : memref<10xf32, #tpu.memory_space<smem>>
    %402 = vector.extract_strided_slice %400 {offsets = [0, 0], sizes = [1, 128], strides = [1, 1]} : vector<8x128xf32> to vector<1x128xf32>
    %403 = vector.extract_strided_slice %400 {offsets = [1, 0], sizes = [1, 128], strides = [1, 1]} : vector<8x128xf32> to vector<1x128xf32>
    %404 = arith.mulf %402, %402 : vector<1x128xf32>
    %405 = arith.subf %403, %404 : vector<1x128xf32>
    %cst_158 = arith.constant 0.000000e+00 : f32
    %406 = vector.broadcast %cst_158 : f32 to vector<1x128xf32>
    %407 = arith.maximumf %405, %406 : vector<1x128xf32>
    %408 = vector.broadcast %402 : vector<1x128xf32> to vector<16x128xf32>
    %409 = arith.subf %147, %408 : vector<16x128xf32>
    %cst_159 = arith.constant 9.99999974E-6 : f32
    %410 = vector.broadcast %cst_159 : f32 to vector<1x128xf32>
    %411 = arith.addf %407, %410 : vector<1x128xf32>
    %412 = math.rsqrt %411 : vector<1x128xf32>
    %413 = vector.broadcast %401 : f32 to vector<1x128xf32>
    %414 = arith.mulf %413, %412 : vector<1x128xf32>
    %415 = vector.broadcast %414 : vector<1x128xf32> to vector<16x128xf32>
    %416 = arith.mulf %409, %415 : vector<16x128xf32>
    %417 = arith.addf %7, %416 : vector<16x128xf32>
    %c2_160 = arith.constant 2 : index
    %418 = memref.load %arg0[%c2_160] : memref<10xf32, #tpu.memory_space<smem>>
    %419 = vector.extract_strided_slice %400 {offsets = [2, 0], sizes = [1, 128], strides = [1, 1]} : vector<8x128xf32> to vector<1x128xf32>
    %420 = vector.extract_strided_slice %400 {offsets = [3, 0], sizes = [1, 128], strides = [1, 1]} : vector<8x128xf32> to vector<1x128xf32>
    %421 = arith.mulf %419, %419 : vector<1x128xf32>
    %422 = arith.subf %420, %421 : vector<1x128xf32>
    %cst_161 = arith.constant 0.000000e+00 : f32
    %423 = vector.broadcast %cst_161 : f32 to vector<1x128xf32>
    %424 = arith.maximumf %422, %423 : vector<1x128xf32>
    %425 = vector.broadcast %419 : vector<1x128xf32> to vector<16x128xf32>
    %426 = arith.subf %151, %425 : vector<16x128xf32>
    %cst_162 = arith.constant 9.99999974E-6 : f32
    %427 = vector.broadcast %cst_162 : f32 to vector<1x128xf32>
    %428 = arith.addf %424, %427 : vector<1x128xf32>
    %429 = math.rsqrt %428 : vector<1x128xf32>
    %430 = vector.broadcast %418 : f32 to vector<1x128xf32>
    %431 = arith.mulf %430, %429 : vector<1x128xf32>
    %432 = vector.broadcast %431 : vector<1x128xf32> to vector<16x128xf32>
    %433 = arith.mulf %426, %432 : vector<16x128xf32>
    %434 = arith.addf %417, %433 : vector<16x128xf32>
    %435 = vector.extract_strided_slice %400 {offsets = [4, 0], sizes = [1, 128], strides = [1, 1]} : vector<8x128xf32> to vector<1x128xf32>
    %436 = vector.extract_strided_slice %400 {offsets = [5, 0], sizes = [1, 128], strides = [1, 1]} : vector<8x128xf32> to vector<1x128xf32>
    %437 = arith.mulf %435, %435 : vector<1x128xf32>
    %438 = arith.subf %436, %437 : vector<1x128xf32>
    %cst_163 = arith.constant 0.000000e+00 : f32
    %439 = vector.broadcast %cst_163 : f32 to vector<1x128xf32>
    %440 = arith.maximumf %438, %439 : vector<1x128xf32>
    %441 = vector.broadcast %435 : vector<1x128xf32> to vector<16x128xf32>
    %442 = arith.subf %220, %441 : vector<16x128xf32>
    %cst_164 = arith.constant 9.99999974E-6 : f32
    %443 = vector.broadcast %cst_164 : f32 to vector<1x128xf32>
    %444 = arith.addf %440, %443 : vector<1x128xf32>
    %445 = math.rsqrt %444 : vector<1x128xf32>
    %cst_165 = arith.constant 1.000000e+00 : f32
    %446 = vector.broadcast %cst_165 : f32 to vector<1x128xf32>
    %447 = arith.mulf %446, %445 : vector<1x128xf32>
    %448 = vector.broadcast %447 : vector<1x128xf32> to vector<16x128xf32>
    %449 = arith.mulf %442, %448 : vector<16x128xf32>
    %cst_166 = arith.constant 0.000000e+00 : f32
    %450 = vector.broadcast %cst_166 : f32 to vector<16x128xf32>
    %451 = arith.maximumf %449, %450 : vector<16x128xf32>
    %452 = vector.extract_strided_slice %400 {offsets = [6, 0], sizes = [1, 128], strides = [1, 1]} : vector<8x128xf32> to vector<1x128xf32>
    %453 = vector.extract_strided_slice %400 {offsets = [7, 0], sizes = [1, 128], strides = [1, 1]} : vector<8x128xf32> to vector<1x128xf32>
    %454 = arith.mulf %452, %452 : vector<1x128xf32>
    %455 = arith.subf %453, %454 : vector<1x128xf32>
    %cst_167 = arith.constant 0.000000e+00 : f32
    %456 = vector.broadcast %cst_167 : f32 to vector<1x128xf32>
    %457 = arith.maximumf %455, %456 : vector<1x128xf32>
    %458 = vector.broadcast %452 : vector<1x128xf32> to vector<16x128xf32>
    %459 = arith.subf %377, %458 : vector<16x128xf32>
    %cst_168 = arith.constant 9.99999974E-6 : f32
    %460 = vector.broadcast %cst_168 : f32 to vector<1x128xf32>
    %461 = arith.addf %457, %460 : vector<1x128xf32>
    %462 = math.rsqrt %461 : vector<1x128xf32>
    %cst_169 = arith.constant 1.000000e+00 : f32
    %463 = vector.broadcast %cst_169 : f32 to vector<1x128xf32>
    %464 = arith.mulf %463, %462 : vector<1x128xf32>
    %465 = vector.broadcast %464 : vector<1x128xf32> to vector<16x128xf32>
    %466 = arith.mulf %459, %465 : vector<16x128xf32>
    %cst_170 = arith.constant 0.000000e+00 : f32
    %467 = vector.broadcast %cst_170 : f32 to vector<16x128xf32>
    %468 = arith.maximumf %466, %467 : vector<16x128xf32>
    %c1_i32_171 = arith.constant 1 : i32
    %469 = tpu.dynamic_rotate %451 by %c1_i32_171 dim 0 : vector<16x128xf32>, i32 -> vector<16x128xf32>
    %c1_i32_172 = arith.constant 1 : i32
    %470 = vector.broadcast %c1_i32_172 : i32 to vector<16x128xi32>
    %471 = arith.cmpi sge, %4, %470 : vector<16x128xi32>
    %cst_173 = arith.constant 0.000000e+00 : f32
    %472 = vector.broadcast %cst_173 : f32 to vector<16x128xf32>
    %473 = arith.select %471, %469, %472 : vector<16x128xi1>, vector<16x128xf32>
    %c9_174 = arith.constant 9 : index
    %c0_175 = arith.constant 0 : index
    %474 = vector.load %arg3[%c9_174, %c0_175] : memref<102x128xf32, #tpu.memory_space<vmem>>, vector<1x128xf32>
    %c1_i32_176 = arith.constant 1 : i32
    %475 = tpu.dynamic_rotate %473 by %c1_i32_176 dim 1 : vector<16x128xf32>, i32 -> vector<16x128xf32>
    %476 = vector.broadcast %474 : vector<1x128xf32> to vector<16x128xf32>
    %477 = arith.mulf %476, %475 : vector<16x128xf32>
    %c10_177 = arith.constant 10 : index
    %c0_178 = arith.constant 0 : index
    %478 = vector.load %arg3[%c10_177, %c0_178] : memref<102x128xf32, #tpu.memory_space<vmem>>, vector<1x128xf32>
    %479 = vector.broadcast %478 : vector<1x128xf32> to vector<16x128xf32>
    %480 = arith.mulf %479, %473 : vector<16x128xf32>
    %481 = arith.addf %477, %480 : vector<16x128xf32>
    %c11_179 = arith.constant 11 : index
    %c0_180 = arith.constant 0 : index
    %482 = vector.load %arg3[%c11_179, %c0_180] : memref<102x128xf32, #tpu.memory_space<vmem>>, vector<1x128xf32>
    %c127_i32_181 = arith.constant 127 : i32
    %483 = tpu.dynamic_rotate %473 by %c127_i32_181 dim 1 : vector<16x128xf32>, i32 -> vector<16x128xf32>
    %484 = vector.broadcast %482 : vector<1x128xf32> to vector<16x128xf32>
    %485 = arith.mulf %484, %483 : vector<16x128xf32>
    %486 = arith.addf %481, %485 : vector<16x128xf32>
    %c12 = arith.constant 12 : index
    %c0_182 = arith.constant 0 : index
    %487 = vector.load %arg3[%c12, %c0_182] : memref<102x128xf32, #tpu.memory_space<vmem>>, vector<1x128xf32>
    %c1_i32_183 = arith.constant 1 : i32
    %488 = tpu.dynamic_rotate %451 by %c1_i32_183 dim 1 : vector<16x128xf32>, i32 -> vector<16x128xf32>
    %489 = vector.broadcast %487 : vector<1x128xf32> to vector<16x128xf32>
    %490 = arith.mulf %489, %488 : vector<16x128xf32>
    %491 = arith.addf %486, %490 : vector<16x128xf32>
    %c13 = arith.constant 13 : index
    %c0_184 = arith.constant 0 : index
    %492 = vector.load %arg3[%c13, %c0_184] : memref<102x128xf32, #tpu.memory_space<vmem>>, vector<1x128xf32>
    %493 = vector.broadcast %492 : vector<1x128xf32> to vector<16x128xf32>
    %494 = arith.mulf %493, %451 : vector<16x128xf32>
    %495 = arith.addf %491, %494 : vector<16x128xf32>
    %c14 = arith.constant 14 : index
    %c0_185 = arith.constant 0 : index
    %496 = vector.load %arg3[%c14, %c0_185] : memref<102x128xf32, #tpu.memory_space<vmem>>, vector<1x128xf32>
    %c127_i32_186 = arith.constant 127 : i32
    %497 = tpu.dynamic_rotate %451 by %c127_i32_186 dim 1 : vector<16x128xf32>, i32 -> vector<16x128xf32>
    %498 = vector.broadcast %496 : vector<1x128xf32> to vector<16x128xf32>
    %499 = arith.mulf %498, %497 : vector<16x128xf32>
    %500 = arith.addf %495, %499 : vector<16x128xf32>
    %c15_i32_187 = arith.constant 15 : i32
    %501 = tpu.dynamic_rotate %451 by %c15_i32_187 dim 0 : vector<16x128xf32>, i32 -> vector<16x128xf32>
    %c15_i32_188 = arith.constant 15 : i32
    %502 = vector.broadcast %c15_i32_188 : i32 to vector<16x128xi32>
    %503 = arith.cmpi slt, %4, %502 : vector<16x128xi32>
    %cst_189 = arith.constant 0.000000e+00 : f32
    %504 = vector.broadcast %cst_189 : f32 to vector<16x128xf32>
    %505 = arith.select %503, %501, %504 : vector<16x128xi1>, vector<16x128xf32>
    %c15 = arith.constant 15 : index
    %c0_190 = arith.constant 0 : index
    %506 = vector.load %arg3[%c15, %c0_190] : memref<102x128xf32, #tpu.memory_space<vmem>>, vector<1x128xf32>
    %c1_i32_191 = arith.constant 1 : i32
    %507 = tpu.dynamic_rotate %505 by %c1_i32_191 dim 1 : vector<16x128xf32>, i32 -> vector<16x128xf32>
    %508 = vector.broadcast %506 : vector<1x128xf32> to vector<16x128xf32>
    %509 = arith.mulf %508, %507 : vector<16x128xf32>
    %510 = arith.addf %500, %509 : vector<16x128xf32>
    %c16 = arith.constant 16 : index
    %c0_192 = arith.constant 0 : index
    %511 = vector.load %arg3[%c16, %c0_192] : memref<102x128xf32, #tpu.memory_space<vmem>>, vector<1x128xf32>
    %512 = vector.broadcast %511 : vector<1x128xf32> to vector<16x128xf32>
    %513 = arith.mulf %512, %505 : vector<16x128xf32>
    %514 = arith.addf %510, %513 : vector<16x128xf32>
    %c17 = arith.constant 17 : index
    %c0_193 = arith.constant 0 : index
    %515 = vector.load %arg3[%c17, %c0_193] : memref<102x128xf32, #tpu.memory_space<vmem>>, vector<1x128xf32>
    %c127_i32_194 = arith.constant 127 : i32
    %516 = tpu.dynamic_rotate %505 by %c127_i32_194 dim 1 : vector<16x128xf32>, i32 -> vector<16x128xf32>
    %517 = vector.broadcast %515 : vector<1x128xf32> to vector<16x128xf32>
    %518 = arith.mulf %517, %516 : vector<16x128xf32>
    %519 = arith.addf %514, %518 : vector<16x128xf32>
    %c4_195 = arith.constant 4 : index
    %c0_196 = arith.constant 0 : index
    %520 = vector.load %arg4[%c4_195, %c0_196] : memref<28x128xf32, #tpu.memory_space<vmem>>, vector<1x128xf32>
    %521 = vector.broadcast %520 : vector<1x128xf32> to vector<16x128xf32>
    %522 = arith.mulf %521, %519 : vector<16x128xf32>
    %c32_i32_197 = arith.constant 32 : i32
    %523 = tpu.dynamic_rotate %519 by %c32_i32_197 dim 1 : vector<16x128xf32>, i32 -> vector<16x128xf32>
    %c5_198 = arith.constant 5 : index
    %c0_199 = arith.constant 0 : index
    %524 = vector.load %arg4[%c5_198, %c0_199] : memref<28x128xf32, #tpu.memory_space<vmem>>, vector<1x128xf32>
    %525 = vector.broadcast %524 : vector<1x128xf32> to vector<16x128xf32>
    %526 = arith.mulf %525, %523 : vector<16x128xf32>
    %527 = arith.addf %522, %526 : vector<16x128xf32>
    %c64_i32_200 = arith.constant 64 : i32
    %528 = tpu.dynamic_rotate %519 by %c64_i32_200 dim 1 : vector<16x128xf32>, i32 -> vector<16x128xf32>
    %c6_201 = arith.constant 6 : index
    %c0_202 = arith.constant 0 : index
    %529 = vector.load %arg4[%c6_201, %c0_202] : memref<28x128xf32, #tpu.memory_space<vmem>>, vector<1x128xf32>
    %530 = vector.broadcast %529 : vector<1x128xf32> to vector<16x128xf32>
    %531 = arith.mulf %530, %528 : vector<16x128xf32>
    %532 = arith.addf %527, %531 : vector<16x128xf32>
    %c96_i32_203 = arith.constant 96 : i32
    %533 = tpu.dynamic_rotate %519 by %c96_i32_203 dim 1 : vector<16x128xf32>, i32 -> vector<16x128xf32>
    %c7_204 = arith.constant 7 : index
    %c0_205 = arith.constant 0 : index
    %534 = vector.load %arg4[%c7_204, %c0_205] : memref<28x128xf32, #tpu.memory_space<vmem>>, vector<1x128xf32>
    %535 = vector.broadcast %534 : vector<1x128xf32> to vector<16x128xf32>
    %536 = arith.mulf %535, %533 : vector<16x128xf32>
    %537 = arith.addf %532, %536 : vector<16x128xf32>
    %c2_i32_206 = arith.constant 2 : i32
    %538 = tpu.dynamic_rotate %468 by %c2_i32_206 dim 0 : vector<16x128xf32>, i32 -> vector<16x128xf32>
    %c2_i32_207 = arith.constant 2 : i32
    %539 = vector.broadcast %c2_i32_207 : i32 to vector<16x128xi32>
    %540 = arith.cmpi sge, %4, %539 : vector<16x128xi32>
    %cst_208 = arith.constant 0.000000e+00 : f32
    %541 = vector.broadcast %cst_208 : f32 to vector<16x128xf32>
    %542 = arith.select %540, %538, %541 : vector<16x128xi1>, vector<16x128xf32>
    %c43 = arith.constant 43 : index
    %c0_209 = arith.constant 0 : index
    %543 = vector.load %arg3[%c43, %c0_209] : memref<102x128xf32, #tpu.memory_space<vmem>>, vector<1x128xf32>
    %c2_i32_210 = arith.constant 2 : i32
    %544 = tpu.dynamic_rotate %542 by %c2_i32_210 dim 1 : vector<16x128xf32>, i32 -> vector<16x128xf32>
    %545 = vector.broadcast %543 : vector<1x128xf32> to vector<16x128xf32>
    %546 = arith.mulf %545, %544 : vector<16x128xf32>
    %c44 = arith.constant 44 : index
    %c0_211 = arith.constant 0 : index
    %547 = vector.load %arg3[%c44, %c0_211] : memref<102x128xf32, #tpu.memory_space<vmem>>, vector<1x128xf32>
    %c1_i32_212 = arith.constant 1 : i32
    %548 = tpu.dynamic_rotate %542 by %c1_i32_212 dim 1 : vector<16x128xf32>, i32 -> vector<16x128xf32>
    %549 = vector.broadcast %547 : vector<1x128xf32> to vector<16x128xf32>
    %550 = arith.mulf %549, %548 : vector<16x128xf32>
    %551 = arith.addf %546, %550 : vector<16x128xf32>
    %c45 = arith.constant 45 : index
    %c0_213 = arith.constant 0 : index
    %552 = vector.load %arg3[%c45, %c0_213] : memref<102x128xf32, #tpu.memory_space<vmem>>, vector<1x128xf32>
    %553 = vector.broadcast %552 : vector<1x128xf32> to vector<16x128xf32>
    %554 = arith.mulf %553, %542 : vector<16x128xf32>
    %555 = arith.addf %551, %554 : vector<16x128xf32>
    %c46 = arith.constant 46 : index
    %c0_214 = arith.constant 0 : index
    %556 = vector.load %arg3[%c46, %c0_214] : memref<102x128xf32, #tpu.memory_space<vmem>>, vector<1x128xf32>
    %c127_i32_215 = arith.constant 127 : i32
    %557 = tpu.dynamic_rotate %542 by %c127_i32_215 dim 1 : vector<16x128xf32>, i32 -> vector<16x128xf32>
    %558 = vector.broadcast %556 : vector<1x128xf32> to vector<16x128xf32>
    %559 = arith.mulf %558, %557 : vector<16x128xf32>
    %560 = arith.addf %555, %559 : vector<16x128xf32>
    %c47 = arith.constant 47 : index
    %c0_216 = arith.constant 0 : index
    %561 = vector.load %arg3[%c47, %c0_216] : memref<102x128xf32, #tpu.memory_space<vmem>>, vector<1x128xf32>
    %c126_i32_217 = arith.constant 126 : i32
    %562 = tpu.dynamic_rotate %542 by %c126_i32_217 dim 1 : vector<16x128xf32>, i32 -> vector<16x128xf32>
    %563 = vector.broadcast %561 : vector<1x128xf32> to vector<16x128xf32>
    %564 = arith.mulf %563, %562 : vector<16x128xf32>
    %565 = arith.addf %560, %564 : vector<16x128xf32>
    %c1_i32_218 = arith.constant 1 : i32
    %566 = tpu.dynamic_rotate %468 by %c1_i32_218 dim 0 : vector<16x128xf32>, i32 -> vector<16x128xf32>
    %c1_i32_219 = arith.constant 1 : i32
    %567 = vector.broadcast %c1_i32_219 : i32 to vector<16x128xi32>
    %568 = arith.cmpi sge, %4, %567 : vector<16x128xi32>
    %cst_220 = arith.constant 0.000000e+00 : f32
    %569 = vector.broadcast %cst_220 : f32 to vector<16x128xf32>
    %570 = arith.select %568, %566, %569 : vector<16x128xi1>, vector<16x128xf32>
    %c48 = arith.constant 48 : index
    %c0_221 = arith.constant 0 : index
    %571 = vector.load %arg3[%c48, %c0_221] : memref<102x128xf32, #tpu.memory_space<vmem>>, vector<1x128xf32>
    %c2_i32_222 = arith.constant 2 : i32
    %572 = tpu.dynamic_rotate %570 by %c2_i32_222 dim 1 : vector<16x128xf32>, i32 -> vector<16x128xf32>
    %573 = vector.broadcast %571 : vector<1x128xf32> to vector<16x128xf32>
    %574 = arith.mulf %573, %572 : vector<16x128xf32>
    %575 = arith.addf %565, %574 : vector<16x128xf32>
    %c49 = arith.constant 49 : index
    %c0_223 = arith.constant 0 : index
    %576 = vector.load %arg3[%c49, %c0_223] : memref<102x128xf32, #tpu.memory_space<vmem>>, vector<1x128xf32>
    %c1_i32_224 = arith.constant 1 : i32
    %577 = tpu.dynamic_rotate %570 by %c1_i32_224 dim 1 : vector<16x128xf32>, i32 -> vector<16x128xf32>
    %578 = vector.broadcast %576 : vector<1x128xf32> to vector<16x128xf32>
    %579 = arith.mulf %578, %577 : vector<16x128xf32>
    %580 = arith.addf %575, %579 : vector<16x128xf32>
    %c50 = arith.constant 50 : index
    %c0_225 = arith.constant 0 : index
    %581 = vector.load %arg3[%c50, %c0_225] : memref<102x128xf32, #tpu.memory_space<vmem>>, vector<1x128xf32>
    %582 = vector.broadcast %581 : vector<1x128xf32> to vector<16x128xf32>
    %583 = arith.mulf %582, %570 : vector<16x128xf32>
    %584 = arith.addf %580, %583 : vector<16x128xf32>
    %c51 = arith.constant 51 : index
    %c0_226 = arith.constant 0 : index
    %585 = vector.load %arg3[%c51, %c0_226] : memref<102x128xf32, #tpu.memory_space<vmem>>, vector<1x128xf32>
    %c127_i32_227 = arith.constant 127 : i32
    %586 = tpu.dynamic_rotate %570 by %c127_i32_227 dim 1 : vector<16x128xf32>, i32 -> vector<16x128xf32>
    %587 = vector.broadcast %585 : vector<1x128xf32> to vector<16x128xf32>
    %588 = arith.mulf %587, %586 : vector<16x128xf32>
    %589 = arith.addf %584, %588 : vector<16x128xf32>
    %c52 = arith.constant 52 : index
    %c0_228 = arith.constant 0 : index
    %590 = vector.load %arg3[%c52, %c0_228] : memref<102x128xf32, #tpu.memory_space<vmem>>, vector<1x128xf32>
    %c126_i32_229 = arith.constant 126 : i32
    %591 = tpu.dynamic_rotate %570 by %c126_i32_229 dim 1 : vector<16x128xf32>, i32 -> vector<16x128xf32>
    %592 = vector.broadcast %590 : vector<1x128xf32> to vector<16x128xf32>
    %593 = arith.mulf %592, %591 : vector<16x128xf32>
    %594 = arith.addf %589, %593 : vector<16x128xf32>
    %c53 = arith.constant 53 : index
    %c0_230 = arith.constant 0 : index
    %595 = vector.load %arg3[%c53, %c0_230] : memref<102x128xf32, #tpu.memory_space<vmem>>, vector<1x128xf32>
    %c2_i32_231 = arith.constant 2 : i32
    %596 = tpu.dynamic_rotate %468 by %c2_i32_231 dim 1 : vector<16x128xf32>, i32 -> vector<16x128xf32>
    %597 = vector.broadcast %595 : vector<1x128xf32> to vector<16x128xf32>
    %598 = arith.mulf %597, %596 : vector<16x128xf32>
    %599 = arith.addf %594, %598 : vector<16x128xf32>
    %c54 = arith.constant 54 : index
    %c0_232 = arith.constant 0 : index
    %600 = vector.load %arg3[%c54, %c0_232] : memref<102x128xf32, #tpu.memory_space<vmem>>, vector<1x128xf32>
    %c1_i32_233 = arith.constant 1 : i32
    %601 = tpu.dynamic_rotate %468 by %c1_i32_233 dim 1 : vector<16x128xf32>, i32 -> vector<16x128xf32>
    %602 = vector.broadcast %600 : vector<1x128xf32> to vector<16x128xf32>
    %603 = arith.mulf %602, %601 : vector<16x128xf32>
    %604 = arith.addf %599, %603 : vector<16x128xf32>
    %c55 = arith.constant 55 : index
    %c0_234 = arith.constant 0 : index
    %605 = vector.load %arg3[%c55, %c0_234] : memref<102x128xf32, #tpu.memory_space<vmem>>, vector<1x128xf32>
    %606 = vector.broadcast %605 : vector<1x128xf32> to vector<16x128xf32>
    %607 = arith.mulf %606, %468 : vector<16x128xf32>
    %608 = arith.addf %604, %607 : vector<16x128xf32>
    %c56 = arith.constant 56 : index
    %c0_235 = arith.constant 0 : index
    %609 = vector.load %arg3[%c56, %c0_235] : memref<102x128xf32, #tpu.memory_space<vmem>>, vector<1x128xf32>
    %c127_i32_236 = arith.constant 127 : i32
    %610 = tpu.dynamic_rotate %468 by %c127_i32_236 dim 1 : vector<16x128xf32>, i32 -> vector<16x128xf32>
    %611 = vector.broadcast %609 : vector<1x128xf32> to vector<16x128xf32>
    %612 = arith.mulf %611, %610 : vector<16x128xf32>
    %613 = arith.addf %608, %612 : vector<16x128xf32>
    %c57 = arith.constant 57 : index
    %c0_237 = arith.constant 0 : index
    %614 = vector.load %arg3[%c57, %c0_237] : memref<102x128xf32, #tpu.memory_space<vmem>>, vector<1x128xf32>
    %c126_i32_238 = arith.constant 126 : i32
    %615 = tpu.dynamic_rotate %468 by %c126_i32_238 dim 1 : vector<16x128xf32>, i32 -> vector<16x128xf32>
    %616 = vector.broadcast %614 : vector<1x128xf32> to vector<16x128xf32>
    %617 = arith.mulf %616, %615 : vector<16x128xf32>
    %618 = arith.addf %613, %617 : vector<16x128xf32>
    %c15_i32_239 = arith.constant 15 : i32
    %619 = tpu.dynamic_rotate %468 by %c15_i32_239 dim 0 : vector<16x128xf32>, i32 -> vector<16x128xf32>
    %c15_i32_240 = arith.constant 15 : i32
    %620 = vector.broadcast %c15_i32_240 : i32 to vector<16x128xi32>
    %621 = arith.cmpi slt, %4, %620 : vector<16x128xi32>
    %cst_241 = arith.constant 0.000000e+00 : f32
    %622 = vector.broadcast %cst_241 : f32 to vector<16x128xf32>
    %623 = arith.select %621, %619, %622 : vector<16x128xi1>, vector<16x128xf32>
    %c58 = arith.constant 58 : index
    %c0_242 = arith.constant 0 : index
    %624 = vector.load %arg3[%c58, %c0_242] : memref<102x128xf32, #tpu.memory_space<vmem>>, vector<1x128xf32>
    %c2_i32_243 = arith.constant 2 : i32
    %625 = tpu.dynamic_rotate %623 by %c2_i32_243 dim 1 : vector<16x128xf32>, i32 -> vector<16x128xf32>
    %626 = vector.broadcast %624 : vector<1x128xf32> to vector<16x128xf32>
    %627 = arith.mulf %626, %625 : vector<16x128xf32>
    %628 = arith.addf %618, %627 : vector<16x128xf32>
    %c59 = arith.constant 59 : index
    %c0_244 = arith.constant 0 : index
    %629 = vector.load %arg3[%c59, %c0_244] : memref<102x128xf32, #tpu.memory_space<vmem>>, vector<1x128xf32>
    %c1_i32_245 = arith.constant 1 : i32
    %630 = tpu.dynamic_rotate %623 by %c1_i32_245 dim 1 : vector<16x128xf32>, i32 -> vector<16x128xf32>
    %631 = vector.broadcast %629 : vector<1x128xf32> to vector<16x128xf32>
    %632 = arith.mulf %631, %630 : vector<16x128xf32>
    %633 = arith.addf %628, %632 : vector<16x128xf32>
    %c60 = arith.constant 60 : index
    %c0_246 = arith.constant 0 : index
    %634 = vector.load %arg3[%c60, %c0_246] : memref<102x128xf32, #tpu.memory_space<vmem>>, vector<1x128xf32>
    %635 = vector.broadcast %634 : vector<1x128xf32> to vector<16x128xf32>
    %636 = arith.mulf %635, %623 : vector<16x128xf32>
    %637 = arith.addf %633, %636 : vector<16x128xf32>
    %c61 = arith.constant 61 : index
    %c0_247 = arith.constant 0 : index
    %638 = vector.load %arg3[%c61, %c0_247] : memref<102x128xf32, #tpu.memory_space<vmem>>, vector<1x128xf32>
    %c127_i32_248 = arith.constant 127 : i32
    %639 = tpu.dynamic_rotate %623 by %c127_i32_248 dim 1 : vector<16x128xf32>, i32 -> vector<16x128xf32>
    %640 = vector.broadcast %638 : vector<1x128xf32> to vector<16x128xf32>
    %641 = arith.mulf %640, %639 : vector<16x128xf32>
    %642 = arith.addf %637, %641 : vector<16x128xf32>
    %c62 = arith.constant 62 : index
    %c0_249 = arith.constant 0 : index
    %643 = vector.load %arg3[%c62, %c0_249] : memref<102x128xf32, #tpu.memory_space<vmem>>, vector<1x128xf32>
    %c126_i32_250 = arith.constant 126 : i32
    %644 = tpu.dynamic_rotate %623 by %c126_i32_250 dim 1 : vector<16x128xf32>, i32 -> vector<16x128xf32>
    %645 = vector.broadcast %643 : vector<1x128xf32> to vector<16x128xf32>
    %646 = arith.mulf %645, %644 : vector<16x128xf32>
    %647 = arith.addf %642, %646 : vector<16x128xf32>
    %c14_i32_251 = arith.constant 14 : i32
    %648 = tpu.dynamic_rotate %468 by %c14_i32_251 dim 0 : vector<16x128xf32>, i32 -> vector<16x128xf32>
    %c14_i32_252 = arith.constant 14 : i32
    %649 = vector.broadcast %c14_i32_252 : i32 to vector<16x128xi32>
    %650 = arith.cmpi slt, %4, %649 : vector<16x128xi32>
    %cst_253 = arith.constant 0.000000e+00 : f32
    %651 = vector.broadcast %cst_253 : f32 to vector<16x128xf32>
    %652 = arith.select %650, %648, %651 : vector<16x128xi1>, vector<16x128xf32>
    %c63 = arith.constant 63 : index
    %c0_254 = arith.constant 0 : index
    %653 = vector.load %arg3[%c63, %c0_254] : memref<102x128xf32, #tpu.memory_space<vmem>>, vector<1x128xf32>
    %c2_i32_255 = arith.constant 2 : i32
    %654 = tpu.dynamic_rotate %652 by %c2_i32_255 dim 1 : vector<16x128xf32>, i32 -> vector<16x128xf32>
    %655 = vector.broadcast %653 : vector<1x128xf32> to vector<16x128xf32>
    %656 = arith.mulf %655, %654 : vector<16x128xf32>
    %657 = arith.addf %647, %656 : vector<16x128xf32>
    %c64 = arith.constant 64 : index
    %c0_256 = arith.constant 0 : index
    %658 = vector.load %arg3[%c64, %c0_256] : memref<102x128xf32, #tpu.memory_space<vmem>>, vector<1x128xf32>
    %c1_i32_257 = arith.constant 1 : i32
    %659 = tpu.dynamic_rotate %652 by %c1_i32_257 dim 1 : vector<16x128xf32>, i32 -> vector<16x128xf32>
    %660 = vector.broadcast %658 : vector<1x128xf32> to vector<16x128xf32>
    %661 = arith.mulf %660, %659 : vector<16x128xf32>
    %662 = arith.addf %657, %661 : vector<16x128xf32>
    %c65 = arith.constant 65 : index
    %c0_258 = arith.constant 0 : index
    %663 = vector.load %arg3[%c65, %c0_258] : memref<102x128xf32, #tpu.memory_space<vmem>>, vector<1x128xf32>
    %664 = vector.broadcast %663 : vector<1x128xf32> to vector<16x128xf32>
    %665 = arith.mulf %664, %652 : vector<16x128xf32>
    %666 = arith.addf %662, %665 : vector<16x128xf32>
    %c66 = arith.constant 66 : index
    %c0_259 = arith.constant 0 : index
    %667 = vector.load %arg3[%c66, %c0_259] : memref<102x128xf32, #tpu.memory_space<vmem>>, vector<1x128xf32>
    %c127_i32_260 = arith.constant 127 : i32
    %668 = tpu.dynamic_rotate %652 by %c127_i32_260 dim 1 : vector<16x128xf32>, i32 -> vector<16x128xf32>
    %669 = vector.broadcast %667 : vector<1x128xf32> to vector<16x128xf32>
    %670 = arith.mulf %669, %668 : vector<16x128xf32>
    %671 = arith.addf %666, %670 : vector<16x128xf32>
    %c67 = arith.constant 67 : index
    %c0_261 = arith.constant 0 : index
    %672 = vector.load %arg3[%c67, %c0_261] : memref<102x128xf32, #tpu.memory_space<vmem>>, vector<1x128xf32>
    %c126_i32_262 = arith.constant 126 : i32
    %673 = tpu.dynamic_rotate %652 by %c126_i32_262 dim 1 : vector<16x128xf32>, i32 -> vector<16x128xf32>
    %674 = vector.broadcast %672 : vector<1x128xf32> to vector<16x128xf32>
    %675 = arith.mulf %674, %673 : vector<16x128xf32>
    %676 = arith.addf %671, %675 : vector<16x128xf32>
    %c12_263 = arith.constant 12 : index
    %c0_264 = arith.constant 0 : index
    %677 = vector.load %arg4[%c12_263, %c0_264] : memref<28x128xf32, #tpu.memory_space<vmem>>, vector<1x128xf32>
    %678 = vector.broadcast %677 : vector<1x128xf32> to vector<16x128xf32>
    %679 = arith.mulf %678, %676 : vector<16x128xf32>
    %c32_i32_265 = arith.constant 32 : i32
    %680 = tpu.dynamic_rotate %676 by %c32_i32_265 dim 1 : vector<16x128xf32>, i32 -> vector<16x128xf32>
    %c13_266 = arith.constant 13 : index
    %c0_267 = arith.constant 0 : index
    %681 = vector.load %arg4[%c13_266, %c0_267] : memref<28x128xf32, #tpu.memory_space<vmem>>, vector<1x128xf32>
    %682 = vector.broadcast %681 : vector<1x128xf32> to vector<16x128xf32>
    %683 = arith.mulf %682, %680 : vector<16x128xf32>
    %684 = arith.addf %679, %683 : vector<16x128xf32>
    %c64_i32_268 = arith.constant 64 : i32
    %685 = tpu.dynamic_rotate %676 by %c64_i32_268 dim 1 : vector<16x128xf32>, i32 -> vector<16x128xf32>
    %c14_269 = arith.constant 14 : index
    %c0_270 = arith.constant 0 : index
    %686 = vector.load %arg4[%c14_269, %c0_270] : memref<28x128xf32, #tpu.memory_space<vmem>>, vector<1x128xf32>
    %687 = vector.broadcast %686 : vector<1x128xf32> to vector<16x128xf32>
    %688 = arith.mulf %687, %685 : vector<16x128xf32>
    %689 = arith.addf %684, %688 : vector<16x128xf32>
    %c96_i32_271 = arith.constant 96 : i32
    %690 = tpu.dynamic_rotate %676 by %c96_i32_271 dim 1 : vector<16x128xf32>, i32 -> vector<16x128xf32>
    %c15_272 = arith.constant 15 : index
    %c0_273 = arith.constant 0 : index
    %691 = vector.load %arg4[%c15_272, %c0_273] : memref<28x128xf32, #tpu.memory_space<vmem>>, vector<1x128xf32>
    %692 = vector.broadcast %691 : vector<1x128xf32> to vector<16x128xf32>
    %693 = arith.mulf %692, %690 : vector<16x128xf32>
    %694 = arith.addf %689, %693 : vector<16x128xf32>
    %c2_i32_274 = arith.constant 2 : i32
    %695 = tpu.dynamic_rotate %2 by %c2_i32_274 dim 0 : vector<16x128xf32>, i32 -> vector<16x128xf32>
    %c2_i32_275 = arith.constant 2 : i32
    %696 = vector.broadcast %c2_i32_275 : i32 to vector<16x128xi32>
    %697 = arith.cmpi sge, %4, %696 : vector<16x128xi32>
    %cst_276 = arith.constant 0.000000e+00 : f32
    %698 = vector.broadcast %cst_276 : f32 to vector<16x128xf32>
    %699 = arith.select %697, %695, %698 : vector<16x128xi1>, vector<16x128xf32>
    %c68 = arith.constant 68 : index
    %c0_277 = arith.constant 0 : index
    %700 = vector.load %arg3[%c68, %c0_277] : memref<102x128xf32, #tpu.memory_space<vmem>>, vector<1x128xf32>
    %c2_i32_278 = arith.constant 2 : i32
    %701 = tpu.dynamic_rotate %699 by %c2_i32_278 dim 1 : vector<16x128xf32>, i32 -> vector<16x128xf32>
    %702 = vector.broadcast %700 : vector<1x128xf32> to vector<16x128xf32>
    %703 = arith.mulf %702, %701 : vector<16x128xf32>
    %c69 = arith.constant 69 : index
    %c0_279 = arith.constant 0 : index
    %704 = vector.load %arg3[%c69, %c0_279] : memref<102x128xf32, #tpu.memory_space<vmem>>, vector<1x128xf32>
    %705 = vector.broadcast %704 : vector<1x128xf32> to vector<16x128xf32>
    %706 = arith.mulf %705, %699 : vector<16x128xf32>
    %707 = arith.addf %703, %706 : vector<16x128xf32>
    %c70 = arith.constant 70 : index
    %c0_280 = arith.constant 0 : index
    %708 = vector.load %arg3[%c70, %c0_280] : memref<102x128xf32, #tpu.memory_space<vmem>>, vector<1x128xf32>
    %c126_i32_281 = arith.constant 126 : i32
    %709 = tpu.dynamic_rotate %699 by %c126_i32_281 dim 1 : vector<16x128xf32>, i32 -> vector<16x128xf32>
    %710 = vector.broadcast %708 : vector<1x128xf32> to vector<16x128xf32>
    %711 = arith.mulf %710, %709 : vector<16x128xf32>
    %712 = arith.addf %707, %711 : vector<16x128xf32>
    %c71 = arith.constant 71 : index
    %c0_282 = arith.constant 0 : index
    %713 = vector.load %arg3[%c71, %c0_282] : memref<102x128xf32, #tpu.memory_space<vmem>>, vector<1x128xf32>
    %c2_i32_283 = arith.constant 2 : i32
    %714 = tpu.dynamic_rotate %2 by %c2_i32_283 dim 1 : vector<16x128xf32>, i32 -> vector<16x128xf32>
    %715 = vector.broadcast %713 : vector<1x128xf32> to vector<16x128xf32>
    %716 = arith.mulf %715, %714 : vector<16x128xf32>
    %717 = arith.addf %712, %716 : vector<16x128xf32>
    %c72 = arith.constant 72 : index
    %c0_284 = arith.constant 0 : index
    %718 = vector.load %arg3[%c72, %c0_284] : memref<102x128xf32, #tpu.memory_space<vmem>>, vector<1x128xf32>
    %719 = vector.broadcast %718 : vector<1x128xf32> to vector<16x128xf32>
    %720 = arith.mulf %719, %2 : vector<16x128xf32>
    %721 = arith.addf %717, %720 : vector<16x128xf32>
    %c73 = arith.constant 73 : index
    %c0_285 = arith.constant 0 : index
    %722 = vector.load %arg3[%c73, %c0_285] : memref<102x128xf32, #tpu.memory_space<vmem>>, vector<1x128xf32>
    %c126_i32_286 = arith.constant 126 : i32
    %723 = tpu.dynamic_rotate %2 by %c126_i32_286 dim 1 : vector<16x128xf32>, i32 -> vector<16x128xf32>
    %724 = vector.broadcast %722 : vector<1x128xf32> to vector<16x128xf32>
    %725 = arith.mulf %724, %723 : vector<16x128xf32>
    %726 = arith.addf %721, %725 : vector<16x128xf32>
    %c14_i32_287 = arith.constant 14 : i32
    %727 = tpu.dynamic_rotate %2 by %c14_i32_287 dim 0 : vector<16x128xf32>, i32 -> vector<16x128xf32>
    %c14_i32_288 = arith.constant 14 : i32
    %728 = vector.broadcast %c14_i32_288 : i32 to vector<16x128xi32>
    %729 = arith.cmpi slt, %4, %728 : vector<16x128xi32>
    %cst_289 = arith.constant 0.000000e+00 : f32
    %730 = vector.broadcast %cst_289 : f32 to vector<16x128xf32>
    %731 = arith.select %729, %727, %730 : vector<16x128xi1>, vector<16x128xf32>
    %c74 = arith.constant 74 : index
    %c0_290 = arith.constant 0 : index
    %732 = vector.load %arg3[%c74, %c0_290] : memref<102x128xf32, #tpu.memory_space<vmem>>, vector<1x128xf32>
    %c2_i32_291 = arith.constant 2 : i32
    %733 = tpu.dynamic_rotate %731 by %c2_i32_291 dim 1 : vector<16x128xf32>, i32 -> vector<16x128xf32>
    %734 = vector.broadcast %732 : vector<1x128xf32> to vector<16x128xf32>
    %735 = arith.mulf %734, %733 : vector<16x128xf32>
    %736 = arith.addf %726, %735 : vector<16x128xf32>
    %c75 = arith.constant 75 : index
    %c0_292 = arith.constant 0 : index
    %737 = vector.load %arg3[%c75, %c0_292] : memref<102x128xf32, #tpu.memory_space<vmem>>, vector<1x128xf32>
    %738 = vector.broadcast %737 : vector<1x128xf32> to vector<16x128xf32>
    %739 = arith.mulf %738, %731 : vector<16x128xf32>
    %740 = arith.addf %736, %739 : vector<16x128xf32>
    %c76 = arith.constant 76 : index
    %c0_293 = arith.constant 0 : index
    %741 = vector.load %arg3[%c76, %c0_293] : memref<102x128xf32, #tpu.memory_space<vmem>>, vector<1x128xf32>
    %c126_i32_294 = arith.constant 126 : i32
    %742 = tpu.dynamic_rotate %731 by %c126_i32_294 dim 1 : vector<16x128xf32>, i32 -> vector<16x128xf32>
    %743 = vector.broadcast %741 : vector<1x128xf32> to vector<16x128xf32>
    %744 = arith.mulf %743, %742 : vector<16x128xf32>
    %745 = arith.addf %740, %744 : vector<16x128xf32>
    %c16_295 = arith.constant 16 : index
    %c0_296 = arith.constant 0 : index
    %746 = vector.load %arg4[%c16_295, %c0_296] : memref<28x128xf32, #tpu.memory_space<vmem>>, vector<1x128xf32>
    %747 = vector.broadcast %746 : vector<1x128xf32> to vector<16x128xf32>
    %748 = arith.mulf %747, %745 : vector<16x128xf32>
    %c32_i32_297 = arith.constant 32 : i32
    %749 = tpu.dynamic_rotate %745 by %c32_i32_297 dim 1 : vector<16x128xf32>, i32 -> vector<16x128xf32>
    %c17_298 = arith.constant 17 : index
    %c0_299 = arith.constant 0 : index
    %750 = vector.load %arg4[%c17_298, %c0_299] : memref<28x128xf32, #tpu.memory_space<vmem>>, vector<1x128xf32>
    %751 = vector.broadcast %750 : vector<1x128xf32> to vector<16x128xf32>
    %752 = arith.mulf %751, %749 : vector<16x128xf32>
    %753 = arith.addf %748, %752 : vector<16x128xf32>
    %c64_i32_300 = arith.constant 64 : i32
    %754 = tpu.dynamic_rotate %745 by %c64_i32_300 dim 1 : vector<16x128xf32>, i32 -> vector<16x128xf32>
    %c18_301 = arith.constant 18 : index
    %c0_302 = arith.constant 0 : index
    %755 = vector.load %arg4[%c18_301, %c0_302] : memref<28x128xf32, #tpu.memory_space<vmem>>, vector<1x128xf32>
    %756 = vector.broadcast %755 : vector<1x128xf32> to vector<16x128xf32>
    %757 = arith.mulf %756, %754 : vector<16x128xf32>
    %758 = arith.addf %753, %757 : vector<16x128xf32>
    %c96_i32_303 = arith.constant 96 : i32
    %759 = tpu.dynamic_rotate %745 by %c96_i32_303 dim 1 : vector<16x128xf32>, i32 -> vector<16x128xf32>
    %c19_304 = arith.constant 19 : index
    %c0_305 = arith.constant 0 : index
    %760 = vector.load %arg4[%c19_304, %c0_305] : memref<28x128xf32, #tpu.memory_space<vmem>>, vector<1x128xf32>
    %761 = vector.broadcast %760 : vector<1x128xf32> to vector<16x128xf32>
    %762 = arith.mulf %761, %759 : vector<16x128xf32>
    %763 = arith.addf %758, %762 : vector<16x128xf32>
    %c4_i32 = arith.constant 4 : i32
    %764 = tpu.dynamic_rotate %2 by %c4_i32 dim 0 : vector<16x128xf32>, i32 -> vector<16x128xf32>
    %c4_i32_306 = arith.constant 4 : i32
    %765 = vector.broadcast %c4_i32_306 : i32 to vector<16x128xi32>
    %766 = arith.cmpi sge, %4, %765 : vector<16x128xi32>
    %cst_307 = arith.constant 0.000000e+00 : f32
    %767 = vector.broadcast %cst_307 : f32 to vector<16x128xf32>
    %768 = arith.select %766, %764, %767 : vector<16x128xi1>, vector<16x128xf32>
    %c77 = arith.constant 77 : index
    %c0_308 = arith.constant 0 : index
    %769 = vector.load %arg3[%c77, %c0_308] : memref<102x128xf32, #tpu.memory_space<vmem>>, vector<1x128xf32>
    %c4_i32_309 = arith.constant 4 : i32
    %770 = tpu.dynamic_rotate %768 by %c4_i32_309 dim 1 : vector<16x128xf32>, i32 -> vector<16x128xf32>
    %771 = vector.broadcast %769 : vector<1x128xf32> to vector<16x128xf32>
    %772 = arith.mulf %771, %770 : vector<16x128xf32>
    %c78 = arith.constant 78 : index
    %c0_310 = arith.constant 0 : index
    %773 = vector.load %arg3[%c78, %c0_310] : memref<102x128xf32, #tpu.memory_space<vmem>>, vector<1x128xf32>
    %c2_i32_311 = arith.constant 2 : i32
    %774 = tpu.dynamic_rotate %768 by %c2_i32_311 dim 1 : vector<16x128xf32>, i32 -> vector<16x128xf32>
    %775 = vector.broadcast %773 : vector<1x128xf32> to vector<16x128xf32>
    %776 = arith.mulf %775, %774 : vector<16x128xf32>
    %777 = arith.addf %772, %776 : vector<16x128xf32>
    %c79 = arith.constant 79 : index
    %c0_312 = arith.constant 0 : index
    %778 = vector.load %arg3[%c79, %c0_312] : memref<102x128xf32, #tpu.memory_space<vmem>>, vector<1x128xf32>
    %779 = vector.broadcast %778 : vector<1x128xf32> to vector<16x128xf32>
    %780 = arith.mulf %779, %768 : vector<16x128xf32>
    %781 = arith.addf %777, %780 : vector<16x128xf32>
    %c80 = arith.constant 80 : index
    %c0_313 = arith.constant 0 : index
    %782 = vector.load %arg3[%c80, %c0_313] : memref<102x128xf32, #tpu.memory_space<vmem>>, vector<1x128xf32>
    %c126_i32_314 = arith.constant 126 : i32
    %783 = tpu.dynamic_rotate %768 by %c126_i32_314 dim 1 : vector<16x128xf32>, i32 -> vector<16x128xf32>
    %784 = vector.broadcast %782 : vector<1x128xf32> to vector<16x128xf32>
    %785 = arith.mulf %784, %783 : vector<16x128xf32>
    %786 = arith.addf %781, %785 : vector<16x128xf32>
    %c81 = arith.constant 81 : index
    %c0_315 = arith.constant 0 : index
    %787 = vector.load %arg3[%c81, %c0_315] : memref<102x128xf32, #tpu.memory_space<vmem>>, vector<1x128xf32>
    %c124_i32 = arith.constant 124 : i32
    %788 = tpu.dynamic_rotate %768 by %c124_i32 dim 1 : vector<16x128xf32>, i32 -> vector<16x128xf32>
    %789 = vector.broadcast %787 : vector<1x128xf32> to vector<16x128xf32>
    %790 = arith.mulf %789, %788 : vector<16x128xf32>
    %791 = arith.addf %786, %790 : vector<16x128xf32>
    %c2_i32_316 = arith.constant 2 : i32
    %792 = tpu.dynamic_rotate %2 by %c2_i32_316 dim 0 : vector<16x128xf32>, i32 -> vector<16x128xf32>
    %c2_i32_317 = arith.constant 2 : i32
    %793 = vector.broadcast %c2_i32_317 : i32 to vector<16x128xi32>
    %794 = arith.cmpi sge, %4, %793 : vector<16x128xi32>
    %cst_318 = arith.constant 0.000000e+00 : f32
    %795 = vector.broadcast %cst_318 : f32 to vector<16x128xf32>
    %796 = arith.select %794, %792, %795 : vector<16x128xi1>, vector<16x128xf32>
    %c82 = arith.constant 82 : index
    %c0_319 = arith.constant 0 : index
    %797 = vector.load %arg3[%c82, %c0_319] : memref<102x128xf32, #tpu.memory_space<vmem>>, vector<1x128xf32>
    %c4_i32_320 = arith.constant 4 : i32
    %798 = tpu.dynamic_rotate %796 by %c4_i32_320 dim 1 : vector<16x128xf32>, i32 -> vector<16x128xf32>
    %799 = vector.broadcast %797 : vector<1x128xf32> to vector<16x128xf32>
    %800 = arith.mulf %799, %798 : vector<16x128xf32>
    %801 = arith.addf %791, %800 : vector<16x128xf32>
    %c83 = arith.constant 83 : index
    %c0_321 = arith.constant 0 : index
    %802 = vector.load %arg3[%c83, %c0_321] : memref<102x128xf32, #tpu.memory_space<vmem>>, vector<1x128xf32>
    %c2_i32_322 = arith.constant 2 : i32
    %803 = tpu.dynamic_rotate %796 by %c2_i32_322 dim 1 : vector<16x128xf32>, i32 -> vector<16x128xf32>
    %804 = vector.broadcast %802 : vector<1x128xf32> to vector<16x128xf32>
    %805 = arith.mulf %804, %803 : vector<16x128xf32>
    %806 = arith.addf %801, %805 : vector<16x128xf32>
    %c84 = arith.constant 84 : index
    %c0_323 = arith.constant 0 : index
    %807 = vector.load %arg3[%c84, %c0_323] : memref<102x128xf32, #tpu.memory_space<vmem>>, vector<1x128xf32>
    %808 = vector.broadcast %807 : vector<1x128xf32> to vector<16x128xf32>
    %809 = arith.mulf %808, %796 : vector<16x128xf32>
    %810 = arith.addf %806, %809 : vector<16x128xf32>
    %c85 = arith.constant 85 : index
    %c0_324 = arith.constant 0 : index
    %811 = vector.load %arg3[%c85, %c0_324] : memref<102x128xf32, #tpu.memory_space<vmem>>, vector<1x128xf32>
    %c126_i32_325 = arith.constant 126 : i32
    %812 = tpu.dynamic_rotate %796 by %c126_i32_325 dim 1 : vector<16x128xf32>, i32 -> vector<16x128xf32>
    %813 = vector.broadcast %811 : vector<1x128xf32> to vector<16x128xf32>
    %814 = arith.mulf %813, %812 : vector<16x128xf32>
    %815 = arith.addf %810, %814 : vector<16x128xf32>
    %c86 = arith.constant 86 : index
    %c0_326 = arith.constant 0 : index
    %816 = vector.load %arg3[%c86, %c0_326] : memref<102x128xf32, #tpu.memory_space<vmem>>, vector<1x128xf32>
    %c124_i32_327 = arith.constant 124 : i32
    %817 = tpu.dynamic_rotate %796 by %c124_i32_327 dim 1 : vector<16x128xf32>, i32 -> vector<16x128xf32>
    %818 = vector.broadcast %816 : vector<1x128xf32> to vector<16x128xf32>
    %819 = arith.mulf %818, %817 : vector<16x128xf32>
    %820 = arith.addf %815, %819 : vector<16x128xf32>
    %c87 = arith.constant 87 : index
    %c0_328 = arith.constant 0 : index
    %821 = vector.load %arg3[%c87, %c0_328] : memref<102x128xf32, #tpu.memory_space<vmem>>, vector<1x128xf32>
    %c4_i32_329 = arith.constant 4 : i32
    %822 = tpu.dynamic_rotate %2 by %c4_i32_329 dim 1 : vector<16x128xf32>, i32 -> vector<16x128xf32>
    %823 = vector.broadcast %821 : vector<1x128xf32> to vector<16x128xf32>
    %824 = arith.mulf %823, %822 : vector<16x128xf32>
    %825 = arith.addf %820, %824 : vector<16x128xf32>
    %c88 = arith.constant 88 : index
    %c0_330 = arith.constant 0 : index
    %826 = vector.load %arg3[%c88, %c0_330] : memref<102x128xf32, #tpu.memory_space<vmem>>, vector<1x128xf32>
    %c2_i32_331 = arith.constant 2 : i32
    %827 = tpu.dynamic_rotate %2 by %c2_i32_331 dim 1 : vector<16x128xf32>, i32 -> vector<16x128xf32>
    %828 = vector.broadcast %826 : vector<1x128xf32> to vector<16x128xf32>
    %829 = arith.mulf %828, %827 : vector<16x128xf32>
    %830 = arith.addf %825, %829 : vector<16x128xf32>
    %c89 = arith.constant 89 : index
    %c0_332 = arith.constant 0 : index
    %831 = vector.load %arg3[%c89, %c0_332] : memref<102x128xf32, #tpu.memory_space<vmem>>, vector<1x128xf32>
    %832 = vector.broadcast %831 : vector<1x128xf32> to vector<16x128xf32>
    %833 = arith.mulf %832, %2 : vector<16x128xf32>
    %834 = arith.addf %830, %833 : vector<16x128xf32>
    %c90 = arith.constant 90 : index
    %c0_333 = arith.constant 0 : index
    %835 = vector.load %arg3[%c90, %c0_333] : memref<102x128xf32, #tpu.memory_space<vmem>>, vector<1x128xf32>
    %c126_i32_334 = arith.constant 126 : i32
    %836 = tpu.dynamic_rotate %2 by %c126_i32_334 dim 1 : vector<16x128xf32>, i32 -> vector<16x128xf32>
    %837 = vector.broadcast %835 : vector<1x128xf32> to vector<16x128xf32>
    %838 = arith.mulf %837, %836 : vector<16x128xf32>
    %839 = arith.addf %834, %838 : vector<16x128xf32>
    %c91 = arith.constant 91 : index
    %c0_335 = arith.constant 0 : index
    %840 = vector.load %arg3[%c91, %c0_335] : memref<102x128xf32, #tpu.memory_space<vmem>>, vector<1x128xf32>
    %c124_i32_336 = arith.constant 124 : i32
    %841 = tpu.dynamic_rotate %2 by %c124_i32_336 dim 1 : vector<16x128xf32>, i32 -> vector<16x128xf32>
    %842 = vector.broadcast %840 : vector<1x128xf32> to vector<16x128xf32>
    %843 = arith.mulf %842, %841 : vector<16x128xf32>
    %844 = arith.addf %839, %843 : vector<16x128xf32>
    %c14_i32_337 = arith.constant 14 : i32
    %845 = tpu.dynamic_rotate %2 by %c14_i32_337 dim 0 : vector<16x128xf32>, i32 -> vector<16x128xf32>
    %c14_i32_338 = arith.constant 14 : i32
    %846 = vector.broadcast %c14_i32_338 : i32 to vector<16x128xi32>
    %847 = arith.cmpi slt, %4, %846 : vector<16x128xi32>
    %cst_339 = arith.constant 0.000000e+00 : f32
    %848 = vector.broadcast %cst_339 : f32 to vector<16x128xf32>
    %849 = arith.select %847, %845, %848 : vector<16x128xi1>, vector<16x128xf32>
    %c92 = arith.constant 92 : index
    %c0_340 = arith.constant 0 : index
    %850 = vector.load %arg3[%c92, %c0_340] : memref<102x128xf32, #tpu.memory_space<vmem>>, vector<1x128xf32>
    %c4_i32_341 = arith.constant 4 : i32
    %851 = tpu.dynamic_rotate %849 by %c4_i32_341 dim 1 : vector<16x128xf32>, i32 -> vector<16x128xf32>
    %852 = vector.broadcast %850 : vector<1x128xf32> to vector<16x128xf32>
    %853 = arith.mulf %852, %851 : vector<16x128xf32>
    %854 = arith.addf %844, %853 : vector<16x128xf32>
    %c93 = arith.constant 93 : index
    %c0_342 = arith.constant 0 : index
    %855 = vector.load %arg3[%c93, %c0_342] : memref<102x128xf32, #tpu.memory_space<vmem>>, vector<1x128xf32>
    %c2_i32_343 = arith.constant 2 : i32
    %856 = tpu.dynamic_rotate %849 by %c2_i32_343 dim 1 : vector<16x128xf32>, i32 -> vector<16x128xf32>
    %857 = vector.broadcast %855 : vector<1x128xf32> to vector<16x128xf32>
    %858 = arith.mulf %857, %856 : vector<16x128xf32>
    %859 = arith.addf %854, %858 : vector<16x128xf32>
    %c94 = arith.constant 94 : index
    %c0_344 = arith.constant 0 : index
    %860 = vector.load %arg3[%c94, %c0_344] : memref<102x128xf32, #tpu.memory_space<vmem>>, vector<1x128xf32>
    %861 = vector.broadcast %860 : vector<1x128xf32> to vector<16x128xf32>
    %862 = arith.mulf %861, %849 : vector<16x128xf32>
    %863 = arith.addf %859, %862 : vector<16x128xf32>
    %c95 = arith.constant 95 : index
    %c0_345 = arith.constant 0 : index
    %864 = vector.load %arg3[%c95, %c0_345] : memref<102x128xf32, #tpu.memory_space<vmem>>, vector<1x128xf32>
    %c126_i32_346 = arith.constant 126 : i32
    %865 = tpu.dynamic_rotate %849 by %c126_i32_346 dim 1 : vector<16x128xf32>, i32 -> vector<16x128xf32>
    %866 = vector.broadcast %864 : vector<1x128xf32> to vector<16x128xf32>
    %867 = arith.mulf %866, %865 : vector<16x128xf32>
    %868 = arith.addf %863, %867 : vector<16x128xf32>
    %c96 = arith.constant 96 : index
    %c0_347 = arith.constant 0 : index
    %869 = vector.load %arg3[%c96, %c0_347] : memref<102x128xf32, #tpu.memory_space<vmem>>, vector<1x128xf32>
    %c124_i32_348 = arith.constant 124 : i32
    %870 = tpu.dynamic_rotate %849 by %c124_i32_348 dim 1 : vector<16x128xf32>, i32 -> vector<16x128xf32>
    %871 = vector.broadcast %869 : vector<1x128xf32> to vector<16x128xf32>
    %872 = arith.mulf %871, %870 : vector<16x128xf32>
    %873 = arith.addf %868, %872 : vector<16x128xf32>
    %c12_i32 = arith.constant 12 : i32
    %874 = tpu.dynamic_rotate %2 by %c12_i32 dim 0 : vector<16x128xf32>, i32 -> vector<16x128xf32>
    %c12_i32_349 = arith.constant 12 : i32
    %875 = vector.broadcast %c12_i32_349 : i32 to vector<16x128xi32>
    %876 = arith.cmpi slt, %4, %875 : vector<16x128xi32>
    %cst_350 = arith.constant 0.000000e+00 : f32
    %877 = vector.broadcast %cst_350 : f32 to vector<16x128xf32>
    %878 = arith.select %876, %874, %877 : vector<16x128xi1>, vector<16x128xf32>
    %c97 = arith.constant 97 : index
    %c0_351 = arith.constant 0 : index
    %879 = vector.load %arg3[%c97, %c0_351] : memref<102x128xf32, #tpu.memory_space<vmem>>, vector<1x128xf32>
    %c4_i32_352 = arith.constant 4 : i32
    %880 = tpu.dynamic_rotate %878 by %c4_i32_352 dim 1 : vector<16x128xf32>, i32 -> vector<16x128xf32>
    %881 = vector.broadcast %879 : vector<1x128xf32> to vector<16x128xf32>
    %882 = arith.mulf %881, %880 : vector<16x128xf32>
    %883 = arith.addf %873, %882 : vector<16x128xf32>
    %c98 = arith.constant 98 : index
    %c0_353 = arith.constant 0 : index
    %884 = vector.load %arg3[%c98, %c0_353] : memref<102x128xf32, #tpu.memory_space<vmem>>, vector<1x128xf32>
    %c2_i32_354 = arith.constant 2 : i32
    %885 = tpu.dynamic_rotate %878 by %c2_i32_354 dim 1 : vector<16x128xf32>, i32 -> vector<16x128xf32>
    %886 = vector.broadcast %884 : vector<1x128xf32> to vector<16x128xf32>
    %887 = arith.mulf %886, %885 : vector<16x128xf32>
    %888 = arith.addf %883, %887 : vector<16x128xf32>
    %c99 = arith.constant 99 : index
    %c0_355 = arith.constant 0 : index
    %889 = vector.load %arg3[%c99, %c0_355] : memref<102x128xf32, #tpu.memory_space<vmem>>, vector<1x128xf32>
    %890 = vector.broadcast %889 : vector<1x128xf32> to vector<16x128xf32>
    %891 = arith.mulf %890, %878 : vector<16x128xf32>
    %892 = arith.addf %888, %891 : vector<16x128xf32>
    %c100 = arith.constant 100 : index
    %c0_356 = arith.constant 0 : index
    %893 = vector.load %arg3[%c100, %c0_356] : memref<102x128xf32, #tpu.memory_space<vmem>>, vector<1x128xf32>
    %c126_i32_357 = arith.constant 126 : i32
    %894 = tpu.dynamic_rotate %878 by %c126_i32_357 dim 1 : vector<16x128xf32>, i32 -> vector<16x128xf32>
    %895 = vector.broadcast %893 : vector<1x128xf32> to vector<16x128xf32>
    %896 = arith.mulf %895, %894 : vector<16x128xf32>
    %897 = arith.addf %892, %896 : vector<16x128xf32>
    %c101 = arith.constant 101 : index
    %c0_358 = arith.constant 0 : index
    %898 = vector.load %arg3[%c101, %c0_358] : memref<102x128xf32, #tpu.memory_space<vmem>>, vector<1x128xf32>
    %c124_i32_359 = arith.constant 124 : i32
    %899 = tpu.dynamic_rotate %878 by %c124_i32_359 dim 1 : vector<16x128xf32>, i32 -> vector<16x128xf32>
    %900 = vector.broadcast %898 : vector<1x128xf32> to vector<16x128xf32>
    %901 = arith.mulf %900, %899 : vector<16x128xf32>
    %902 = arith.addf %897, %901 : vector<16x128xf32>
    %c20_360 = arith.constant 20 : index
    %c0_361 = arith.constant 0 : index
    %903 = vector.load %arg4[%c20_360, %c0_361] : memref<28x128xf32, #tpu.memory_space<vmem>>, vector<1x128xf32>
    %904 = vector.broadcast %903 : vector<1x128xf32> to vector<16x128xf32>
    %905 = arith.mulf %904, %902 : vector<16x128xf32>
    %c32_i32_362 = arith.constant 32 : i32
    %906 = tpu.dynamic_rotate %902 by %c32_i32_362 dim 1 : vector<16x128xf32>, i32 -> vector<16x128xf32>
    %c21_363 = arith.constant 21 : index
    %c0_364 = arith.constant 0 : index
    %907 = vector.load %arg4[%c21_363, %c0_364] : memref<28x128xf32, #tpu.memory_space<vmem>>, vector<1x128xf32>
    %908 = vector.broadcast %907 : vector<1x128xf32> to vector<16x128xf32>
    %909 = arith.mulf %908, %906 : vector<16x128xf32>
    %910 = arith.addf %905, %909 : vector<16x128xf32>
    %c64_i32_365 = arith.constant 64 : i32
    %911 = tpu.dynamic_rotate %902 by %c64_i32_365 dim 1 : vector<16x128xf32>, i32 -> vector<16x128xf32>
    %c22_366 = arith.constant 22 : index
    %c0_367 = arith.constant 0 : index
    %912 = vector.load %arg4[%c22_366, %c0_367] : memref<28x128xf32, #tpu.memory_space<vmem>>, vector<1x128xf32>
    %913 = vector.broadcast %912 : vector<1x128xf32> to vector<16x128xf32>
    %914 = arith.mulf %913, %911 : vector<16x128xf32>
    %915 = arith.addf %910, %914 : vector<16x128xf32>
    %c96_i32_368 = arith.constant 96 : i32
    %916 = tpu.dynamic_rotate %902 by %c96_i32_368 dim 1 : vector<16x128xf32>, i32 -> vector<16x128xf32>
    %c23_369 = arith.constant 23 : index
    %c0_370 = arith.constant 0 : index
    %917 = vector.load %arg4[%c23_369, %c0_370] : memref<28x128xf32, #tpu.memory_space<vmem>>, vector<1x128xf32>
    %918 = vector.broadcast %917 : vector<1x128xf32> to vector<16x128xf32>
    %919 = arith.mulf %918, %916 : vector<16x128xf32>
    %920 = arith.addf %915, %919 : vector<16x128xf32>
    %c24_371 = arith.constant 24 : index
    %c0_372 = arith.constant 0 : index
    %921 = vector.load %arg4[%c24_371, %c0_372] : memref<28x128xf32, #tpu.memory_space<vmem>>, vector<1x128xf32>
    %922 = vector.broadcast %921 : vector<1x128xf32> to vector<16x128xf32>
    %923 = arith.mulf %922, %2 : vector<16x128xf32>
    %c32_i32_373 = arith.constant 32 : i32
    %924 = tpu.dynamic_rotate %2 by %c32_i32_373 dim 1 : vector<16x128xf32>, i32 -> vector<16x128xf32>
    %c25_374 = arith.constant 25 : index
    %c0_375 = arith.constant 0 : index
    %925 = vector.load %arg4[%c25_374, %c0_375] : memref<28x128xf32, #tpu.memory_space<vmem>>, vector<1x128xf32>
    %926 = vector.broadcast %925 : vector<1x128xf32> to vector<16x128xf32>
    %927 = arith.mulf %926, %924 : vector<16x128xf32>
    %928 = arith.addf %923, %927 : vector<16x128xf32>
    %c64_i32_376 = arith.constant 64 : i32
    %929 = tpu.dynamic_rotate %2 by %c64_i32_376 dim 1 : vector<16x128xf32>, i32 -> vector<16x128xf32>
    %c26_377 = arith.constant 26 : index
    %c0_378 = arith.constant 0 : index
    %930 = vector.load %arg4[%c26_377, %c0_378] : memref<28x128xf32, #tpu.memory_space<vmem>>, vector<1x128xf32>
    %931 = vector.broadcast %930 : vector<1x128xf32> to vector<16x128xf32>
    %932 = arith.mulf %931, %929 : vector<16x128xf32>
    %933 = arith.addf %928, %932 : vector<16x128xf32>
    %c96_i32_379 = arith.constant 96 : i32
    %934 = tpu.dynamic_rotate %2 by %c96_i32_379 dim 1 : vector<16x128xf32>, i32 -> vector<16x128xf32>
    %c27_380 = arith.constant 27 : index
    %c0_381 = arith.constant 0 : index
    %935 = vector.load %arg4[%c27_380, %c0_381] : memref<28x128xf32, #tpu.memory_space<vmem>>, vector<1x128xf32>
    %936 = vector.broadcast %935 : vector<1x128xf32> to vector<16x128xf32>
    %937 = arith.mulf %936, %934 : vector<16x128xf32>
    %938 = arith.addf %933, %937 : vector<16x128xf32>
    %c1_i32_382 = arith.constant 1 : i32
    %939 = tpu.dynamic_rotate %2 by %c1_i32_382 dim 0 : vector<16x128xf32>, i32 -> vector<16x128xf32>
    %c1_i32_383 = arith.constant 1 : i32
    %940 = vector.broadcast %c1_i32_383 : i32 to vector<16x128xi32>
    %941 = arith.cmpi sge, %4, %940 : vector<16x128xi32>
    %cst_384 = arith.constant 0.000000e+00 : f32
    %942 = vector.broadcast %cst_384 : f32 to vector<16x128xf32>
    %943 = arith.select %941, %939, %942 : vector<16x128xi1>, vector<16x128xf32>
    %c1_i32_385 = arith.constant 1 : i32
    %944 = tpu.dynamic_rotate %943 by %c1_i32_385 dim 1 : vector<16x128xf32>, i32 -> vector<16x128xf32>
    %c0_386 = arith.constant 0 : index
    %c0_387 = arith.constant 0 : index
    %945 = vector.load %arg5[%c0_386, %c0_387] : memref<36x128xf32, #tpu.memory_space<vmem>>, vector<1x128xf32>
    %946 = vector.broadcast %945 : vector<1x128xf32> to vector<16x128xf32>
    %947 = arith.mulf %946, %944 : vector<16x128xf32>
    %c1_388 = arith.constant 1 : index
    %c0_389 = arith.constant 0 : index
    %948 = vector.load %arg5[%c1_388, %c0_389] : memref<36x128xf32, #tpu.memory_space<vmem>>, vector<1x128xf32>
    %949 = vector.broadcast %948 : vector<1x128xf32> to vector<16x128xf32>
    %950 = arith.mulf %949, %944 : vector<16x128xf32>
    %c2_390 = arith.constant 2 : index
    %c0_391 = arith.constant 0 : index
    %951 = vector.load %arg5[%c2_390, %c0_391] : memref<36x128xf32, #tpu.memory_space<vmem>>, vector<1x128xf32>
    %952 = vector.broadcast %951 : vector<1x128xf32> to vector<16x128xf32>
    %953 = arith.mulf %952, %944 : vector<16x128xf32>
    %c3_392 = arith.constant 3 : index
    %c0_393 = arith.constant 0 : index
    %954 = vector.load %arg5[%c3_392, %c0_393] : memref<36x128xf32, #tpu.memory_space<vmem>>, vector<1x128xf32>
    %955 = vector.broadcast %954 : vector<1x128xf32> to vector<16x128xf32>
    %956 = arith.mulf %955, %944 : vector<16x128xf32>
    %c4_394 = arith.constant 4 : index
    %c0_395 = arith.constant 0 : index
    %957 = vector.load %arg5[%c4_394, %c0_395] : memref<36x128xf32, #tpu.memory_space<vmem>>, vector<1x128xf32>
    %958 = vector.broadcast %957 : vector<1x128xf32> to vector<16x128xf32>
    %959 = arith.mulf %958, %943 : vector<16x128xf32>
    %960 = arith.addf %947, %959 : vector<16x128xf32>
    %c5_396 = arith.constant 5 : index
    %c0_397 = arith.constant 0 : index
    %961 = vector.load %arg5[%c5_396, %c0_397] : memref<36x128xf32, #tpu.memory_space<vmem>>, vector<1x128xf32>
    %962 = vector.broadcast %961 : vector<1x128xf32> to vector<16x128xf32>
    %963 = arith.mulf %962, %943 : vector<16x128xf32>
    %964 = arith.addf %950, %963 : vector<16x128xf32>
    %c6_398 = arith.constant 6 : index
    %c0_399 = arith.constant 0 : index
    %965 = vector.load %arg5[%c6_398, %c0_399] : memref<36x128xf32, #tpu.memory_space<vmem>>, vector<1x128xf32>
    %966 = vector.broadcast %965 : vector<1x128xf32> to vector<16x128xf32>
    %967 = arith.mulf %966, %943 : vector<16x128xf32>
    %968 = arith.addf %953, %967 : vector<16x128xf32>
    %c7_400 = arith.constant 7 : index
    %c0_401 = arith.constant 0 : index
    %969 = vector.load %arg5[%c7_400, %c0_401] : memref<36x128xf32, #tpu.memory_space<vmem>>, vector<1x128xf32>
    %970 = vector.broadcast %969 : vector<1x128xf32> to vector<16x128xf32>
    %971 = arith.mulf %970, %943 : vector<16x128xf32>
    %972 = arith.addf %956, %971 : vector<16x128xf32>
    %c127_i32_402 = arith.constant 127 : i32
    %973 = tpu.dynamic_rotate %943 by %c127_i32_402 dim 1 : vector<16x128xf32>, i32 -> vector<16x128xf32>
    %c8_403 = arith.constant 8 : index
    %c0_404 = arith.constant 0 : index
    %974 = vector.load %arg5[%c8_403, %c0_404] : memref<36x128xf32, #tpu.memory_space<vmem>>, vector<1x128xf32>
    %975 = vector.broadcast %974 : vector<1x128xf32> to vector<16x128xf32>
    %976 = arith.mulf %975, %973 : vector<16x128xf32>
    %977 = arith.addf %960, %976 : vector<16x128xf32>
    %c9_405 = arith.constant 9 : index
    %c0_406 = arith.constant 0 : index
    %978 = vector.load %arg5[%c9_405, %c0_406] : memref<36x128xf32, #tpu.memory_space<vmem>>, vector<1x128xf32>
    %979 = vector.broadcast %978 : vector<1x128xf32> to vector<16x128xf32>
    %980 = arith.mulf %979, %973 : vector<16x128xf32>
    %981 = arith.addf %964, %980 : vector<16x128xf32>
    %c10_407 = arith.constant 10 : index
    %c0_408 = arith.constant 0 : index
    %982 = vector.load %arg5[%c10_407, %c0_408] : memref<36x128xf32, #tpu.memory_space<vmem>>, vector<1x128xf32>
    %983 = vector.broadcast %982 : vector<1x128xf32> to vector<16x128xf32>
    %984 = arith.mulf %983, %973 : vector<16x128xf32>
    %985 = arith.addf %968, %984 : vector<16x128xf32>
    %c11_409 = arith.constant 11 : index
    %c0_410 = arith.constant 0 : index
    %986 = vector.load %arg5[%c11_409, %c0_410] : memref<36x128xf32, #tpu.memory_space<vmem>>, vector<1x128xf32>
    %987 = vector.broadcast %986 : vector<1x128xf32> to vector<16x128xf32>
    %988 = arith.mulf %987, %973 : vector<16x128xf32>
    %989 = arith.addf %972, %988 : vector<16x128xf32>
    %c1_i32_411 = arith.constant 1 : i32
    %990 = tpu.dynamic_rotate %2 by %c1_i32_411 dim 1 : vector<16x128xf32>, i32 -> vector<16x128xf32>
    %c12_412 = arith.constant 12 : index
    %c0_413 = arith.constant 0 : index
    %991 = vector.load %arg5[%c12_412, %c0_413] : memref<36x128xf32, #tpu.memory_space<vmem>>, vector<1x128xf32>
    %992 = vector.broadcast %991 : vector<1x128xf32> to vector<16x128xf32>
    %993 = arith.mulf %992, %990 : vector<16x128xf32>
    %994 = arith.addf %977, %993 : vector<16x128xf32>
    %c13_414 = arith.constant 13 : index
    %c0_415 = arith.constant 0 : index
    %995 = vector.load %arg5[%c13_414, %c0_415] : memref<36x128xf32, #tpu.memory_space<vmem>>, vector<1x128xf32>
    %996 = vector.broadcast %995 : vector<1x128xf32> to vector<16x128xf32>
    %997 = arith.mulf %996, %990 : vector<16x128xf32>
    %998 = arith.addf %981, %997 : vector<16x128xf32>
    %c14_416 = arith.constant 14 : index
    %c0_417 = arith.constant 0 : index
    %999 = vector.load %arg5[%c14_416, %c0_417] : memref<36x128xf32, #tpu.memory_space<vmem>>, vector<1x128xf32>
    %1000 = vector.broadcast %999 : vector<1x128xf32> to vector<16x128xf32>
    %1001 = arith.mulf %1000, %990 : vector<16x128xf32>
    %1002 = arith.addf %985, %1001 : vector<16x128xf32>
    %c15_418 = arith.constant 15 : index
    %c0_419 = arith.constant 0 : index
    %1003 = vector.load %arg5[%c15_418, %c0_419] : memref<36x128xf32, #tpu.memory_space<vmem>>, vector<1x128xf32>
    %1004 = vector.broadcast %1003 : vector<1x128xf32> to vector<16x128xf32>
    %1005 = arith.mulf %1004, %990 : vector<16x128xf32>
    %1006 = arith.addf %989, %1005 : vector<16x128xf32>
    %c16_420 = arith.constant 16 : index
    %c0_421 = arith.constant 0 : index
    %1007 = vector.load %arg5[%c16_420, %c0_421] : memref<36x128xf32, #tpu.memory_space<vmem>>, vector<1x128xf32>
    %1008 = vector.broadcast %1007 : vector<1x128xf32> to vector<16x128xf32>
    %1009 = arith.mulf %1008, %2 : vector<16x128xf32>
    %1010 = arith.addf %994, %1009 : vector<16x128xf32>
    %c17_422 = arith.constant 17 : index
    %c0_423 = arith.constant 0 : index
    %1011 = vector.load %arg5[%c17_422, %c0_423] : memref<36x128xf32, #tpu.memory_space<vmem>>, vector<1x128xf32>
    %1012 = vector.broadcast %1011 : vector<1x128xf32> to vector<16x128xf32>
    %1013 = arith.mulf %1012, %2 : vector<16x128xf32>
    %1014 = arith.addf %998, %1013 : vector<16x128xf32>
    %c18_424 = arith.constant 18 : index
    %c0_425 = arith.constant 0 : index
    %1015 = vector.load %arg5[%c18_424, %c0_425] : memref<36x128xf32, #tpu.memory_space<vmem>>, vector<1x128xf32>
    %1016 = vector.broadcast %1015 : vector<1x128xf32> to vector<16x128xf32>
    %1017 = arith.mulf %1016, %2 : vector<16x128xf32>
    %1018 = arith.addf %1002, %1017 : vector<16x128xf32>
    %c19_426 = arith.constant 19 : index
    %c0_427 = arith.constant 0 : index
    %1019 = vector.load %arg5[%c19_426, %c0_427] : memref<36x128xf32, #tpu.memory_space<vmem>>, vector<1x128xf32>
    %1020 = vector.broadcast %1019 : vector<1x128xf32> to vector<16x128xf32>
    %1021 = arith.mulf %1020, %2 : vector<16x128xf32>
    %1022 = arith.addf %1006, %1021 : vector<16x128xf32>
    %c127_i32_428 = arith.constant 127 : i32
    %1023 = tpu.dynamic_rotate %2 by %c127_i32_428 dim 1 : vector<16x128xf32>, i32 -> vector<16x128xf32>
    %c20_429 = arith.constant 20 : index
    %c0_430 = arith.constant 0 : index
    %1024 = vector.load %arg5[%c20_429, %c0_430] : memref<36x128xf32, #tpu.memory_space<vmem>>, vector<1x128xf32>
    %1025 = vector.broadcast %1024 : vector<1x128xf32> to vector<16x128xf32>
    %1026 = arith.mulf %1025, %1023 : vector<16x128xf32>
    %1027 = arith.addf %1010, %1026 : vector<16x128xf32>
    %c21_431 = arith.constant 21 : index
    %c0_432 = arith.constant 0 : index
    %1028 = vector.load %arg5[%c21_431, %c0_432] : memref<36x128xf32, #tpu.memory_space<vmem>>, vector<1x128xf32>
    %1029 = vector.broadcast %1028 : vector<1x128xf32> to vector<16x128xf32>
    %1030 = arith.mulf %1029, %1023 : vector<16x128xf32>
    %1031 = arith.addf %1014, %1030 : vector<16x128xf32>
    %c22_433 = arith.constant 22 : index
    %c0_434 = arith.constant 0 : index
    %1032 = vector.load %arg5[%c22_433, %c0_434] : memref<36x128xf32, #tpu.memory_space<vmem>>, vector<1x128xf32>
    %1033 = vector.broadcast %1032 : vector<1x128xf32> to vector<16x128xf32>
    %1034 = arith.mulf %1033, %1023 : vector<16x128xf32>
    %1035 = arith.addf %1018, %1034 : vector<16x128xf32>
    %c23_435 = arith.constant 23 : index
    %c0_436 = arith.constant 0 : index
    %1036 = vector.load %arg5[%c23_435, %c0_436] : memref<36x128xf32, #tpu.memory_space<vmem>>, vector<1x128xf32>
    %1037 = vector.broadcast %1036 : vector<1x128xf32> to vector<16x128xf32>
    %1038 = arith.mulf %1037, %1023 : vector<16x128xf32>
    %1039 = arith.addf %1022, %1038 : vector<16x128xf32>
    %c15_i32_437 = arith.constant 15 : i32
    %1040 = tpu.dynamic_rotate %2 by %c15_i32_437 dim 0 : vector<16x128xf32>, i32 -> vector<16x128xf32>
    %c15_i32_438 = arith.constant 15 : i32
    %1041 = vector.broadcast %c15_i32_438 : i32 to vector<16x128xi32>
    %1042 = arith.cmpi slt, %4, %1041 : vector<16x128xi32>
    %cst_439 = arith.constant 0.000000e+00 : f32
    %1043 = vector.broadcast %cst_439 : f32 to vector<16x128xf32>
    %1044 = arith.select %1042, %1040, %1043 : vector<16x128xi1>, vector<16x128xf32>
    %c1_i32_440 = arith.constant 1 : i32
    %1045 = tpu.dynamic_rotate %1044 by %c1_i32_440 dim 1 : vector<16x128xf32>, i32 -> vector<16x128xf32>
    %c24_441 = arith.constant 24 : index
    %c0_442 = arith.constant 0 : index
    %1046 = vector.load %arg5[%c24_441, %c0_442] : memref<36x128xf32, #tpu.memory_space<vmem>>, vector<1x128xf32>
    %1047 = vector.broadcast %1046 : vector<1x128xf32> to vector<16x128xf32>
    %1048 = arith.mulf %1047, %1045 : vector<16x128xf32>
    %1049 = arith.addf %1027, %1048 : vector<16x128xf32>
    %c25_443 = arith.constant 25 : index
    %c0_444 = arith.constant 0 : index
    %1050 = vector.load %arg5[%c25_443, %c0_444] : memref<36x128xf32, #tpu.memory_space<vmem>>, vector<1x128xf32>
    %1051 = vector.broadcast %1050 : vector<1x128xf32> to vector<16x128xf32>
    %1052 = arith.mulf %1051, %1045 : vector<16x128xf32>
    %1053 = arith.addf %1031, %1052 : vector<16x128xf32>
    %c26_445 = arith.constant 26 : index
    %c0_446 = arith.constant 0 : index
    %1054 = vector.load %arg5[%c26_445, %c0_446] : memref<36x128xf32, #tpu.memory_space<vmem>>, vector<1x128xf32>
    %1055 = vector.broadcast %1054 : vector<1x128xf32> to vector<16x128xf32>
    %1056 = arith.mulf %1055, %1045 : vector<16x128xf32>
    %1057 = arith.addf %1035, %1056 : vector<16x128xf32>
    %c27_447 = arith.constant 27 : index
    %c0_448 = arith.constant 0 : index
    %1058 = vector.load %arg5[%c27_447, %c0_448] : memref<36x128xf32, #tpu.memory_space<vmem>>, vector<1x128xf32>
    %1059 = vector.broadcast %1058 : vector<1x128xf32> to vector<16x128xf32>
    %1060 = arith.mulf %1059, %1045 : vector<16x128xf32>
    %1061 = arith.addf %1039, %1060 : vector<16x128xf32>
    %c28_449 = arith.constant 28 : index
    %c0_450 = arith.constant 0 : index
    %1062 = vector.load %arg5[%c28_449, %c0_450] : memref<36x128xf32, #tpu.memory_space<vmem>>, vector<1x128xf32>
    %1063 = vector.broadcast %1062 : vector<1x128xf32> to vector<16x128xf32>
    %1064 = arith.mulf %1063, %1044 : vector<16x128xf32>
    %1065 = arith.addf %1049, %1064 : vector<16x128xf32>
    %c29_451 = arith.constant 29 : index
    %c0_452 = arith.constant 0 : index
    %1066 = vector.load %arg5[%c29_451, %c0_452] : memref<36x128xf32, #tpu.memory_space<vmem>>, vector<1x128xf32>
    %1067 = vector.broadcast %1066 : vector<1x128xf32> to vector<16x128xf32>
    %1068 = arith.mulf %1067, %1044 : vector<16x128xf32>
    %1069 = arith.addf %1053, %1068 : vector<16x128xf32>
    %c30_453 = arith.constant 30 : index
    %c0_454 = arith.constant 0 : index
    %1070 = vector.load %arg5[%c30_453, %c0_454] : memref<36x128xf32, #tpu.memory_space<vmem>>, vector<1x128xf32>
    %1071 = vector.broadcast %1070 : vector<1x128xf32> to vector<16x128xf32>
    %1072 = arith.mulf %1071, %1044 : vector<16x128xf32>
    %1073 = arith.addf %1057, %1072 : vector<16x128xf32>
    %c31_455 = arith.constant 31 : index
    %c0_456 = arith.constant 0 : index
    %1074 = vector.load %arg5[%c31_455, %c0_456] : memref<36x128xf32, #tpu.memory_space<vmem>>, vector<1x128xf32>
    %1075 = vector.broadcast %1074 : vector<1x128xf32> to vector<16x128xf32>
    %1076 = arith.mulf %1075, %1044 : vector<16x128xf32>
    %1077 = arith.addf %1061, %1076 : vector<16x128xf32>
    %c127_i32_457 = arith.constant 127 : i32
    %1078 = tpu.dynamic_rotate %1044 by %c127_i32_457 dim 1 : vector<16x128xf32>, i32 -> vector<16x128xf32>
    %c32_458 = arith.constant 32 : index
    %c0_459 = arith.constant 0 : index
    %1079 = vector.load %arg5[%c32_458, %c0_459] : memref<36x128xf32, #tpu.memory_space<vmem>>, vector<1x128xf32>
    %1080 = vector.broadcast %1079 : vector<1x128xf32> to vector<16x128xf32>
    %1081 = arith.mulf %1080, %1078 : vector<16x128xf32>
    %1082 = arith.addf %1065, %1081 : vector<16x128xf32>
    %c33_460 = arith.constant 33 : index
    %c0_461 = arith.constant 0 : index
    %1083 = vector.load %arg5[%c33_460, %c0_461] : memref<36x128xf32, #tpu.memory_space<vmem>>, vector<1x128xf32>
    %1084 = vector.broadcast %1083 : vector<1x128xf32> to vector<16x128xf32>
    %1085 = arith.mulf %1084, %1078 : vector<16x128xf32>
    %1086 = arith.addf %1069, %1085 : vector<16x128xf32>
    %c34_462 = arith.constant 34 : index
    %c0_463 = arith.constant 0 : index
    %1087 = vector.load %arg5[%c34_462, %c0_463] : memref<36x128xf32, #tpu.memory_space<vmem>>, vector<1x128xf32>
    %1088 = vector.broadcast %1087 : vector<1x128xf32> to vector<16x128xf32>
    %1089 = arith.mulf %1088, %1078 : vector<16x128xf32>
    %1090 = arith.addf %1073, %1089 : vector<16x128xf32>
    %c35_464 = arith.constant 35 : index
    %c0_465 = arith.constant 0 : index
    %1091 = vector.load %arg5[%c35_464, %c0_465] : memref<36x128xf32, #tpu.memory_space<vmem>>, vector<1x128xf32>
    %1092 = vector.broadcast %1091 : vector<1x128xf32> to vector<16x128xf32>
    %1093 = arith.mulf %1092, %1078 : vector<16x128xf32>
    %1094 = arith.addf %1077, %1093 : vector<16x128xf32>
    %c32_i32_466 = arith.constant 32 : i32
    %1095 = tpu.dynamic_rotate %1086 by %c32_i32_466 dim 1 : vector<16x128xf32>, i32 -> vector<16x128xf32>
    %1096 = arith.addf %1082, %1095 : vector<16x128xf32>
    %c64_i32_467 = arith.constant 64 : i32
    %1097 = tpu.dynamic_rotate %1090 by %c64_i32_467 dim 1 : vector<16x128xf32>, i32 -> vector<16x128xf32>
    %1098 = arith.addf %1096, %1097 : vector<16x128xf32>
    %c96_i32_468 = arith.constant 96 : i32
    %1099 = tpu.dynamic_rotate %1094 by %c96_i32_468 dim 1 : vector<16x128xf32>, i32 -> vector<16x128xf32>
    %1100 = arith.addf %1098, %1099 : vector<16x128xf32>
    %cst_469 = arith.constant 0.000000e+00 : f32
    %1101 = vector.broadcast %cst_469 : f32 to vector<4x128xf32>
    %cst_470 = arith.constant dense<0.000000e+00> : vector<128xf32>
    %1102 = vector.multi_reduction <add>, %537, %cst_470 [0] : vector<16x128xf32> to vector<128xf32>
    %1103 = vector.shape_cast %1102 : vector<128xf32> to vector<1x128xf32>
    %1104 = arith.mulf %537, %537 : vector<16x128xf32>
    %cst_471 = arith.constant dense<0.000000e+00> : vector<128xf32>
    %1105 = vector.multi_reduction <add>, %1104, %cst_471 [0] : vector<16x128xf32> to vector<128xf32>
    %1106 = vector.shape_cast %1105 : vector<128xf32> to vector<1x128xf32>
    %cst_472 = arith.constant dense<0.000000e+00> : vector<128xf32>
    %1107 = vector.multi_reduction <add>, %694, %cst_472 [0] : vector<16x128xf32> to vector<128xf32>
    %1108 = vector.shape_cast %1107 : vector<128xf32> to vector<1x128xf32>
    %1109 = arith.mulf %694, %694 : vector<16x128xf32>
    %cst_473 = arith.constant dense<0.000000e+00> : vector<128xf32>
    %1110 = vector.multi_reduction <add>, %1109, %cst_473 [0] : vector<16x128xf32> to vector<128xf32>
    %1111 = vector.shape_cast %1110 : vector<128xf32> to vector<1x128xf32>
    %cst_474 = arith.constant dense<0.000000e+00> : vector<128xf32>
    %1112 = vector.multi_reduction <add>, %763, %cst_474 [0] : vector<16x128xf32> to vector<128xf32>
    %1113 = vector.shape_cast %1112 : vector<128xf32> to vector<1x128xf32>
    %1114 = arith.mulf %763, %763 : vector<16x128xf32>
    %cst_475 = arith.constant dense<0.000000e+00> : vector<128xf32>
    %1115 = vector.multi_reduction <add>, %1114, %cst_475 [0] : vector<16x128xf32> to vector<128xf32>
    %1116 = vector.shape_cast %1115 : vector<128xf32> to vector<1x128xf32>
    %cst_476 = arith.constant dense<0.000000e+00> : vector<128xf32>
    %1117 = vector.multi_reduction <add>, %920, %cst_476 [0] : vector<16x128xf32> to vector<128xf32>
    %1118 = vector.shape_cast %1117 : vector<128xf32> to vector<1x128xf32>
    %1119 = arith.mulf %920, %920 : vector<16x128xf32>
    %cst_477 = arith.constant dense<0.000000e+00> : vector<128xf32>
    %1120 = vector.multi_reduction <add>, %1119, %cst_477 [0] : vector<16x128xf32> to vector<128xf32>
    %1121 = vector.shape_cast %1120 : vector<128xf32> to vector<1x128xf32>
    %cst_478 = arith.constant dense<0.000000e+00> : vector<128xf32>
    %1122 = vector.multi_reduction <add>, %938, %cst_478 [0] : vector<16x128xf32> to vector<128xf32>
    %1123 = vector.shape_cast %1122 : vector<128xf32> to vector<1x128xf32>
    %1124 = arith.mulf %938, %938 : vector<16x128xf32>
    %cst_479 = arith.constant dense<0.000000e+00> : vector<128xf32>
    %1125 = vector.multi_reduction <add>, %1124, %cst_479 [0] : vector<16x128xf32> to vector<128xf32>
    %1126 = vector.shape_cast %1125 : vector<128xf32> to vector<1x128xf32>
    %cst_480 = arith.constant dense<0.000000e+00> : vector<128xf32>
    %1127 = vector.multi_reduction <add>, %1100, %cst_480 [0] : vector<16x128xf32> to vector<128xf32>
    %1128 = vector.shape_cast %1127 : vector<128xf32> to vector<1x128xf32>
    %1129 = arith.mulf %1100, %1100 : vector<16x128xf32>
    %cst_481 = arith.constant dense<0.000000e+00> : vector<128xf32>
    %1130 = vector.multi_reduction <add>, %1129, %cst_481 [0] : vector<16x128xf32> to vector<128xf32>
    %1131 = vector.shape_cast %1130 : vector<128xf32> to vector<1x128xf32>
    %1132 = tpu.concatenate %1103, %1106, %1108, %1111, %1113, %1116, %1118, %1121, %1123, %1126, %1128, %1131, %1101 in 0 : vector<1x128xf32>, vector<1x128xf32>, vector<1x128xf32>, vector<1x128xf32>, vector<1x128xf32>, vector<1x128xf32>, vector<1x128xf32>, vector<1x128xf32>, vector<1x128xf32>, vector<1x128xf32>, vector<1x128xf32>, vector<1x128xf32>, vector<4x128xf32> -> vector<16x128xf32>
    %c0_482 = arith.constant 0 : index
    %c0_483 = arith.constant 0 : index
    %1133 = vector.load %arg6[%c0_482, %c0_483] : memref<128x128xf32, #tpu.memory_space<vmem>>, vector<128x128xf32>
    %cst_484 = arith.constant dense<0.000000e+00> : vector<16x128xf32>
    %1134 = tpu.matmul %1132, %1133, %cst_484 {dimension_numbers = #tpu.dot_dimension_numbers<[1], [0], [0], [1], [0, 0, 1, 1], [], []>} : vector<16x128xf32>, vector<128x128xf32>, vector<16x128xf32> -> vector<16x128xf32>
    %c4_485 = arith.constant 4 : index
    %1135 = memref.load %arg0[%c4_485] : memref<10xf32, #tpu.memory_space<smem>>
    %1136 = vector.extract_strided_slice %1134 {offsets = [0, 0], sizes = [1, 128], strides = [1, 1]} : vector<16x128xf32> to vector<1x128xf32>
    %1137 = vector.extract_strided_slice %1134 {offsets = [1, 0], sizes = [1, 128], strides = [1, 1]} : vector<16x128xf32> to vector<1x128xf32>
    %1138 = arith.mulf %1136, %1136 : vector<1x128xf32>
    %1139 = arith.subf %1137, %1138 : vector<1x128xf32>
    %cst_486 = arith.constant 0.000000e+00 : f32
    %1140 = vector.broadcast %cst_486 : f32 to vector<1x128xf32>
    %1141 = arith.maximumf %1139, %1140 : vector<1x128xf32>
    %1142 = vector.broadcast %1136 : vector<1x128xf32> to vector<16x128xf32>
    %1143 = arith.subf %537, %1142 : vector<16x128xf32>
    %cst_487 = arith.constant 9.99999974E-6 : f32
    %1144 = vector.broadcast %cst_487 : f32 to vector<1x128xf32>
    %1145 = arith.addf %1141, %1144 : vector<1x128xf32>
    %1146 = math.rsqrt %1145 : vector<1x128xf32>
    %1147 = vector.broadcast %1135 : f32 to vector<1x128xf32>
    %1148 = arith.mulf %1147, %1146 : vector<1x128xf32>
    %1149 = vector.broadcast %1148 : vector<1x128xf32> to vector<16x128xf32>
    %1150 = arith.mulf %1143, %1149 : vector<16x128xf32>
    %1151 = arith.addf %434, %1150 : vector<16x128xf32>
    %c5_488 = arith.constant 5 : index
    %1152 = memref.load %arg0[%c5_488] : memref<10xf32, #tpu.memory_space<smem>>
    %1153 = vector.extract_strided_slice %1134 {offsets = [2, 0], sizes = [1, 128], strides = [1, 1]} : vector<16x128xf32> to vector<1x128xf32>
    %1154 = vector.extract_strided_slice %1134 {offsets = [3, 0], sizes = [1, 128], strides = [1, 1]} : vector<16x128xf32> to vector<1x128xf32>
    %1155 = arith.mulf %1153, %1153 : vector<1x128xf32>
    %1156 = arith.subf %1154, %1155 : vector<1x128xf32>
    %cst_489 = arith.constant 0.000000e+00 : f32
    %1157 = vector.broadcast %cst_489 : f32 to vector<1x128xf32>
    %1158 = arith.maximumf %1156, %1157 : vector<1x128xf32>
    %1159 = vector.broadcast %1153 : vector<1x128xf32> to vector<16x128xf32>
    %1160 = arith.subf %694, %1159 : vector<16x128xf32>
    %cst_490 = arith.constant 9.99999974E-6 : f32
    %1161 = vector.broadcast %cst_490 : f32 to vector<1x128xf32>
    %1162 = arith.addf %1158, %1161 : vector<1x128xf32>
    %1163 = math.rsqrt %1162 : vector<1x128xf32>
    %1164 = vector.broadcast %1152 : f32 to vector<1x128xf32>
    %1165 = arith.mulf %1164, %1163 : vector<1x128xf32>
    %1166 = vector.broadcast %1165 : vector<1x128xf32> to vector<16x128xf32>
    %1167 = arith.mulf %1160, %1166 : vector<16x128xf32>
    %1168 = arith.addf %1151, %1167 : vector<16x128xf32>
    %c6_491 = arith.constant 6 : index
    %1169 = memref.load %arg0[%c6_491] : memref<10xf32, #tpu.memory_space<smem>>
    %1170 = vector.extract_strided_slice %1134 {offsets = [4, 0], sizes = [1, 128], strides = [1, 1]} : vector<16x128xf32> to vector<1x128xf32>
    %1171 = vector.extract_strided_slice %1134 {offsets = [5, 0], sizes = [1, 128], strides = [1, 1]} : vector<16x128xf32> to vector<1x128xf32>
    %1172 = arith.mulf %1170, %1170 : vector<1x128xf32>
    %1173 = arith.subf %1171, %1172 : vector<1x128xf32>
    %cst_492 = arith.constant 0.000000e+00 : f32
    %1174 = vector.broadcast %cst_492 : f32 to vector<1x128xf32>
    %1175 = arith.maximumf %1173, %1174 : vector<1x128xf32>
    %1176 = vector.broadcast %1170 : vector<1x128xf32> to vector<16x128xf32>
    %1177 = arith.subf %763, %1176 : vector<16x128xf32>
    %cst_493 = arith.constant 9.99999974E-6 : f32
    %1178 = vector.broadcast %cst_493 : f32 to vector<1x128xf32>
    %1179 = arith.addf %1175, %1178 : vector<1x128xf32>
    %1180 = math.rsqrt %1179 : vector<1x128xf32>
    %1181 = vector.broadcast %1169 : f32 to vector<1x128xf32>
    %1182 = arith.mulf %1181, %1180 : vector<1x128xf32>
    %1183 = vector.broadcast %1182 : vector<1x128xf32> to vector<16x128xf32>
    %1184 = arith.mulf %1177, %1183 : vector<16x128xf32>
    %1185 = arith.addf %1168, %1184 : vector<16x128xf32>
    %c7_494 = arith.constant 7 : index
    %1186 = memref.load %arg0[%c7_494] : memref<10xf32, #tpu.memory_space<smem>>
    %1187 = vector.extract_strided_slice %1134 {offsets = [6, 0], sizes = [1, 128], strides = [1, 1]} : vector<16x128xf32> to vector<1x128xf32>
    %1188 = vector.extract_strided_slice %1134 {offsets = [7, 0], sizes = [1, 128], strides = [1, 1]} : vector<16x128xf32> to vector<1x128xf32>
    %1189 = arith.mulf %1187, %1187 : vector<1x128xf32>
    %1190 = arith.subf %1188, %1189 : vector<1x128xf32>
    %cst_495 = arith.constant 0.000000e+00 : f32
    %1191 = vector.broadcast %cst_495 : f32 to vector<1x128xf32>
    %1192 = arith.maximumf %1190, %1191 : vector<1x128xf32>
    %1193 = vector.broadcast %1187 : vector<1x128xf32> to vector<16x128xf32>
    %1194 = arith.subf %920, %1193 : vector<16x128xf32>
    %cst_496 = arith.constant 9.99999974E-6 : f32
    %1195 = vector.broadcast %cst_496 : f32 to vector<1x128xf32>
    %1196 = arith.addf %1192, %1195 : vector<1x128xf32>
    %1197 = math.rsqrt %1196 : vector<1x128xf32>
    %1198 = vector.broadcast %1186 : f32 to vector<1x128xf32>
    %1199 = arith.mulf %1198, %1197 : vector<1x128xf32>
    %1200 = vector.broadcast %1199 : vector<1x128xf32> to vector<16x128xf32>
    %1201 = arith.mulf %1194, %1200 : vector<16x128xf32>
    %1202 = arith.addf %1185, %1201 : vector<16x128xf32>
    %c8_497 = arith.constant 8 : index
    %1203 = memref.load %arg0[%c8_497] : memref<10xf32, #tpu.memory_space<smem>>
    %1204 = vector.extract_strided_slice %1134 {offsets = [8, 0], sizes = [1, 128], strides = [1, 1]} : vector<16x128xf32> to vector<1x128xf32>
    %1205 = vector.extract_strided_slice %1134 {offsets = [9, 0], sizes = [1, 128], strides = [1, 1]} : vector<16x128xf32> to vector<1x128xf32>
    %1206 = arith.mulf %1204, %1204 : vector<1x128xf32>
    %1207 = arith.subf %1205, %1206 : vector<1x128xf32>
    %cst_498 = arith.constant 0.000000e+00 : f32
    %1208 = vector.broadcast %cst_498 : f32 to vector<1x128xf32>
    %1209 = arith.maximumf %1207, %1208 : vector<1x128xf32>
    %1210 = vector.broadcast %1204 : vector<1x128xf32> to vector<16x128xf32>
    %1211 = arith.subf %938, %1210 : vector<16x128xf32>
    %cst_499 = arith.constant 9.99999974E-6 : f32
    %1212 = vector.broadcast %cst_499 : f32 to vector<1x128xf32>
    %1213 = arith.addf %1209, %1212 : vector<1x128xf32>
    %1214 = math.rsqrt %1213 : vector<1x128xf32>
    %1215 = vector.broadcast %1203 : f32 to vector<1x128xf32>
    %1216 = arith.mulf %1215, %1214 : vector<1x128xf32>
    %1217 = vector.broadcast %1216 : vector<1x128xf32> to vector<16x128xf32>
    %1218 = arith.mulf %1211, %1217 : vector<16x128xf32>
    %1219 = arith.addf %1202, %1218 : vector<16x128xf32>
    %c9_500 = arith.constant 9 : index
    %1220 = memref.load %arg0[%c9_500] : memref<10xf32, #tpu.memory_space<smem>>
    %1221 = vector.extract_strided_slice %1134 {offsets = [10, 0], sizes = [1, 128], strides = [1, 1]} : vector<16x128xf32> to vector<1x128xf32>
    %1222 = vector.extract_strided_slice %1134 {offsets = [11, 0], sizes = [1, 128], strides = [1, 1]} : vector<16x128xf32> to vector<1x128xf32>
    %1223 = arith.mulf %1221, %1221 : vector<1x128xf32>
    %1224 = arith.subf %1222, %1223 : vector<1x128xf32>
    %cst_501 = arith.constant 0.000000e+00 : f32
    %1225 = vector.broadcast %cst_501 : f32 to vector<1x128xf32>
    %1226 = arith.maximumf %1224, %1225 : vector<1x128xf32>
    %1227 = vector.broadcast %1221 : vector<1x128xf32> to vector<16x128xf32>
    %1228 = arith.subf %1100, %1227 : vector<16x128xf32>
    %cst_502 = arith.constant 9.99999974E-6 : f32
    %1229 = vector.broadcast %cst_502 : f32 to vector<1x128xf32>
    %1230 = arith.addf %1226, %1229 : vector<1x128xf32>
    %1231 = math.rsqrt %1230 : vector<1x128xf32>
    %1232 = vector.broadcast %1220 : f32 to vector<1x128xf32>
    %1233 = arith.mulf %1232, %1231 : vector<1x128xf32>
    %1234 = vector.broadcast %1233 : vector<1x128xf32> to vector<16x128xf32>
    %1235 = arith.mulf %1228, %1234 : vector<16x128xf32>
    %1236 = arith.addf %1219, %1235 : vector<16x128xf32>
    %c0_503 = arith.constant 0 : index
    %c0_504 = arith.constant 0 : index
    %1237 = vector.load %arg7[%c0_503, %c0_504] : memref<16x128xf32, #tpu.memory_space<vmem>>, vector<16x128xf32>
    tpu.vector_store %arg7[%c0_503, %c0_504], %1236 {strides = array<i32>} : memref<16x128xf32, #tpu.memory_space<vmem>>, vector<16x128xf32>,
    return
  }
}

</mosaic_0001>

<llo_original>
// kernel: mixed_op_forward.1
$region0: #{mixed_op_forward.1}
  #allocation0 [shape = 'u32[]', space=smem, size = 0x4, offset = 0x4, fixed_abs, tag = 'smem constant byte address 0x4 - core index']
  #allocation1 [shape = 'u32[144,128]{1,0:T(1,128)}', space=vmem, size = 0x12000, scoped, tag = 'internal scratch']
  %s0 = inlined_call_operand.vmem [shape: f32[10], index: 0, kind: input, shape index: {}]
  %s1 = inlined_call_operand.vmem [shape: f32[16,128], index: 1, kind: input, shape index: {}]
  %s2 = inlined_call_operand.vmem [shape: f32[1,128], index: 2, kind: input, shape index: {}]
  %s3 = inlined_call_operand.vmem [shape: f32[102,128], index: 3, kind: input, shape index: {}]
  %s4 = inlined_call_operand.vmem [shape: f32[28,128], index: 4, kind: input, shape index: {}]
  %s5 = inlined_call_operand.vmem [shape: f32[36,128], index: 5, kind: input, shape index: {}]
  %s6 = inlined_call_operand.vmem [shape: f32[128,128], index: 6, kind: input, shape index: {}]
  %s7 = inlined_call_operand.vmem [shape: f32[16,128], index: 7, kind: output, shape index: {}]
  %s8 = sld [smem:[#allocation0]]
  $region42: #{mixed_op_forward.1} parent=0
    _
  %s10 = ssub.s32 1, %s8
  %s11 = scalar_select 0, %s10, %s8
  $region1: #{mixed_op_forward.1} parent=0
    #allocation2 [shape = 'u8[512]{0}', space=smem, size = 0x200, scoped, tag = 'input window, operand 0, single buffered']
    #allocation3 [shape = 's32[1]{0}', space=sflag, size = 0x4, scoped, tag = 'scoped memory for mixed_op_forward.1']
    %12 = vsyncpa [#allocation3], 0
    // Predicated region
    $region2: #{mixed_op_forward.1} parent=1 // pred_check
      _
    $region3: #{mixed_op_forward.1} parent=1 // pred_check_branch
      %14 = sbr.rel (0) target = $region5
    $region4: #{mixed_op_forward.1} parent=1 // pred_region
      %s16 = ssub.s32 16, 16
      %17 = vsyncadd [#allocation3], %s16
      %s19 = sshll.u32 %s0, 4
      %s20 = int_to_ptr.vmem [resolvable:$true] %s19
      %22 = dma.vmem_to_smem %s20, 16, [#allocation2], [#allocation3]
    $region5: #{mixed_op_forward.1} parent=1 // pred_fallthru
      _
    // Predicated region
    $region6: #{mixed_op_forward.1} parent=1 // pred_check
      _
    $region7: #{mixed_op_forward.1} parent=1 // pred_check_branch
      %24 = sbr.rel (0) target = $region9
    $region8: #{mixed_op_forward.1} parent=1 // pred_region
      _
    $region9: #{mixed_op_forward.1} parent=1 // pred_fallthru
      _
    // Predicated region
    $region10: #{mixed_op_forward.1} parent=1 // pred_check
      _
    $region11: #{mixed_op_forward.1} parent=1 // pred_check_branch
      %26 = sbr.rel (0) target = $region13
    $region12: #{mixed_op_forward.1} parent=1 // pred_region
      _
    $region13: #{mixed_op_forward.1} parent=1 // pred_fallthru
      _
    // Predicated region
    $region14: #{mixed_op_forward.1} parent=1 // pred_check
      _
    $region15: #{mixed_op_forward.1} parent=1 // pred_check_branch
      %28 = sbr.rel (0) target = $region17
    $region16: #{mixed_op_forward.1} parent=1 // pred_region
      _
    $region17: #{mixed_op_forward.1} parent=1 // pred_fallthru
      _
    // Predicated region
    $region18: #{mixed_op_forward.1} parent=1 // pred_check
      _
    $region19: #{mixed_op_forward.1} parent=1 // pred_check_branch
      %30 = sbr.rel (0) target = $region21
    $region20: #{mixed_op_forward.1} parent=1 // pred_region
      _
    $region21: #{mixed_op_forward.1} parent=1 // pred_fallthru
      _
    // Predicated region
    $region22: #{mixed_op_forward.1} parent=1 // pred_check
      _
    $region23: #{mixed_op_forward.1} parent=1 // pred_check_branch
      %32 = sbr.rel (0) target = $region25
    $region24: #{mixed_op_forward.1} parent=1 // pred_region
      _
    $region25: #{mixed_op_forward.1} parent=1 // pred_fallthru
      _
    // Predicated region
    $region26: #{mixed_op_forward.1} parent=1 // pred_check
      _
    $region27: #{mixed_op_forward.1} parent=1 // pred_check_branch
      %34 = sbr.rel (0) target = $region29
    $region28: #{mixed_op_forward.1} parent=1 // pred_region
      _
    $region29: #{mixed_op_forward.1} parent=1 // pred_fallthru
      _
    // Predicated region
    $region30: #{mixed_op_forward.1} parent=1 // pred_check
      _
    $region31: #{mixed_op_forward.1} parent=1 // pred_check_branch
      %36 = sbr.rel (0) target = $region33
    $region32: #{mixed_op_forward.1} parent=1 // pred_region
      %37 = dma.done [#allocation3], 16
    $region33: #{mixed_op_forward.1} parent=1 // pred_fallthru
      _
    %38 = sfence
    %v39 = vld [vmem:[%s1] sm:$0xff]
    %v40 = vld [vmem:[%s1 + $0x8] sm:$0xff]
    %v41 = vmax.f32 %v39, 0.0
    %v42 = vmax.f32 %v40, 0.0
    %v43 = vld [vmem:[%s2] sm:$0x1]
    %v44 = vlaneseq
    %v45 = vshrl.u32 %v44, 7
    %v46 = vadd.s32 %v45, 8
    %s47 = sld [smem:[#allocation2 + $0x3]]
    %v48 = vstv %s47
    %v49 = vmul.f32 %v48, %v39
    %v50 = vmul.f32 %v48, %v40
    %v51 = vrot.slane %v39, 7
    %v52 = vrot.slane %v40, 7
    %vm53 = vcmp.lt.s32.totalorder %v45, 1
    %v54 = vsel %vm53, %v51, %v52
    %v55 = vsel %vm53, %v52, %v51
    %vm56 = vcmp.ge.s32.totalorder %v45, 1
    %vm57 = vcmp.ge.s32.totalorder %v46, 1
    %v58 = vsel %vm56, %v55, 0.0
    %v59 = vsel %vm57, %v54, 0.0
    %v60 = vsel %vm56, 1.0, 0.0
    %v61 = vsel %vm57, 1.0, 0.0
    %62 = vrot.lane.b32.xlu0 %v58, 1
    %v63 = vpop.permute.xlu0 %62
    %64 = vrot.lane.b32.xlu0 %v59, 1
    %v65 = vpop.permute.xlu0 %64
    %vm66 = vcmp.ge.f32.partialorder %v43, 1.0
    %v67 = vsel %vm66, 1.0, 0.0
    %v69 = vlaneseq
    %v70 = vshrl.u32 %v69, 7
    %v71 = vsub.s32 0, %v70
    %v72 = vrot.slane %v67, %v71
    %v74 = vmul.f32 %v60, %v72
    %v75 = vmul.f32 %v61, %v72
    %v76 = vsub.f32 %v74, 1.0
    %v77 = vsub.f32 %v75, 1.0
    %v78 = vmul.f32 %v76, 1e+30
    %v79 = vmul.f32 %v77, 1e+30
    %v80 = vadd.f32 %v63, %v78
    %v81 = vadd.f32 %v65, %v79
    %v82 = vmul.f32 %v63, %v74
    %v83 = vmul.f32 %v65, %v75
    %v84 = vsub.f32 %v60, 1.0
    %v85 = vsub.f32 %v61, 1.0
    %v86 = vmul.f32 %v84, 1e+30
    %v87 = vmul.f32 %v85, 1e+30
    %v88 = vadd.f32 %v58, %v86
    %v89 = vadd.f32 %v59, %v87
    %v90 = vmax.f32 %v80, %v88
    %v91 = vmax.f32 %v81, %v89
    %v92 = vmul.f32 %v58, %v60
    %v93 = vmul.f32 %v59, %v61
    %v94 = vadd.f32 %v82, %v92
    %v95 = vadd.f32 %v83, %v93
    %v96 = vadd.f32 %v74, %v60
    %v97 = vadd.f32 %v75, %v61
    %98 = vrot.lane.b32.xlu0 %v58, 127
    %v99 = vpop.permute.xlu0 %98
    %100 = vrot.lane.b32.xlu0 %v59, 127
    %v101 = vpop.permute.xlu0 %100
    %vm102 = vcmp.lt.f32.partialorder %v43, 15.0
    %v103 = vsel %vm102, 1.0, 0.0
    %v105 = vlaneseq
    %v106 = vshrl.u32 %v105, 7
    %v107 = vsub.s32 0, %v106
    %v108 = vrot.slane %v103, %v107
    %v110 = vmul.f32 %v60, %v108
    %v111 = vmul.f32 %v61, %v108
    %v112 = vsub.f32 %v110, 1.0
    %v113 = vsub.f32 %v111, 1.0
    %v114 = vmul.f32 %v112, 1e+30
    %v115 = vmul.f32 %v113, 1e+30
    %v116 = vadd.f32 %v99, %v114
    %v117 = vadd.f32 %v101, %v115
    %v118 = vmax.f32 %v90, %v116
    %v119 = vmax.f32 %v91, %v117
    %v120 = vmul.f32 %v99, %v110
    %v121 = vmul.f32 %v101, %v111
    %v122 = vadd.f32 %v94, %v120
    %v123 = vadd.f32 %v95, %v121
    %v124 = vadd.f32 %v96, %v110
    %v125 = vadd.f32 %v97, %v111
    %126 = vrot.lane.b32.xlu0 %v39, 1
    %v127 = vpop.permute.xlu0 %126
    %128 = vrot.lane.b32.xlu0 %v40, 1
    %v129 = vpop.permute.xlu0 %128
    %v130 = vsub.f32 %v67, 1.0
    %v131 = vmul.f32 %v130, 1e+30
    %v133 = vlaneseq
    %v134 = vshrl.u32 %v133, 7
    %v135 = vsub.s32 0, %v134
    %v136 = vrot.slane %v131, %v135
    %v138 = vadd.f32 %v127, %v136
    %v139 = vadd.f32 %v129, %v136
    %v140 = vmax.f32 %v118, %v138
    %v141 = vmax.f32 %v119, %v139
    %v142 = vmul.f32 %v127, %v72
    %v143 = vmul.f32 %v129, %v72
    %v144 = vadd.f32 %v122, %v142
    %v145 = vadd.f32 %v123, %v143
    %v146 = vadd.f32 %v124, %v72
    %v147 = vadd.f32 %v125, %v72
    %v148 = vmax.f32 %v140, %v39
    %v149 = vmax.f32 %v141, %v40
    %v150 = vadd.f32 %v144, %v39
    %v151 = vadd.f32 %v145, %v40
    %v152 = vadd.f32 %v146, 1.0
    %v153 = vadd.f32 %v147, 1.0
    %154 = vrot.lane.b32.xlu0 %v39, 127
    %v155 = vpop.permute.xlu0 %154
    %156 = vrot.lane.b32.xlu0 %v40, 127
    %v157 = vpop.permute.xlu0 %156
    %v158 = vsub.f32 %v103, 1.0
    %v159 = vmul.f32 %v158, 1e+30
    %v161 = vlaneseq
    %v162 = vshrl.u32 %v161, 7
    %v163 = vsub.s32 0, %v162
    %v164 = vrot.slane %v159, %v163
    %v166 = vadd.f32 %v155, %v164
    %v167 = vadd.f32 %v157, %v164
    %v168 = vmax.f32 %v148, %v166
    %v169 = vmax.f32 %v149, %v167
    %v170 = vmul.f32 %v155, %v108
    %v171 = vmul.f32 %v157, %v108
    %v172 = vadd.f32 %v150, %v170
    %v173 = vadd.f32 %v151, %v171
    %v174 = vadd.f32 %v152, %v108
    %v175 = vadd.f32 %v153, %v108
    %v176 = vrot.slane %v39, 1
    %v177 = vrot.slane %v40, 1
    %vm178 = vcmp.lt.s32.totalorder %v45, 7
    %v179 = vsel %vm178, %v176, %v177
    %v180 = vsel %vm178, %v177, %v176
    %vm181 = vcmp.lt.s32.totalorder %v45, 15
    %vm182 = vcmp.lt.s32.totalorder %v46, 15
    %v183 = vsel %vm181, %v179, 0.0
    %v184 = vsel %vm182, %v180, 0.0
    %v185 = vsel %vm181, 1.0, 0.0
    %v186 = vsel %vm182, 1.0, 0.0
    %187 = vrot.lane.b32.xlu0 %v183, 1
    %v188 = vpop.permute.xlu0 %187
    %189 = vrot.lane.b32.xlu0 %v184, 1
    %v190 = vpop.permute.xlu0 %189
    %v191 = vmul.f32 %v185, %v72
    %v192 = vmul.f32 %v186, %v72
    %v193 = vsub.f32 %v191, 1.0
    %v194 = vsub.f32 %v192, 1.0
    %v195 = vmul.f32 %v193, 1e+30
    %v196 = vmul.f32 %v194, 1e+30
    %v197 = vadd.f32 %v188, %v195
    %v198 = vadd.f32 %v190, %v196
    %v199 = vmax.f32 %v168, %v197
    %v200 = vmax.f32 %v169, %v198
    %v201 = vmul.f32 %v188, %v191
    %v202 = vmul.f32 %v190, %v192
    %v203 = vadd.f32 %v172, %v201
    %v204 = vadd.f32 %v173, %v202
    %v205 = vadd.f32 %v174, %v191
    %v206 = vadd.f32 %v175, %v192
    %v207 = vsub.f32 %v185, 1.0
    %v208 = vsub.f32 %v186, 1.0
    %v209 = vmul.f32 %v207, 1e+30
    %v210 = vmul.f32 %v208, 1e+30
    %v211 = vadd.f32 %v183, %v209
    %v212 = vadd.f32 %v184, %v210
    %v213 = vmax.f32 %v199, %v211
    %v214 = vmax.f32 %v200, %v212
    %v215 = vmul.f32 %v183, %v185
    %v216 = vmul.f32 %v184, %v186
    %v217 = vadd.f32 %v203, %v215
    %v218 = vadd.f32 %v204, %v216
    %v219 = vadd.f32 %v205, %v185
    %v220 = vadd.f32 %v206, %v186
    %221 = vrot.lane.b32.xlu0 %v183, 127
    %v222 = vpop.permute.xlu0 %221
    %223 = vrot.lane.b32.xlu0 %v184, 127
    %v224 = vpop.permute.xlu0 %223
    %v225 = vmul.f32 %v185, %v108
    %v226 = vmul.f32 %v186, %v108
    %v227 = vsub.f32 %v225, 1.0
    %v228 = vsub.f32 %v226, 1.0
    %v229 = vmul.f32 %v227, 1e+30
    %v230 = vmul.f32 %v228, 1e+30
    %v231 = vadd.f32 %v222, %v229
    %v232 = vadd.f32 %v224, %v230
    %v233 = vmax.f32 %v213, %v231
    %v234 = vmax.f32 %v214, %v232
    %v235 = vmul.f32 %v222, %v225
    %v236 = vmul.f32 %v224, %v226
    %v237 = vadd.f32 %v217, %v235
    %v238 = vadd.f32 %v218, %v236
    %v239 = vadd.f32 %v219, %v225
    %v240 = vadd.f32 %v220, %v226
    %v241 = vrcp.pop %v239
    %v242 = vmul.f32 %v237, %v241
    %v243 = vrcp.pop %v240
    %v244 = vmul.f32 %v238, %v243
    %v245 = vrot.slane %v41, 7
    %v246 = vrot.slane %v42, 7
    %v247 = vsel %vm53, %v245, %v246
    %v248 = vsel %vm53, %v246, %v245
    %v249 = vsel %vm56, %v248, 0.0
    %v250 = vsel %vm57, %v247, 0.0
    %v251 = vld [vmem:[%s3] sm:$0x1]
    %252 = vrot.lane.b32.xlu0 %v249, 1
    %v253 = vpop.permute.xlu0 %252
    %254 = vrot.lane.b32.xlu0 %v250, 1
    %v255 = vpop.permute.xlu0 %254
    %v256 = vlaneseq
    %v257 = vshrl.u32 %v256, 7
    %v258 = vsub.s32 0, %v257
    %v259 = vrot.slane %v251, %v258
    %v260 = vmul.f32 %v259, %v253
    %v261 = vmul.f32 %v259, %v255
    %v262 = vld [vmem:[%s3 + $0x1] sm:$0x1]
    %v263 = vlaneseq
    %v264 = vshrl.u32 %v263, 7
    %v265 = vsub.s32 0, %v264
    %v266 = vrot.slane %v262, %v265
    %v267 = vmul.f32 %v266, %v249
    %v268 = vmul.f32 %v266, %v250
    %v269 = vadd.f32 %v260, %v267
    %v270 = vadd.f32 %v261, %v268
    %v271 = vld [vmem:[%s3 + $0x2] sm:$0x1]
    %272 = vrot.lane.b32.xlu0 %v249, 127
    %v273 = vpop.permute.xlu0 %272
    %274 = vrot.lane.b32.xlu0 %v250, 127
    %v275 = vpop.permute.xlu0 %274
    %v276 = vlaneseq
    %v277 = vshrl.u32 %v276, 7
    %v278 = vsub.s32 0, %v277
    %v279 = vrot.slane %v271, %v278
    %v280 = vmul.f32 %v279, %v273
    %v281 = vmul.f32 %v279, %v275
    %v282 = vadd.f32 %v269, %v280
    %v283 = vadd.f32 %v270, %v281
    %v284 = vld [vmem:[%s3 + $0x3] sm:$0x1]
    %285 = vrot.lane.b32.xlu0 %v41, 1
    %v286 = vpop.permute.xlu0 %285
    %287 = vrot.lane.b32.xlu0 %v42, 1
    %v288 = vpop.permute.xlu0 %287
    %v289 = vlaneseq
    %v290 = vshrl.u32 %v289, 7
    %v291 = vsub.s32 0, %v290
    %v292 = vrot.slane %v284, %v291
    %v293 = vmul.f32 %v292, %v286
    %v294 = vmul.f32 %v292, %v288
    %v295 = vadd.f32 %v282, %v293
    %v296 = vadd.f32 %v283, %v294
    %v297 = vld [vmem:[%s3 + $0x4] sm:$0x1]
    %v298 = vlaneseq
    %v299 = vshrl.u32 %v298, 7
    %v300 = vsub.s32 0, %v299
    %v301 = vrot.slane %v297, %v300
    %v302 = vmul.f32 %v301, %v41
    %v303 = vmul.f32 %v301, %v42
    %v304 = vadd.f32 %v295, %v302
    %v305 = vadd.f32 %v296, %v303
    %v306 = vld [vmem:[%s3 + $0x5] sm:$0x1]
    %307 = vrot.lane.b32.xlu0 %v41, 127
    %v308 = vpop.permute.xlu0 %307
    %309 = vrot.lane.b32.xlu0 %v42, 127
    %v310 = vpop.permute.xlu0 %309
    %v311 = vlaneseq
    %v312 = vshrl.u32 %v311, 7
    %v313 = vsub.s32 0, %v312
    %v314 = vrot.slane %v306, %v313
    %v315 = vmul.f32 %v314, %v308
    %v316 = vmul.f32 %v314, %v310
    %v317 = vadd.f32 %v304, %v315
    %v318 = vadd.f32 %v305, %v316
    %v319 = vrot.slane %v41, 1
    %v320 = vrot.slane %v42, 1
    %v321 = vsel %vm178, %v319, %v320
    %v322 = vsel %vm178, %v320, %v319
    %v323 = vsel %vm181, %v321, 0.0
    %v324 = vsel %vm182, %v322, 0.0
    %v325 = vld [vmem:[%s3 + $0x6] sm:$0x1]
    %326 = vrot.lane.b32.xlu0 %v323, 1
    %v327 = vpop.permute.xlu0 %326
    %328 = vrot.lane.b32.xlu0 %v324, 1
    %v329 = vpop.permute.xlu0 %328
    %v330 = vlaneseq
    %v331 = vshrl.u32 %v330, 7
    %v332 = vsub.s32 0, %v331
    %v333 = vrot.slane %v325, %v332
    %v334 = vmul.f32 %v333, %v327
    %v335 = vmul.f32 %v333, %v329
    %v336 = vadd.f32 %v317, %v334
    %v337 = vadd.f32 %v318, %v335
    %v338 = vld [vmem:[%s3 + $0x7] sm:$0x1]
    %v339 = vlaneseq
    %v340 = vshrl.u32 %v339, 7
    %v341 = vsub.s32 0, %v340
    %v342 = vrot.slane %v338, %v341
    %v343 = vmul.f32 %v342, %v323
    %v344 = vmul.f32 %v342, %v324
    %v345 = vadd.f32 %v336, %v343
    %v346 = vadd.f32 %v337, %v344
    %v347 = vld [vmem:[%s3 + $0x8] sm:$0x1]
    %348 = vrot.lane.b32.xlu0 %v323, 127
    %v349 = vpop.permute.xlu0 %348
    %350 = vrot.lane.b32.xlu0 %v324, 127
    %v351 = vpop.permute.xlu0 %350
    %v352 = vlaneseq
    %v353 = vshrl.u32 %v352, 7
    %v354 = vsub.s32 0, %v353
    %v355 = vrot.slane %v347, %v354
    %v356 = vmul.f32 %v355, %v349
    %v357 = vmul.f32 %v355, %v351
    %v358 = vadd.f32 %v345, %v356
    %v359 = vadd.f32 %v346, %v357
    %v360 = vld [vmem:[%s4] sm:$0x1]
    %v361 = vlaneseq
    %v362 = vshrl.u32 %v361, 7
    %v363 = vsub.s32 0, %v362
    %v364 = vrot.slane %v360, %v363
    %v365 = vmul.f32 %v364, %v358
    %v366 = vmul.f32 %v364, %v359
    %367 = vrot.lane.b32.xlu0 %v358, 32
    %v368 = vpop.permute.xlu0 %367
    %369 = vrot.lane.b32.xlu0 %v359, 32
    %v370 = vpop.permute.xlu0 %369
    %v371 = vld [vmem:[%s4 + $0x1] sm:$0x1]
    %v372 = vlaneseq
    %v373 = vshrl.u32 %v372, 7
    %v374 = vsub.s32 0, %v373
    %v375 = vrot.slane %v371, %v374
    %v376 = vmul.f32 %v375, %v368
    %v377 = vmul.f32 %v375, %v370
    %v378 = vadd.f32 %v365, %v376
    %v379 = vadd.f32 %v366, %v377
    %380 = vrot.lane.b32.xlu0 %v358, 64
    %v381 = vpop.permute.xlu0 %380
    %382 = vrot.lane.b32.xlu0 %v359, 64
    %v383 = vpop.permute.xlu0 %382
    %v384 = vld [vmem:[%s4 + $0x2] sm:$0x1]
    %v385 = vlaneseq
    %v386 = vshrl.u32 %v385, 7
    %v387 = vsub.s32 0, %v386
    %v388 = vrot.slane %v384, %v387
    %v389 = vmul.f32 %v388, %v381
    %v390 = vmul.f32 %v388, %v383
    %v391 = vadd.f32 %v378, %v389
    %v392 = vadd.f32 %v379, %v390
    %393 = vrot.lane.b32.xlu0 %v358, 96
    %v394 = vpop.permute.xlu0 %393
    %395 = vrot.lane.b32.xlu0 %v359, 96
    %v396 = vpop.permute.xlu0 %395
    %v397 = vld [vmem:[%s4 + $0x3] sm:$0x1]
    %v398 = vlaneseq
    %v399 = vshrl.u32 %v398, 7
    %v400 = vsub.s32 0, %v399
    %v401 = vrot.slane %v397, %v400
    %v402 = vmul.f32 %v401, %v394
    %v403 = vmul.f32 %v401, %v396
    %v404 = vadd.f32 %v391, %v402
    %v405 = vadd.f32 %v392, %v403
    %v406 = vrot.slane %v41, 6
    %v407 = vrot.slane %v42, 6
    %vm408 = vcmp.lt.s32.totalorder %v45, 2
    %v409 = vsel %vm408, %v406, %v407
    %v410 = vsel %vm408, %v407, %v406
    %vm411 = vcmp.ge.s32.totalorder %v45, 2
    %vm412 = vcmp.ge.s32.totalorder %v46, 2
    %v413 = vsel %vm411, %v410, 0.0
    %v414 = vsel %vm412, %v409, 0.0
    %v415 = vld [vmem:[%s3 + $0x12] sm:$0x1]
    %416 = vrot.lane.b32.xlu0 %v413, 2
    %v417 = vpop.permute.xlu0 %416
    %418 = vrot.lane.b32.xlu0 %v414, 2
    %v419 = vpop.permute.xlu0 %418
    %v420 = vlaneseq
    %v421 = vshrl.u32 %v420, 7
    %v422 = vsub.s32 0, %v421
    %v423 = vrot.slane %v415, %v422
    %v424 = vmul.f32 %v423, %v417
    %v425 = vmul.f32 %v423, %v419
    %v426 = vld [vmem:[%s3 + $0x13] sm:$0x1]
    %427 = vrot.lane.b32.xlu0 %v413, 1
    %v428 = vpop.permute.xlu0 %427
    %429 = vrot.lane.b32.xlu0 %v414, 1
    %v430 = vpop.permute.xlu0 %429
    %v431 = vlaneseq
    %v432 = vshrl.u32 %v431, 7
    %v433 = vsub.s32 0, %v432
    %v434 = vrot.slane %v426, %v433
    %v435 = vmul.f32 %v434, %v428
    %v436 = vmul.f32 %v434, %v430
    %v437 = vadd.f32 %v424, %v435
    %v438 = vadd.f32 %v425, %v436
    %v439 = vld [vmem:[%s3 + $0x14] sm:$0x1]
    %v440 = vlaneseq
    %v441 = vshrl.u32 %v440, 7
    %v442 = vsub.s32 0, %v441
    %v443 = vrot.slane %v439, %v442
    %v444 = vmul.f32 %v443, %v413
    %v445 = vmul.f32 %v443, %v414
    %v446 = vadd.f32 %v437, %v444
    %v447 = vadd.f32 %v438, %v445
    %v448 = vld [vmem:[%s3 + $0x15] sm:$0x1]
    %449 = vrot.lane.b32.xlu0 %v413, 127
    %v450 = vpop.permute.xlu0 %449
    %451 = vrot.lane.b32.xlu0 %v414, 127
    %v452 = vpop.permute.xlu0 %451
    %v453 = vlaneseq
    %v454 = vshrl.u32 %v453, 7
    %v455 = vsub.s32 0, %v454
    %v456 = vrot.slane %v448, %v455
    %v457 = vmul.f32 %v456, %v450
    %v458 = vmul.f32 %v456, %v452
    %v459 = vadd.f32 %v446, %v457
    %v460 = vadd.f32 %v447, %v458
    %v461 = vld [vmem:[%s3 + $0x16] sm:$0x1]
    %462 = vrot.lane.b32.xlu0 %v413, 126
    %v463 = vpop.permute.xlu0 %462
    %464 = vrot.lane.b32.xlu0 %v414, 126
    %v465 = vpop.permute.xlu0 %464
    %v466 = vlaneseq
    %v467 = vshrl.u32 %v466, 7
    %v468 = vsub.s32 0, %v467
    %v469 = vrot.slane %v461, %v468
    %v470 = vmul.f32 %v469, %v463
    %v471 = vmul.f32 %v469, %v465
    %v472 = vadd.f32 %v459, %v470
    %v473 = vadd.f32 %v460, %v471
    %v474 = vld [vmem:[%s3 + $0x17] sm:$0x1]
    %475 = vrot.lane.b32.xlu0 %v249, 2
    %v476 = vpop.permute.xlu0 %475
    %477 = vrot.lane.b32.xlu0 %v250, 2
    %v478 = vpop.permute.xlu0 %477
    %v479 = vlaneseq
    %v480 = vshrl.u32 %v479, 7
    %v481 = vsub.s32 0, %v480
    %v482 = vrot.slane %v474, %v481
    %v483 = vmul.f32 %v482, %v476
    %v484 = vmul.f32 %v482, %v478
    %v485 = vadd.f32 %v472, %v483
    %v486 = vadd.f32 %v473, %v484
    %v487 = vld [vmem:[%s3 + $0x18] sm:$0x1]
    %v488 = vlaneseq
    %v489 = vshrl.u32 %v488, 7
    %v490 = vsub.s32 0, %v489
    %v491 = vrot.slane %v487, %v490
    %v492 = vmul.f32 %v491, %v253
    %v493 = vmul.f32 %v491, %v255
    %v494 = vadd.f32 %v485, %v492
    %v495 = vadd.f32 %v486, %v493
    %v496 = vld [vmem:[%s3 + $0x19] sm:$0x1]
    %v497 = vlaneseq
    %v498 = vshrl.u32 %v497, 7
    %v499 = vsub.s32 0, %v498
    %v500 = vrot.slane %v496, %v499
    %v501 = vmul.f32 %v500, %v249
    %v502 = vmul.f32 %v500, %v250
    %v503 = vadd.f32 %v494, %v501
    %v504 = vadd.f32 %v495, %v502
    %v505 = vld [vmem:[%s3 + $0x1a] sm:$0x1]
    %v506 = vlaneseq
    %v507 = vshrl.u32 %v506, 7
    %v508 = vsub.s32 0, %v507
    %v509 = vrot.slane %v505, %v508
    %v510 = vmul.f32 %v509, %v273
    %v511 = vmul.f32 %v509, %v275
    %v512 = vadd.f32 %v503, %v510
    %v513 = vadd.f32 %v504, %v511
    %v514 = vld [vmem:[%s3 + $0x1b] sm:$0x1]
    %515 = vrot.lane.b32.xlu0 %v249, 126
    %v516 = vpop.permute.xlu0 %515
    %517 = vrot.lane.b32.xlu0 %v250, 126
    %v518 = vpop.permute.xlu0 %517
    %v519 = vlaneseq
    %v520 = vshrl.u32 %v519, 7
    %v521 = vsub.s32 0, %v520
    %v522 = vrot.slane %v514, %v521
    %v523 = vmul.f32 %v522, %v516
    %v524 = vmul.f32 %v522, %v518
    %v525 = vadd.f32 %v512, %v523
    %v526 = vadd.f32 %v513, %v524
    %v527 = vld [vmem:[%s3 + $0x1c] sm:$0x1]
    %528 = vrot.lane.b32.xlu0 %v41, 2
    %v529 = vpop.permute.xlu0 %528
    %530 = vrot.lane.b32.xlu0 %v42, 2
    %v531 = vpop.permute.xlu0 %530
    %v532 = vlaneseq
    %v533 = vshrl.u32 %v532, 7
    %v534 = vsub.s32 0, %v533
    %v535 = vrot.slane %v527, %v534
    %v536 = vmul.f32 %v535, %v529
    %v537 = vmul.f32 %v535, %v531
    %v538 = vadd.f32 %v525, %v536
    %v539 = vadd.f32 %v526, %v537
    %v540 = vld [vmem:[%s3 + $0x1d] sm:$0x1]
    %v541 = vlaneseq
    %v542 = vshrl.u32 %v541, 7
    %v543 = vsub.s32 0, %v542
    %v544 = vrot.slane %v540, %v543
    %v545 = vmul.f32 %v544, %v286
    %v546 = vmul.f32 %v544, %v288
    %v547 = vadd.f32 %v538, %v545
    %v548 = vadd.f32 %v539, %v546
    %v549 = vld [vmem:[%s3 + $0x1e] sm:$0x1]
    %v550 = vlaneseq
    %v551 = vshrl.u32 %v550, 7
    %v552 = vsub.s32 0, %v551
    %v553 = vrot.slane %v549, %v552
    %v554 = vmul.f32 %v553, %v41
    %v555 = vmul.f32 %v553, %v42
    %v556 = vadd.f32 %v547, %v554
    %v557 = vadd.f32 %v548, %v555
    %v558 = vld [vmem:[%s3 + $0x1f] sm:$0x1]
    %v559 = vlaneseq
    %v560 = vshrl.u32 %v559, 7
    %v561 = vsub.s32 0, %v560
    %v562 = vrot.slane %v558, %v561
    %v563 = vmul.f32 %v562, %v308
    %v564 = vmul.f32 %v562, %v310
    %v565 = vadd.f32 %v556, %v563
    %v566 = vadd.f32 %v557, %v564
    %v567 = vld [vmem:[%s3 + $0x20] sm:$0x1]
    %568 = vrot.lane.b32.xlu0 %v41, 126
    %v569 = vpop.permute.xlu0 %568
    %570 = vrot.lane.b32.xlu0 %v42, 126
    %v571 = vpop.permute.xlu0 %570
    %v572 = vlaneseq
    %v573 = vshrl.u32 %v572, 7
    %v574 = vsub.s32 0, %v573
    %v575 = vrot.slane %v567, %v574
    %v576 = vmul.f32 %v575, %v569
    %v577 = vmul.f32 %v575, %v571
    %v578 = vadd.f32 %v565, %v576
    %v579 = vadd.f32 %v566, %v577
    %v580 = vld [vmem:[%s3 + $0x21] sm:$0x1]
    %581 = vrot.lane.b32.xlu0 %v323, 2
    %v582 = vpop.permute.xlu0 %581
    %583 = vrot.lane.b32.xlu0 %v324, 2
    %v584 = vpop.permute.xlu0 %583
    %v585 = vlaneseq
    %v586 = vshrl.u32 %v585, 7
    %v587 = vsub.s32 0, %v586
    %v588 = vrot.slane %v580, %v587
    %v589 = vmul.f32 %v588, %v582
    %v590 = vmul.f32 %v588, %v584
    %v591 = vadd.f32 %v578, %v589
    %v592 = vadd.f32 %v579, %v590
    %v593 = vld [vmem:[%s3 + $0x22] sm:$0x1]
    %v594 = vlaneseq
    %v595 = vshrl.u32 %v594, 7
    %v596 = vsub.s32 0, %v595
    %v597 = vrot.slane %v593, %v596
    %v598 = vmul.f32 %v597, %v327
    %v599 = vmul.f32 %v597, %v329
    %v600 = vadd.f32 %v591, %v598
    %v601 = vadd.f32 %v592, %v599
    %v602 = vld [vmem:[%s3 + $0x23] sm:$0x1]
    %v603 = vlaneseq
    %v604 = vshrl.u32 %v603, 7
    %v605 = vsub.s32 0, %v604
    %v606 = vrot.slane %v602, %v605
    %v607 = vmul.f32 %v606, %v323
    %v608 = vmul.f32 %v606, %v324
    %v609 = vadd.f32 %v600, %v607
    %v610 = vadd.f32 %v601, %v608
    %v611 = vld [vmem:[%s3 + $0x24] sm:$0x1]
    %v612 = vlaneseq
    %v613 = vshrl.u32 %v612, 7
    %v614 = vsub.s32 0, %v613
    %v615 = vrot.slane %v611, %v614
    %v616 = vmul.f32 %v615, %v349
    %v617 = vmul.f32 %v615, %v351
    %v618 = vadd.f32 %v609, %v616
    %v619 = vadd.f32 %v610, %v617
    %v620 = vld [vmem:[%s3 + $0x25] sm:$0x1]
    %621 = vrot.lane.b32.xlu0 %v323, 126
    %v622 = vpop.permute.xlu0 %621
    %623 = vrot.lane.b32.xlu0 %v324, 126
    %v624 = vpop.permute.xlu0 %623
    %v625 = vlaneseq
    %v626 = vshrl.u32 %v625, 7
    %v627 = vsub.s32 0, %v626
    %v628 = vrot.slane %v620, %v627
    %v629 = vmul.f32 %v628, %v622
    %v630 = vmul.f32 %v628, %v624
    %v631 = vadd.f32 %v618, %v629
    %v632 = vadd.f32 %v619, %v630
    %v633 = vrot.slane %v41, 2
    %v634 = vrot.slane %v42, 2
    %vm635 = vcmp.lt.s32.totalorder %v45, 6
    %v636 = vsel %vm635, %v633, %v634
    %v637 = vsel %vm635, %v634, %v633
    %vm638 = vcmp.lt.s32.totalorder %v45, 14
    %vm639 = vcmp.lt.s32.totalorder %v46, 14
    %v640 = vsel %vm638, %v636, 0.0
    %v641 = vsel %vm639, %v637, 0.0
    %v642 = vld [vmem:[%s3 + $0x26] sm:$0x1]
    %643 = vrot.lane.b32.xlu0 %v640, 2
    %v644 = vpop.permute.xlu0 %643
    %645 = vrot.lane.b32.xlu0 %v641, 2
    %v646 = vpop.permute.xlu0 %645
    %v647 = vlaneseq
    %v648 = vshrl.u32 %v647, 7
    %v649 = vsub.s32 0, %v648
    %v650 = vrot.slane %v642, %v649
    %v651 = vmul.f32 %v650, %v644
    %v652 = vmul.f32 %v650, %v646
    %v653 = vadd.f32 %v631, %v651
    %v654 = vadd.f32 %v632, %v652
    %v655 = vld [vmem:[%s3 + $0x27] sm:$0x1]
    %656 = vrot.lane.b32.xlu0 %v640, 1
    %v657 = vpop.permute.xlu0 %656
    %658 = vrot.lane.b32.xlu0 %v641, 1
    %v659 = vpop.permute.xlu0 %658
    %v660 = vlaneseq
    %v661 = vshrl.u32 %v660, 7
    %v662 = vsub.s32 0, %v661
    %v663 = vrot.slane %v655, %v662
    %v664 = vmul.f32 %v663, %v657
    %v665 = vmul.f32 %v663, %v659
    %v666 = vadd.f32 %v653, %v664
    %v667 = vadd.f32 %v654, %v665
    %v668 = vld [vmem:[%s3 + $0x28] sm:$0x1]
    %v669 = vlaneseq
    %v670 = vshrl.u32 %v669, 7
    %v671 = vsub.s32 0, %v670
    %v672 = vrot.slane %v668, %v671
    %v673 = vmul.f32 %v672, %v640
    %v674 = vmul.f32 %v672, %v641
    %v675 = vadd.f32 %v666, %v673
    %v676 = vadd.f32 %v667, %v674
    %v677 = vld [vmem:[%s3 + $0x29] sm:$0x1]
    %678 = vrot.lane.b32.xlu0 %v640, 127
    %v679 = vpop.permute.xlu0 %678
    %680 = vrot.lane.b32.xlu0 %v641, 127
    %v681 = vpop.permute.xlu0 %680
    %v682 = vlaneseq
    %v683 = vshrl.u32 %v682, 7
    %v684 = vsub.s32 0, %v683
    %v685 = vrot.slane %v677, %v684
    %v686 = vmul.f32 %v685, %v679
    %v687 = vmul.f32 %v685, %v681
    %v688 = vadd.f32 %v675, %v686
    %v689 = vadd.f32 %v676, %v687
    %v690 = vld [vmem:[%s3 + $0x2a] sm:$0x1]
    %691 = vrot.lane.b32.xlu0 %v640, 126
    %v692 = vpop.permute.xlu0 %691
    %693 = vrot.lane.b32.xlu0 %v641, 126
    %v694 = vpop.permute.xlu0 %693
    %v695 = vlaneseq
    %v696 = vshrl.u32 %v695, 7
    %v697 = vsub.s32 0, %v696
    %v698 = vrot.slane %v690, %v697
    %v699 = vmul.f32 %v698, %v692
    %v700 = vmul.f32 %v698, %v694
    %v701 = vadd.f32 %v688, %v699
    %v702 = vadd.f32 %v689, %v700
    %v703 = vld [vmem:[%s4 + $0x8] sm:$0x1]
    %v704 = vlaneseq
    %v705 = vshrl.u32 %v704, 7
    %v706 = vsub.s32 0, %v705
    %v707 = vrot.slane %v703, %v706
    %v708 = vmul.f32 %v707, %v701
    %v709 = vmul.f32 %v707, %v702
    %710 = vrot.lane.b32.xlu0 %v701, 32
    %v711 = vpop.permute.xlu0 %710
    %712 = vrot.lane.b32.xlu0 %v702, 32
    %v713 = vpop.permute.xlu0 %712
    %v714 = vld [vmem:[%s4 + $0x9] sm:$0x1]
    %v715 = vlaneseq
    %v716 = vshrl.u32 %v715, 7
    %v717 = vsub.s32 0, %v716
    %v718 = vrot.slane %v714, %v717
    %v719 = vmul.f32 %v718, %v711
    %v720 = vmul.f32 %v718, %v713
    %v721 = vadd.f32 %v708, %v719
    %v722 = vadd.f32 %v709, %v720
    %723 = vrot.lane.b32.xlu0 %v701, 64
    %v724 = vpop.permute.xlu0 %723
    %725 = vrot.lane.b32.xlu0 %v702, 64
    %v726 = vpop.permute.xlu0 %725
    %v727 = vld [vmem:[%s4 + $0xa] sm:$0x1]
    %v728 = vlaneseq
    %v729 = vshrl.u32 %v728, 7
    %v730 = vsub.s32 0, %v729
    %v731 = vrot.slane %v727, %v730
    %v732 = vmul.f32 %v731, %v724
    %v733 = vmul.f32 %v731, %v726
    %v734 = vadd.f32 %v721, %v732
    %v735 = vadd.f32 %v722, %v733
    %736 = vrot.lane.b32.xlu0 %v701, 96
    %v737 = vpop.permute.xlu0 %736
    %738 = vrot.lane.b32.xlu0 %v702, 96
    %v739 = vpop.permute.xlu0 %738
    %v740 = vld [vmem:[%s4 + $0xb] sm:$0x1]
    %v741 = vlaneseq
    %v742 = vshrl.u32 %v741, 7
    %v743 = vsub.s32 0, %v742
    %v744 = vrot.slane %v740, %v743
    %v745 = vmul.f32 %v744, %v737
    %v746 = vmul.f32 %v744, %v739
    %v747 = vadd.f32 %v734, %v745
    %v748 = vadd.f32 %v735, %v746
    %v749 = vadd.f32 %v233, %v234
    %v750 = vrot.slane %v749, 4
    %v751 = vadd.f32 %v749, %v750
    %v752 = vrot.slane %v751, 2
    %v753 = vadd.f32 %v751, %v752
    %v754 = vrot.slane %v753, 1
    %v755 = vadd.f32 %v753, %v754
    %v756 = vmul.f32 %v233, %v233
    %v757 = vmul.f32 %v234, %v234
    %v758 = vadd.f32 %v756, %v757
    %v759 = vrot.slane %v758, 4
    %v760 = vadd.f32 %v758, %v759
    %v761 = vrot.slane %v760, 2
    %v762 = vadd.f32 %v760, %v761
    %v763 = vrot.slane %v762, 1
    %v764 = vadd.f32 %v762, %v763
    %v765 = vadd.f32 %v242, %v244
    %v766 = vrot.slane %v765, 4
    %v767 = vadd.f32 %v765, %v766
    %v768 = vrot.slane %v767, 2
    %v769 = vadd.f32 %v767, %v768
    %v770 = vrot.slane %v769, 1
    %v771 = vadd.f32 %v769, %v770
    %v772 = vmul.f32 %v242, %v242
    %v773 = vmul.f32 %v244, %v244
    %v774 = vadd.f32 %v772, %v773
    %v775 = vrot.slane %v774, 4
    %v776 = vadd.f32 %v774, %v775
    %v777 = vrot.slane %v776, 2
    %v778 = vadd.f32 %v776, %v777
    %v779 = vrot.slane %v778, 1
    %v780 = vadd.f32 %v778, %v779
    %v781 = vadd.f32 %v404, %v405
    %v782 = vrot.slane %v781, 4
    %v783 = vadd.f32 %v781, %v782
    %v784 = vrot.slane %v783, 2
    %v785 = vadd.f32 %v783, %v784
    %v786 = vrot.slane %v785, 1
    %v787 = vadd.f32 %v785, %v786
    %v788 = vmul.f32 %v404, %v404
    %v789 = vmul.f32 %v405, %v405
    %v790 = vadd.f32 %v788, %v789
    %v791 = vrot.slane %v790, 4
    %v792 = vadd.f32 %v790, %v791
    %v793 = vrot.slane %v792, 2
    %v794 = vadd.f32 %v792, %v793
    %v795 = vrot.slane %v794, 1
    %v796 = vadd.f32 %v794, %v795
    %v797 = vadd.f32 %v747, %v748
    %v798 = vrot.slane %v797, 4
    %v799 = vadd.f32 %v797, %v798
    %v800 = vrot.slane %v799, 2
    %v801 = vadd.f32 %v799, %v800
    %v802 = vrot.slane %v801, 1
    %v803 = vadd.f32 %v801, %v802
    %v804 = vmul.f32 %v747, %v747
    %v805 = vmul.f32 %v748, %v748
    %v806 = vadd.f32 %v804, %v805
    %v807 = vrot.slane %v806, 4
    %v808 = vadd.f32 %v806, %v807
    %v809 = vrot.slane %v808, 2
    %v810 = vadd.f32 %v808, %v809
    %v811 = vrot.slane %v810, 1
    %v812 = vadd.f32 %v810, %v811
    %vm813 = vcmask 1040384
    %v814 = vsel %vm813, %v755, %v764
    %vm815 = vcmask 1041408
    %v816 = vsel %vm815, %v814, %v771
    %vm817 = vcmask 1042432
    %v818 = vsel %vm817, %v816, %v780
    %vm819 = vcmask 1043456
    %v820 = vsel %vm819, %v818, %v787
    %vm821 = vcmask 1044480
    %v822 = vsel %vm821, %v820, %v796
    %vm823 = vcmask 1045504
    %v824 = vsel %vm823, %v822, %v803
    %vm825 = vcmask 1046528
    %v826 = vsel %vm825, %v824, %v812
    %v827 = vld [vmem:[%s6] sm:$0xff]
    %v828 = vld [vmem:[%s6 + $0x8] sm:$0xff]
    %v829 = vld [vmem:[%s6 + $0x10] sm:$0xff]
    %v830 = vld [vmem:[%s6 + $0x18] sm:$0xff]
    %v831 = vld [vmem:[%s6 + $0x20] sm:$0xff]
    %v832 = vld [vmem:[%s6 + $0x28] sm:$0xff]
    %v833 = vld [vmem:[%s6 + $0x30] sm:$0xff]
    %v834 = vld [vmem:[%s6 + $0x38] sm:$0xff]
    %v835 = vld [vmem:[%s6 + $0x40] sm:$0xff]
    %v836 = vld [vmem:[%s6 + $0x48] sm:$0xff]
    %v837 = vld [vmem:[%s6 + $0x50] sm:$0xff]
    %v838 = vld [vmem:[%s6 + $0x58] sm:$0xff]
    %v839 = vld [vmem:[%s6 + $0x60] sm:$0xff]
    %v840 = vld [vmem:[%s6 + $0x68] sm:$0xff]
    %v841 = vld [vmem:[%s6 + $0x70] sm:$0xff]
    %v842 = vld [vmem:[%s6 + $0x78] sm:$0xff]
    %843 = vmatprep.subr.mxu0 0.0
    %844 = vmatpush1.msra.mxu0 %v827
    %845 = vmatprep.subr.mxu0 0.0
    %846 = vmatpush1.msra.mxu0 %v828
    %847 = vmatprep.subr.mxu0 0.0
    %848 = vmatpush1.msra.mxu0 %v829
    %849 = vmatprep.subr.mxu0 0.0
    %850 = vmatpush1.msra.mxu0 %v830
    %851 = vmatprep.subr.mxu0 0.0
    %852 = vmatpush1.msra.mxu0 %v831
    %853 = vmatprep.subr.mxu0 0.0
    %854 = vmatpush1.msra.mxu0 %v832
    %855 = vmatprep.subr.mxu0 0.0
    %856 = vmatpush1.msra.mxu0 %v833
    %857 = vmatprep.subr.mxu0 0.0
    %858 = vmatpush1.msra.mxu0 %v834
    %859 = vmatprep.subr.mxu0 0.0
    %860 = vmatpush1.msra.mxu0 %v835
    %861 = vmatprep.subr.mxu0 0.0
    %862 = vmatpush1.msra.mxu0 %v836
    %863 = vmatprep.subr.mxu0 0.0
    %864 = vmatpush1.msra.mxu0 %v837
    %865 = vmatprep.subr.mxu0 0.0
    %866 = vmatpush1.msra.mxu0 %v838
    %867 = vmatprep.subr.mxu0 0.0
    %868 = vmatpush1.msra.mxu0 %v839
    %869 = vmatprep.subr.mxu0 0.0
    %870 = vmatpush1.msra.mxu0 %v840
    %871 = vmatprep.subr.mxu0 0.0
    %872 = vmatpush1.msra.mxu0 %v841
    %873 = vmatprep.subr.mxu0 0.0
    %874 = vmatpush1.msra.mxu0 %v842
    %875 = vmatprep.subr.mxu0 0.0
    %876 = vmatpush1.msra.mxu0 0.0
    %877 = vmatprep.subr.mxu0 0.0
    %878 = vmatpush1.msra.mxu0 0.0
    %879 = vmatprep.subr.mxu0 0.0
    %880 = vmatpush1.msra.mxu0 0.0
    %881 = vmatprep.subr.mxu0 0.0
    %882 = vmatpush1.msra.mxu0 0.0
    %883 = vmatprep.subr.mxu0 0.0
    %884 = vmatpush1.msra.mxu0 0.0
    %885 = vmatprep.subr.mxu0 0.0
    %886 = vmatpush1.msra.mxu0 0.0
    %887 = vmatprep.subr.mxu0 0.0
    %888 = vmatpush1.msra.mxu0 0.0
    %889 = vmatprep.subr.mxu0 0.0
    %890 = vmatpush1.msra.mxu0 0.0
    %891 = vmatprep.subr.mxu0 0.0
    %892 = vmatpush1.msra.mxu0 0.0
    %893 = vmatprep.subr.mxu0 0.0
    %894 = vmatpush1.msra.mxu0 0.0
    %895 = vmatprep.subr.mxu0 0.0
    %896 = vmatpush1.msra.mxu0 0.0
    %897 = vmatprep.subr.mxu0 0.0
    %898 = vmatpush1.msra.mxu0 0.0
    %899 = vmatprep.subr.mxu0 0.0
    %900 = vmatpush1.msra.mxu0 0.0
    %901 = vmatprep.subr.mxu0 0.0
    %902 = vmatpush1.msra.mxu0 0.0
    %903 = vmatprep.subr.mxu0 0.0
    %904 = vmatpush1.msra.mxu0 0.0
    %905 = vmatprep.subr.mxu0 0.0
    %906 = vmatpush1.msra.mxu0 0.0
    %907 = vmatprep.mubr.f32.mxu0 0.0
    %908 = vmatmul.mubr.f32.gmra.mrb[0].mxu0 %v826
    %v909 = vpop.f32.mrb[0].mxu0
    %v910 = vadd.f32 0.0, %v909
    %v911 = vpop.f32.mrb[0].mxu0
    %912 = vdwg.mxu0
    %s913 = sld [smem:[#allocation2 + $0x1]]
    %v914 = vmul.f32 %v910, %v910
    %v916 = vrot.slane %v914, 7
    %v918 = vsub.f32 %v910, %v916
    %v919 = vmax.f32 %v918, 0.0
    %v920 = vlaneseq
    %v921 = vshrl.u32 %v920, 7
    %v922 = vsub.s32 0, %v921
    %v923 = vrot.slane %v910, %v922
    %v924 = vsub.f32 %v233, %v923
    %v925 = vsub.f32 %v234, %v923
    %v926 = vadd.f32 %v919, 1e-05
    %v927 = vrsqrt.pop %v926
    %v928 = vstv %s913
    %v929 = vmul.f32 %v928, %v927
    %v930 = vlaneseq
    %v931 = vshrl.u32 %v930, 7
    %v932 = vsub.s32 1, %v931
    %v933 = vrot.slane %v929, %v932
    %v934 = vmul.f32 %v924, %v933
    %v935 = vmul.f32 %v925, %v933
    %v936 = vadd.f32 %v49, %v934
    %v937 = vadd.f32 %v50, %v935
    %s938 = sld [smem:[#allocation2 + $0x2]]
    %v939 = vlaneseq
    %v940 = vshrl.u32 %v939, 7
    %v941 = vsub.s32 2, %v940
    %v942 = vrot.slane %v910, %v941
    %v943 = vsub.f32 %v242, %v942
    %v944 = vsub.f32 %v244, %v942
    %v945 = vstv %s938
    %v946 = vmul.f32 %v945, %v927
    %v947 = vlaneseq
    %v948 = vshrl.u32 %v947, 7
    %v949 = vsub.s32 3, %v948
    %v950 = vrot.slane %v946, %v949
    %v951 = vmul.f32 %v943, %v950
    %v952 = vmul.f32 %v944, %v950
    %v953 = vadd.f32 %v936, %v951
    %v954 = vadd.f32 %v937, %v952
    %v955 = vlaneseq
    %v956 = vshrl.u32 %v955, 7
    %v957 = vsub.s32 4, %v956
    %v958 = vrot.slane %v910, %v957
    %v959 = vsub.f32 %v404, %v958
    %v960 = vsub.f32 %v405, %v958
    %v961 = vlaneseq
    %v962 = vshrl.u32 %v961, 7
    %v963 = vsub.s32 5, %v962
    %v964 = vrot.slane %v927, %v963
    %v965 = vmul.f32 %v959, %v964
    %v966 = vmul.f32 %v960, %v964
    %v967 = vmax.f32 %v965, 0.0
    %v968 = vmax.f32 %v966, 0.0
    %v969 = vlaneseq
    %v970 = vshrl.u32 %v969, 7
    %v971 = vsub.s32 6, %v970
    %v972 = vrot.slane %v910, %v971
    %v973 = vsub.f32 %v747, %v972
    %v974 = vsub.f32 %v748, %v972
    %v975 = vlaneseq
    %v976 = vshrl.u32 %v975, 7
    %v977 = vsub.s32 7, %v976
    %v978 = vrot.slane %v927, %v977
    %v979 = vmul.f32 %v973, %v978
    %v980 = vmul.f32 %v974, %v978
    %v981 = vmax.f32 %v979, 0.0
    %v982 = vmax.f32 %v980, 0.0
    %v983 = vrot.slane %v967, 7
    %v984 = vrot.slane %v968, 7
    %v985 = vsel %vm53, %v983, %v984
    %v986 = vsel %vm53, %v984, %v983
    %v987 = vsel %vm56, %v986, 0.0
    %v988 = vsel %vm57, %v985, 0.0
    %v989 = vld [vmem:[%s3 + $0x9] sm:$0x1]
    %990 = vrot.lane.b32.xlu0 %v987, 1
    %v991 = vpop.permute.xlu0 %990
    %992 = vrot.lane.b32.xlu0 %v988, 1
    %v993 = vpop.permute.xlu0 %992
    %v994 = vlaneseq
    %v995 = vshrl.u32 %v994, 7
    %v996 = vsub.s32 0, %v995
    %v997 = vrot.slane %v989, %v996
    %v998 = vmul.f32 %v997, %v991
    %v999 = vmul.f32 %v997, %v993
    %v1000 = vld [vmem:[%s3 + $0xa] sm:$0x1]
    %v1001 = vlaneseq
    %v1002 = vshrl.u32 %v1001, 7
    %v1003 = vsub.s32 0, %v1002
    %v1004 = vrot.slane %v1000, %v1003
    %v1005 = vmul.f32 %v1004, %v987
    %v1006 = vmul.f32 %v1004, %v988
    %v1007 = vadd.f32 %v998, %v1005
    %v1008 = vadd.f32 %v999, %v1006
    %v1009 = vld [vmem:[%s3 + $0xb] sm:$0x1]
    %1010 = vrot.lane.b32.xlu0 %v987, 127
    %v1011 = vpop.permute.xlu0 %1010
    %1012 = vrot.lane.b32.xlu0 %v988, 127
    %v1013 = vpop.permute.xlu0 %1012
    %v1014 = vlaneseq
    %v1015 = vshrl.u32 %v1014, 7
    %v1016 = vsub.s32 0, %v1015
    %v1017 = vrot.slane %v1009, %v1016
    %v1018 = vmul.f32 %v1017, %v1011
    %v1019 = vmul.f32 %v1017, %v1013
    %v1020 = vadd.f32 %v1007, %v1018
    %v1021 = vadd.f32 %v1008, %v1019
    %v1022 = vld [vmem:[%s3 + $0xc] sm:$0x1]
    %1023 = vrot.lane.b32.xlu0 %v967, 1
    %v1024 = vpop.permute.xlu0 %1023
    %1025 = vrot.lane.b32.xlu0 %v968, 1
    %v1026 = vpop.permute.xlu0 %1025
    %v1027 = vlaneseq
    %v1028 = vshrl.u32 %v1027, 7
    %v1029 = vsub.s32 0, %v1028
    %v1030 = vrot.slane %v1022, %v1029
    %v1031 = vmul.f32 %v1030, %v1024
    %v1032 = vmul.f32 %v1030, %v1026
    %v1033 = vadd.f32 %v1020, %v1031
    %v1034 = vadd.f32 %v1021, %v1032
    %v1035 = vld [vmem:[%s3 + $0xd] sm:$0x1]
    %v1036 = vlaneseq
    %v1037 = vshrl.u32 %v1036, 7
    %v1038 = vsub.s32 0, %v1037
    %v1039 = vrot.slane %v1035, %v1038
    %v1040 = vmul.f32 %v1039, %v967
    %v1041 = vmul.f32 %v1039, %v968
    %v1042 = vadd.f32 %v1033, %v1040
    %v1043 = vadd.f32 %v1034, %v1041
    %v1044 = vld [vmem:[%s3 + $0xe] sm:$0x1]
    %1045 = vrot.lane.b32.xlu0 %v967, 127
    %v1046 = vpop.permute.xlu0 %1045
    %1047 = vrot.lane.b32.xlu0 %v968, 127
    %v1048 = vpop.permute.xlu0 %1047
    %v1049 = vlaneseq
    %v1050 = vshrl.u32 %v1049, 7
    %v1051 = vsub.s32 0, %v1050
    %v1052 = vrot.slane %v1044, %v1051
    %v1053 = vmul.f32 %v1052, %v1046
    %v1054 = vmul.f32 %v1052, %v1048
    %v1055 = vadd.f32 %v1042, %v1053
    %v1056 = vadd.f32 %v1043, %v1054
    %v1057 = vrot.slane %v967, 1
    %v1058 = vrot.slane %v968, 1
    %v1059 = vsel %vm178, %v1057, %v1058
    %v1060 = vsel %vm178, %v1058, %v1057
    %v1061 = vsel %vm181, %v1059, 0.0
    %v1062 = vsel %vm182, %v1060, 0.0
    %v1063 = vld [vmem:[%s3 + $0xf] sm:$0x1]
    %1064 = vrot.lane.b32.xlu0 %v1061, 1
    %v1065 = vpop.permute.xlu0 %1064
    %1066 = vrot.lane.b32.xlu0 %v1062, 1
    %v1067 = vpop.permute.xlu0 %1066
    %v1068 = vlaneseq
    %v1069 = vshrl.u32 %v1068, 7
    %v1070 = vsub.s32 0, %v1069
    %v1071 = vrot.slane %v1063, %v1070
    %v1072 = vmul.f32 %v1071, %v1065
    %v1073 = vmul.f32 %v1071, %v1067
    %v1074 = vadd.f32 %v1055, %v1072
    %v1075 = vadd.f32 %v1056, %v1073
    %v1076 = vld [vmem:[%s3 + $0x10] sm:$0x1]
    %v1077 = vlaneseq
    %v1078 = vshrl.u32 %v1077, 7
    %v1079 = vsub.s32 0, %v1078
    %v1080 = vrot.slane %v1076, %v1079
    %v1081 = vmul.f32 %v1080, %v1061
    %v1082 = vmul.f32 %v1080, %v1062
    %v1083 = vadd.f32 %v1074, %v1081
    %v1084 = vadd.f32 %v1075, %v1082
    %v1085 = vld [vmem:[%s3 + $0x11] sm:$0x1]
    %1086 = vrot.lane.b32.xlu0 %v1061, 127
    %v1087 = vpop.permute.xlu0 %1086
    %1088 = vrot.lane.b32.xlu0 %v1062, 127
    %v1089 = vpop.permute.xlu0 %1088
    %v1090 = vlaneseq
    %v1091 = vshrl.u32 %v1090, 7
    %v1092 = vsub.s32 0, %v1091
    %v1093 = vrot.slane %v1085, %v1092
    %v1094 = vmul.f32 %v1093, %v1087
    %v1095 = vmul.f32 %v1093, %v1089
    %v1096 = vadd.f32 %v1083, %v1094
    %v1097 = vadd.f32 %v1084, %v1095
    %v1098 = vld [vmem:[%s4 + $0x4] sm:$0x1]
    %v1099 = vlaneseq
    %v1100 = vshrl.u32 %v1099, 7
    %v1101 = vsub.s32 0, %v1100
    %v1102 = vrot.slane %v1098, %v1101
    %v1103 = vmul.f32 %v1102, %v1096
    %v1104 = vmul.f32 %v1102, %v1097
    %1105 = vrot.lane.b32.xlu0 %v1096, 32
    %v1106 = vpop.permute.xlu0 %1105
    %1107 = vrot.lane.b32.xlu0 %v1097, 32
    %v1108 = vpop.permute.xlu0 %1107
    %v1109 = vld [vmem:[%s4 + $0x5] sm:$0x1]
    %v1110 = vlaneseq
    %v1111 = vshrl.u32 %v1110, 7
    %v1112 = vsub.s32 0, %v1111
    %v1113 = vrot.slane %v1109, %v1112
    %v1114 = vmul.f32 %v1113, %v1106
    %v1115 = vmul.f32 %v1113, %v1108
    %v1116 = vadd.f32 %v1103, %v1114
    %v1117 = vadd.f32 %v1104, %v1115
    %1118 = vrot.lane.b32.xlu0 %v1096, 64
    %v1119 = vpop.permute.xlu0 %1118
    %1120 = vrot.lane.b32.xlu0 %v1097, 64
    %v1121 = vpop.permute.xlu0 %1120
    %v1122 = vld [vmem:[%s4 + $0x6] sm:$0x1]
    %v1123 = vlaneseq
    %v1124 = vshrl.u32 %v1123, 7
    %v1125 = vsub.s32 0, %v1124
    %v1126 = vrot.slane %v1122, %v1125
    %v1127 = vmul.f32 %v1126, %v1119
    %v1128 = vmul.f32 %v1126, %v1121
    %v1129 = vadd.f32 %v1116, %v1127
    %v1130 = vadd.f32 %v1117, %v1128
    %1131 = vrot.lane.b32.xlu0 %v1096, 96
    %v1132 = vpop.permute.xlu0 %1131
    %1133 = vrot.lane.b32.xlu0 %v1097, 96
    %v1134 = vpop.permute.xlu0 %1133
    %v1135 = vld [vmem:[%s4 + $0x7] sm:$0x1]
    %v1136 = vlaneseq
    %v1137 = vshrl.u32 %v1136, 7
    %v1138 = vsub.s32 0, %v1137
    %v1139 = vrot.slane %v1135, %v1138
    %v1140 = vmul.f32 %v1139, %v1132
    %v1141 = vmul.f32 %v1139, %v1134
    %v1142 = vadd.f32 %v1129, %v1140
    %v1143 = vadd.f32 %v1130, %v1141
    %v1144 = vrot.slane %v981, 6
    %v1145 = vrot.slane %v982, 6
    %v1146 = vsel %vm408, %v1144, %v1145
    %v1147 = vsel %vm408, %v1145, %v1144
    %v1148 = vsel %vm411, %v1147, 0.0
    %v1149 = vsel %vm412, %v1146, 0.0
    %v1150 = vld [vmem:[%s3 + $0x2b] sm:$0x1]
    %1151 = vrot.lane.b32.xlu0 %v1148, 2
    %v1152 = vpop.permute.xlu0 %1151
    %1153 = vrot.lane.b32.xlu0 %v1149, 2
    %v1154 = vpop.permute.xlu0 %1153
    %v1155 = vlaneseq
    %v1156 = vshrl.u32 %v1155, 7
    %v1157 = vsub.s32 0, %v1156
    %v1158 = vrot.slane %v1150, %v1157
    %v1159 = vmul.f32 %v1158, %v1152
    %v1160 = vmul.f32 %v1158, %v1154
    %v1161 = vld [vmem:[%s3 + $0x2c] sm:$0x1]
    %1162 = vrot.lane.b32.xlu0 %v1148, 1
    %v1163 = vpop.permute.xlu0 %1162
    %1164 = vrot.lane.b32.xlu0 %v1149, 1
    %v1165 = vpop.permute.xlu0 %1164
    %v1166 = vlaneseq
    %v1167 = vshrl.u32 %v1166, 7
    %v1168 = vsub.s32 0, %v1167
    %v1169 = vrot.slane %v1161, %v1168
    %v1170 = vmul.f32 %v1169, %v1163
    %v1171 = vmul.f32 %v1169, %v1165
    %v1172 = vadd.f32 %v1159, %v1170
    %v1173 = vadd.f32 %v1160, %v1171
    %v1174 = vld [vmem:[%s3 + $0x2d] sm:$0x1]
    %v1175 = vlaneseq
    %v1176 = vshrl.u32 %v1175, 7
    %v1177 = vsub.s32 0, %v1176
    %v1178 = vrot.slane %v1174, %v1177
    %v1179 = vmul.f32 %v1178, %v1148
    %v1180 = vmul.f32 %v1178, %v1149
    %v1181 = vadd.f32 %v1172, %v1179
    %v1182 = vadd.f32 %v1173, %v1180
    %v1183 = vld [vmem:[%s3 + $0x2e] sm:$0x1]
    %1184 = vrot.lane.b32.xlu0 %v1148, 127
    %v1185 = vpop.permute.xlu0 %1184
    %1186 = vrot.lane.b32.xlu0 %v1149, 127
    %v1187 = vpop.permute.xlu0 %1186
    %v1188 = vlaneseq
    %v1189 = vshrl.u32 %v1188, 7
    %v1190 = vsub.s32 0, %v1189
    %v1191 = vrot.slane %v1183, %v1190
    %v1192 = vmul.f32 %v1191, %v1185
    %v1193 = vmul.f32 %v1191, %v1187
    %v1194 = vadd.f32 %v1181, %v1192
    %v1195 = vadd.f32 %v1182, %v1193
    %v1196 = vld [vmem:[%s3 + $0x2f] sm:$0x1]
    %1197 = vrot.lane.b32.xlu0 %v1148, 126
    %v1198 = vpop.permute.xlu0 %1197
    %1199 = vrot.lane.b32.xlu0 %v1149, 126
    %v1200 = vpop.permute.xlu0 %1199
    %v1201 = vlaneseq
    %v1202 = vshrl.u32 %v1201, 7
    %v1203 = vsub.s32 0, %v1202
    %v1204 = vrot.slane %v1196, %v1203
    %v1205 = vmul.f32 %v1204, %v1198
    %v1206 = vmul.f32 %v1204, %v1200
    %v1207 = vadd.f32 %v1194, %v1205
    %v1208 = vadd.f32 %v1195, %v1206
    %v1209 = vrot.slane %v981, 7
    %v1210 = vrot.slane %v982, 7
    %v1211 = vsel %vm53, %v1209, %v1210
    %v1212 = vsel %vm53, %v1210, %v1209
    %v1213 = vsel %vm56, %v1212, 0.0
    %v1214 = vsel %vm57, %v1211, 0.0
    %v1215 = vld [vmem:[%s3 + $0x30] sm:$0x1]
    %1216 = vrot.lane.b32.xlu0 %v1213, 2
    %v1217 = vpop.permute.xlu0 %1216
    %1218 = vrot.lane.b32.xlu0 %v1214, 2
    %v1219 = vpop.permute.xlu0 %1218
    %v1220 = vlaneseq
    %v1221 = vshrl.u32 %v1220, 7
    %v1222 = vsub.s32 0, %v1221
    %v1223 = vrot.slane %v1215, %v1222
    %v1224 = vmul.f32 %v1223, %v1217
    %v1225 = vmul.f32 %v1223, %v1219
    %v1226 = vadd.f32 %v1207, %v1224
    %v1227 = vadd.f32 %v1208, %v1225
    %v1228 = vld [vmem:[%s3 + $0x31] sm:$0x1]
    %1229 = vrot.lane.b32.xlu0 %v1213, 1
    %v1230 = vpop.permute.xlu0 %1229
    %1231 = vrot.lane.b32.xlu0 %v1214, 1
    %v1232 = vpop.permute.xlu0 %1231
    %v1233 = vlaneseq
    %v1234 = vshrl.u32 %v1233, 7
    %v1235 = vsub.s32 0, %v1234
    %v1236 = vrot.slane %v1228, %v1235
    %v1237 = vmul.f32 %v1236, %v1230
    %v1238 = vmul.f32 %v1236, %v1232
    %v1239 = vadd.f32 %v1226, %v1237
    %v1240 = vadd.f32 %v1227, %v1238
    %v1241 = vld [vmem:[%s3 + $0x32] sm:$0x1]
    %v1242 = vlaneseq
    %v1243 = vshrl.u32 %v1242, 7
    %v1244 = vsub.s32 0, %v1243
    %v1245 = vrot.slane %v1241, %v1244
    %v1246 = vmul.f32 %v1245, %v1213
    %v1247 = vmul.f32 %v1245, %v1214
    %v1248 = vadd.f32 %v1239, %v1246
    %v1249 = vadd.f32 %v1240, %v1247
    %v1250 = vld [vmem:[%s3 + $0x33] sm:$0x1]
    %1251 = vrot.lane.b32.xlu0 %v1213, 127
    %v1252 = vpop.permute.xlu0 %1251
    %1253 = vrot.lane.b32.xlu0 %v1214, 127
    %v1254 = vpop.permute.xlu0 %1253
    %v1255 = vlaneseq
    %v1256 = vshrl.u32 %v1255, 7
    %v1257 = vsub.s32 0, %v1256
    %v1258 = vrot.slane %v1250, %v1257
    %v1259 = vmul.f32 %v1258, %v1252
    %v1260 = vmul.f32 %v1258, %v1254
    %v1261 = vadd.f32 %v1248, %v1259
    %v1262 = vadd.f32 %v1249, %v1260
    %v1263 = vld [vmem:[%s3 + $0x34] sm:$0x1]
    %1264 = vrot.lane.b32.xlu0 %v1213, 126
    %v1265 = vpop.permute.xlu0 %1264
    %1266 = vrot.lane.b32.xlu0 %v1214, 126
    %v1267 = vpop.permute.xlu0 %1266
    %v1268 = vlaneseq
    %v1269 = vshrl.u32 %v1268, 7
    %v1270 = vsub.s32 0, %v1269
    %v1271 = vrot.slane %v1263, %v1270
    %v1272 = vmul.f32 %v1271, %v1265
    %v1273 = vmul.f32 %v1271, %v1267
    %v1274 = vadd.f32 %v1261, %v1272
    %v1275 = vadd.f32 %v1262, %v1273
    %v1276 = vld [vmem:[%s3 + $0x35] sm:$0x1]
    %1277 = vrot.lane.b32.xlu0 %v981, 2
    %v1278 = vpop.permute.xlu0 %1277
    %1279 = vrot.lane.b32.xlu0 %v982, 2
    %v1280 = vpop.permute.xlu0 %1279
    %v1281 = vlaneseq
    %v1282 = vshrl.u32 %v1281, 7
    %v1283 = vsub.s32 0, %v1282
    %v1284 = vrot.slane %v1276, %v1283
    %v1285 = vmul.f32 %v1284, %v1278
    %v1286 = vmul.f32 %v1284, %v1280
    %v1287 = vadd.f32 %v1274, %v1285
    %v1288 = vadd.f32 %v1275, %v1286
    %v1289 = vld [vmem:[%s3 + $0x36] sm:$0x1]
    %1290 = vrot.lane.b32.xlu0 %v981, 1
    %v1291 = vpop.permute.xlu0 %1290
    %1292 = vrot.lane.b32.xlu0 %v982, 1
    %v1293 = vpop.permute.xlu0 %1292
    %v1294 = vlaneseq
    %v1295 = vshrl.u32 %v1294, 7
    %v1296 = vsub.s32 0, %v1295
    %v1297 = vrot.slane %v1289, %v1296
    %v1298 = vmul.f32 %v1297, %v1291
    %v1299 = vmul.f32 %v1297, %v1293
    %v1300 = vadd.f32 %v1287, %v1298
    %v1301 = vadd.f32 %v1288, %v1299
    %v1302 = vld [vmem:[%s3 + $0x37] sm:$0x1]
    %v1303 = vlaneseq
    %v1304 = vshrl.u32 %v1303, 7
    %v1305 = vsub.s32 0, %v1304
    %v1306 = vrot.slane %v1302, %v1305
    %v1307 = vmul.f32 %v1306, %v981
    %v1308 = vmul.f32 %v1306, %v982
    %v1309 = vadd.f32 %v1300, %v1307
    %v1310 = vadd.f32 %v1301, %v1308
    %v1311 = vld [vmem:[%s3 + $0x38] sm:$0x1]
    %1312 = vrot.lane.b32.xlu0 %v981, 127
    %v1313 = vpop.permute.xlu0 %1312
    %1314 = vrot.lane.b32.xlu0 %v982, 127
    %v1315 = vpop.permute.xlu0 %1314
    %v1316 = vlaneseq
    %v1317 = vshrl.u32 %v1316, 7
    %v1318 = vsub.s32 0, %v1317
    %v1319 = vrot.slane %v1311, %v1318
    %v1320 = vmul.f32 %v1319, %v1313
    %v1321 = vmul.f32 %v1319, %v1315
    %v1322 = vadd.f32 %v1309, %v1320
    %v1323 = vadd.f32 %v1310, %v1321
    %v1324 = vld [vmem:[%s3 + $0x39] sm:$0x1]
    %1325 = vrot.lane.b32.xlu0 %v981, 126
    %v1326 = vpop.permute.xlu0 %1325
    %1327 = vrot.lane.b32.xlu0 %v982, 126
    %v1328 = vpop.permute.xlu0 %1327
    %v1329 = vlaneseq
    %v1330 = vshrl.u32 %v1329, 7
    %v1331 = vsub.s32 0, %v1330
    %v1332 = vrot.slane %v1324, %v1331
    %v1333 = vmul.f32 %v1332, %v1326
    %v1334 = vmul.f32 %v1332, %v1328
    %v1335 = vadd.f32 %v1322, %v1333
    %v1336 = vadd.f32 %v1323, %v1334
    %v1337 = vrot.slane %v981, 1
    %v1338 = vrot.slane %v982, 1
    %v1339 = vsel %vm178, %v1337, %v1338
    %v1340 = vsel %vm178, %v1338, %v1337
    %v1341 = vsel %vm181, %v1339, 0.0
    %v1342 = vsel %vm182, %v1340, 0.0
    %v1343 = vld [vmem:[%s3 + $0x3a] sm:$0x1]
    %1344 = vrot.lane.b32.xlu0 %v1341, 2
    %v1345 = vpop.permute.xlu0 %1344
    %1346 = vrot.lane.b32.xlu0 %v1342, 2
    %v1347 = vpop.permute.xlu0 %1346
    %v1348 = vlaneseq
    %v1349 = vshrl.u32 %v1348, 7
    %v1350 = vsub.s32 0, %v1349
    %v1351 = vrot.slane %v1343, %v1350
    %v1352 = vmul.f32 %v1351, %v1345
    %v1353 = vmul.f32 %v1351, %v1347
    %v1354 = vadd.f32 %v1335, %v1352
    %v1355 = vadd.f32 %v1336, %v1353
    %v1356 = vld [vmem:[%s3 + $0x3b] sm:$0x1]
    %1357 = vrot.lane.b32.xlu0 %v1341, 1
    %v1358 = vpop.permute.xlu0 %1357
    %1359 = vrot.lane.b32.xlu0 %v1342, 1
    %v1360 = vpop.permute.xlu0 %1359
    %v1361 = vlaneseq
    %v1362 = vshrl.u32 %v1361, 7
    %v1363 = vsub.s32 0, %v1362
    %v1364 = vrot.slane %v1356, %v1363
    %v1365 = vmul.f32 %v1364, %v1358
    %v1366 = vmul.f32 %v1364, %v1360
    %v1367 = vadd.f32 %v1354, %v1365
    %v1368 = vadd.f32 %v1355, %v1366
    %v1369 = vld [vmem:[%s3 + $0x3c] sm:$0x1]
    %v1370 = vlaneseq
    %v1371 = vshrl.u32 %v1370, 7
    %v1372 = vsub.s32 0, %v1371
    %v1373 = vrot.slane %v1369, %v1372
    %v1374 = vmul.f32 %v1373, %v1341
    %v1375 = vmul.f32 %v1373, %v1342
    %v1376 = vadd.f32 %v1367, %v1374
    %v1377 = vadd.f32 %v1368, %v1375
    %v1378 = vld [vmem:[%s3 + $0x3d] sm:$0x1]
    %1379 = vrot.lane.b32.xlu0 %v1341, 127
    %v1380 = vpop.permute.xlu0 %1379
    %1381 = vrot.lane.b32.xlu0 %v1342, 127
    %v1382 = vpop.permute.xlu0 %1381
    %v1383 = vlaneseq
    %v1384 = vshrl.u32 %v1383, 7
    %v1385 = vsub.s32 0, %v1384
    %v1386 = vrot.slane %v1378, %v1385
    %v1387 = vmul.f32 %v1386, %v1380
    %v1388 = vmul.f32 %v1386, %v1382
    %v1389 = vadd.f32 %v1376, %v1387
    %v1390 = vadd.f32 %v1377, %v1388
    %v1391 = vld [vmem:[%s3 + $0x3e] sm:$0x1]
    %1392 = vrot.lane.b32.xlu0 %v1341, 126
    %v1393 = vpop.permute.xlu0 %1392
    %1394 = vrot.lane.b32.xlu0 %v1342, 126
    %v1395 = vpop.permute.xlu0 %1394
    %v1396 = vlaneseq
    %v1397 = vshrl.u32 %v1396, 7
    %v1398 = vsub.s32 0, %v1397
    %v1399 = vrot.slane %v1391, %v1398
    %v1400 = vmul.f32 %v1399, %v1393
    %v1401 = vmul.f32 %v1399, %v1395
    %v1402 = vadd.f32 %v1389, %v1400
    %v1403 = vadd.f32 %v1390, %v1401
    %v1404 = vrot.slane %v981, 2
    %v1405 = vrot.slane %v982, 2
    %v1406 = vsel %vm635, %v1404, %v1405
    %v1407 = vsel %vm635, %v1405, %v1404
    %v1408 = vsel %vm638, %v1406, 0.0
    %v1409 = vsel %vm639, %v1407, 0.0
    %v1410 = vld [vmem:[%s3 + $0x3f] sm:$0x1]
    %1411 = vrot.lane.b32.xlu0 %v1408, 2
    %v1412 = vpop.permute.xlu0 %1411
    %1413 = vrot.lane.b32.xlu0 %v1409, 2
    %v1414 = vpop.permute.xlu0 %1413
    %v1415 = vlaneseq
    %v1416 = vshrl.u32 %v1415, 7
    %v1417 = vsub.s32 0, %v1416
    %v1418 = vrot.slane %v1410, %v1417
    %v1419 = vmul.f32 %v1418, %v1412
    %v1420 = vmul.f32 %v1418, %v1414
    %v1421 = vadd.f32 %v1402, %v1419
    %v1422 = vadd.f32 %v1403, %v1420
    %v1423 = vld [vmem:[%s3 + $0x40] sm:$0x1]
    %1424 = vrot.lane.b32.xlu0 %v1408, 1
    %v1425 = vpop.permute.xlu0 %1424
    %1426 = vrot.lane.b32.xlu0 %v1409, 1
    %v1427 = vpop.permute.xlu0 %1426
    %v1428 = vlaneseq
    %v1429 = vshrl.u32 %v1428, 7
    %v1430 = vsub.s32 0, %v1429
    %v1431 = vrot.slane %v1423, %v1430
    %v1432 = vmul.f32 %v1431, %v1425
    %v1433 = vmul.f32 %v1431, %v1427
    %v1434 = vadd.f32 %v1421, %v1432
    %v1435 = vadd.f32 %v1422, %v1433
    %v1436 = vld [vmem:[%s3 + $0x41] sm:$0x1]
    %v1437 = vlaneseq
    %v1438 = vshrl.u32 %v1437, 7
    %v1439 = vsub.s32 0, %v1438
    %v1440 = vrot.slane %v1436, %v1439
    %v1441 = vmul.f32 %v1440, %v1408
    %v1442 = vmul.f32 %v1440, %v1409
    %v1443 = vadd.f32 %v1434, %v1441
    %v1444 = vadd.f32 %v1435, %v1442
    %v1445 = vld [vmem:[%s3 + $0x42] sm:$0x1]
    %1446 = vrot.lane.b32.xlu0 %v1408, 127
    %v1447 = vpop.permute.xlu0 %1446
    %1448 = vrot.lane.b32.xlu0 %v1409, 127
    %v1449 = vpop.permute.xlu0 %1448
    %v1450 = vlaneseq
    %v1451 = vshrl.u32 %v1450, 7
    %v1452 = vsub.s32 0, %v1451
    %v1453 = vrot.slane %v1445, %v1452
    %v1454 = vmul.f32 %v1453, %v1447
    %v1455 = vmul.f32 %v1453, %v1449
    %v1456 = vadd.f32 %v1443, %v1454
    %v1457 = vadd.f32 %v1444, %v1455
    %v1458 = vld [vmem:[%s3 + $0x43] sm:$0x1]
    %1459 = vrot.lane.b32.xlu0 %v1408, 126
    %v1460 = vpop.permute.xlu0 %1459
    %1461 = vrot.lane.b32.xlu0 %v1409, 126
    %v1462 = vpop.permute.xlu0 %1461
    %v1463 = vlaneseq
    %v1464 = vshrl.u32 %v1463, 7
    %v1465 = vsub.s32 0, %v1464
    %v1466 = vrot.slane %v1458, %v1465
    %v1467 = vmul.f32 %v1466, %v1460
    %v1468 = vmul.f32 %v1466, %v1462
    %v1469 = vadd.f32 %v1456, %v1467
    %v1470 = vadd.f32 %v1457, %v1468
    %v1471 = vld [vmem:[%s4 + $0xc] sm:$0x1]
    %v1472 = vlaneseq
    %v1473 = vshrl.u32 %v1472, 7
    %v1474 = vsub.s32 0, %v1473
    %v1475 = vrot.slane %v1471, %v1474
    %v1476 = vmul.f32 %v1475, %v1469
    %v1477 = vmul.f32 %v1475, %v1470
    %1478 = vrot.lane.b32.xlu0 %v1469, 32
    %v1479 = vpop.permute.xlu0 %1478
    %1480 = vrot.lane.b32.xlu0 %v1470, 32
    %v1481 = vpop.permute.xlu0 %1480
    %v1482 = vld [vmem:[%s4 + $0xd] sm:$0x1]
    %v1483 = vlaneseq
    %v1484 = vshrl.u32 %v1483, 7
    %v1485 = vsub.s32 0, %v1484
    %v1486 = vrot.slane %v1482, %v1485
    %v1487 = vmul.f32 %v1486, %v1479
    %v1488 = vmul.f32 %v1486, %v1481
    %v1489 = vadd.f32 %v1476, %v1487
    %v1490 = vadd.f32 %v1477, %v1488
    %1491 = vrot.lane.b32.xlu0 %v1469, 64
    %v1492 = vpop.permute.xlu0 %1491
    %1493 = vrot.lane.b32.xlu0 %v1470, 64
    %v1494 = vpop.permute.xlu0 %1493
    %v1495 = vld [vmem:[%s4 + $0xe] sm:$0x1]
    %v1496 = vlaneseq
    %v1497 = vshrl.u32 %v1496, 7
    %v1498 = vsub.s32 0, %v1497
    %v1499 = vrot.slane %v1495, %v1498
    %v1500 = vmul.f32 %v1499, %v1492
    %v1501 = vmul.f32 %v1499, %v1494
    %v1502 = vadd.f32 %v1489, %v1500
    %v1503 = vadd.f32 %v1490, %v1501
    %1504 = vrot.lane.b32.xlu0 %v1469, 96
    %v1505 = vpop.permute.xlu0 %1504
    %1506 = vrot.lane.b32.xlu0 %v1470, 96
    %v1507 = vpop.permute.xlu0 %1506
    %v1508 = vld [vmem:[%s4 + $0xf] sm:$0x1]
    %v1509 = vlaneseq
    %v1510 = vshrl.u32 %v1509, 7
    %v1511 = vsub.s32 0, %v1510
    %v1512 = vrot.slane %v1508, %v1511
    %v1513 = vmul.f32 %v1512, %v1505
    %v1514 = vmul.f32 %v1512, %v1507
    %v1515 = vadd.f32 %v1502, %v1513
    %v1516 = vadd.f32 %v1503, %v1514
    %v1517 = vld [vmem:[%s3 + $0x44] sm:$0x1]
    %v1518 = vlaneseq
    %v1519 = vshrl.u32 %v1518, 7
    %v1520 = vsub.s32 0, %v1519
    %v1521 = vrot.slane %v1517, %v1520
    %v1522 = vmul.f32 %v1521, %v417
    %v1523 = vmul.f32 %v1521, %v419
    %v1524 = vld [vmem:[%s3 + $0x45] sm:$0x1]
    %v1525 = vlaneseq
    %v1526 = vshrl.u32 %v1525, 7
    %v1527 = vsub.s32 0, %v1526
    %v1528 = vrot.slane %v1524, %v1527
    %v1529 = vmul.f32 %v1528, %v413
    %v1530 = vmul.f32 %v1528, %v414
    %v1531 = vadd.f32 %v1522, %v1529
    %v1532 = vadd.f32 %v1523, %v1530
    %v1533 = vld [vmem:[%s3 + $0x46] sm:$0x1]
    %v1534 = vlaneseq
    %v1535 = vshrl.u32 %v1534, 7
    %v1536 = vsub.s32 0, %v1535
    %v1537 = vrot.slane %v1533, %v1536
    %v1538 = vmul.f32 %v1537, %v463
    %v1539 = vmul.f32 %v1537, %v465
    %v1540 = vadd.f32 %v1531, %v1538
    %v1541 = vadd.f32 %v1532, %v1539
    %v1542 = vld [vmem:[%s3 + $0x47] sm:$0x1]
    %v1543 = vlaneseq
    %v1544 = vshrl.u32 %v1543, 7
    %v1545 = vsub.s32 0, %v1544
    %v1546 = vrot.slane %v1542, %v1545
    %v1547 = vmul.f32 %v1546, %v529
    %v1548 = vmul.f32 %v1546, %v531
    %v1549 = vadd.f32 %v1540, %v1547
    %v1550 = vadd.f32 %v1541, %v1548
    %v1551 = vld [vmem:[%s3 + $0x48] sm:$0x1]
    %v1552 = vlaneseq
    %v1553 = vshrl.u32 %v1552, 7
    %v1554 = vsub.s32 0, %v1553
    %v1555 = vrot.slane %v1551, %v1554
    %v1556 = vmul.f32 %v1555, %v41
    %v1557 = vmul.f32 %v1555, %v42
    %v1558 = vadd.f32 %v1549, %v1556
    %v1559 = vadd.f32 %v1550, %v1557
    %v1560 = vld [vmem:[%s3 + $0x49] sm:$0x1]
    %v1561 = vlaneseq
    %v1562 = vshrl.u32 %v1561, 7
    %v1563 = vsub.s32 0, %v1562
    %v1564 = vrot.slane %v1560, %v1563
    %v1565 = vmul.f32 %v1564, %v569
    %v1566 = vmul.f32 %v1564, %v571
    %v1567 = vadd.f32 %v1558, %v1565
    %v1568 = vadd.f32 %v1559, %v1566
    %v1569 = vld [vmem:[%s3 + $0x4a] sm:$0x1]
    %v1570 = vlaneseq
    %v1571 = vshrl.u32 %v1570, 7
    %v1572 = vsub.s32 0, %v1571
    %v1573 = vrot.slane %v1569, %v1572
    %v1574 = vmul.f32 %v1573, %v644
    %v1575 = vmul.f32 %v1573, %v646
    %v1576 = vadd.f32 %v1567, %v1574
    %v1577 = vadd.f32 %v1568, %v1575
    %v1578 = vld [vmem:[%s3 + $0x4b] sm:$0x1]
    %v1579 = vlaneseq
    %v1580 = vshrl.u32 %v1579, 7
    %v1581 = vsub.s32 0, %v1580
    %v1582 = vrot.slane %v1578, %v1581
    %v1583 = vmul.f32 %v1582, %v640
    %v1584 = vmul.f32 %v1582, %v641
    %v1585 = vadd.f32 %v1576, %v1583
    %v1586 = vadd.f32 %v1577, %v1584
    %v1587 = vld [vmem:[%s3 + $0x4c] sm:$0x1]
    %v1588 = vlaneseq
    %v1589 = vshrl.u32 %v1588, 7
    %v1590 = vsub.s32 0, %v1589
    %v1591 = vrot.slane %v1587, %v1590
    %v1592 = vmul.f32 %v1591, %v692
    %v1593 = vmul.f32 %v1591, %v694
    %v1594 = vadd.f32 %v1585, %v1592
    %v1595 = vadd.f32 %v1586, %v1593
    %v1596 = vld [vmem:[%s4 + $0x10] sm:$0x1]
    %v1597 = vlaneseq
    %v1598 = vshrl.u32 %v1597, 7
    %v1599 = vsub.s32 0, %v1598
    %v1600 = vrot.slane %v1596, %v1599
    %v1601 = vmul.f32 %v1600, %v1594
    %v1602 = vmul.f32 %v1600, %v1595
    %1603 = vrot.lane.b32.xlu0 %v1594, 32
    %v1604 = vpop.permute.xlu0 %1603
    %1605 = vrot.lane.b32.xlu0 %v1595, 32
    %v1606 = vpop.permute.xlu0 %1605
    %v1607 = vld [vmem:[%s4 + $0x11] sm:$0x1]
    %v1608 = vlaneseq
    %v1609 = vshrl.u32 %v1608, 7
    %v1610 = vsub.s32 0, %v1609
    %v1611 = vrot.slane %v1607, %v1610
    %v1612 = vmul.f32 %v1611, %v1604
    %v1613 = vmul.f32 %v1611, %v1606
    %v1614 = vadd.f32 %v1601, %v1612
    %v1615 = vadd.f32 %v1602, %v1613
    %1616 = vrot.lane.b32.xlu0 %v1594, 64
    %v1617 = vpop.permute.xlu0 %1616
    %1618 = vrot.lane.b32.xlu0 %v1595, 64
    %v1619 = vpop.permute.xlu0 %1618
    %v1620 = vld [vmem:[%s4 + $0x12] sm:$0x1]
    %v1621 = vlaneseq
    %v1622 = vshrl.u32 %v1621, 7
    %v1623 = vsub.s32 0, %v1622
    %v1624 = vrot.slane %v1620, %v1623
    %v1625 = vmul.f32 %v1624, %v1617
    %v1626 = vmul.f32 %v1624, %v1619
    %v1627 = vadd.f32 %v1614, %v1625
    %v1628 = vadd.f32 %v1615, %v1626
    %1629 = vrot.lane.b32.xlu0 %v1594, 96
    %v1630 = vpop.permute.xlu0 %1629
    %1631 = vrot.lane.b32.xlu0 %v1595, 96
    %v1632 = vpop.permute.xlu0 %1631
    %v1633 = vld [vmem:[%s4 + $0x13] sm:$0x1]
    %v1634 = vlaneseq
    %v1635 = vshrl.u32 %v1634, 7
    %v1636 = vsub.s32 0, %v1635
    %v1637 = vrot.slane %v1633, %v1636
    %v1638 = vmul.f32 %v1637, %v1630
    %v1639 = vmul.f32 %v1637, %v1632
    %v1640 = vadd.f32 %v1627, %v1638
    %v1641 = vadd.f32 %v1628, %v1639
    %v1642 = vrot.slane %v41, 4
    %v1643 = vrot.slane %v42, 4
    %vm1644 = vcmp.lt.s32.totalorder %v45, 4
    %v1645 = vsel %vm1644, %v1642, %v1643
    %v1646 = vsel %vm1644, %v1643, %v1642
    %vm1647 = vcmp.ge.s32.totalorder %v45, 4
    %vm1648 = vcmp.ge.s32.totalorder %v46, 4
    %v1649 = vsel %vm1647, %v1646, 0.0
    %v1650 = vsel %vm1648, %v1645, 0.0
    %v1651 = vld [vmem:[%s3 + $0x4d] sm:$0x1]
    %1652 = vrot.lane.b32.xlu0 %v1649, 4
    %v1653 = vpop.permute.xlu0 %1652
    %1654 = vrot.lane.b32.xlu0 %v1650, 4
    %v1655 = vpop.permute.xlu0 %1654
    %v1656 = vlaneseq
    %v1657 = vshrl.u32 %v1656, 7
    %v1658 = vsub.s32 0, %v1657
    %v1659 = vrot.slane %v1651, %v1658
    %v1660 = vmul.f32 %v1659, %v1653
    %v1661 = vmul.f32 %v1659, %v1655
    %v1662 = vld [vmem:[%s3 + $0x4e] sm:$0x1]
    %1663 = vrot.lane.b32.xlu0 %v1649, 2
    %v1664 = vpop.permute.xlu0 %1663
    %1665 = vrot.lane.b32.xlu0 %v1650, 2
    %v1666 = vpop.permute.xlu0 %1665
    %v1667 = vlaneseq
    %v1668 = vshrl.u32 %v1667, 7
    %v1669 = vsub.s32 0, %v1668
    %v1670 = vrot.slane %v1662, %v1669
    %v1671 = vmul.f32 %v1670, %v1664
    %v1672 = vmul.f32 %v1670, %v1666
    %v1673 = vadd.f32 %v1660, %v1671
    %v1674 = vadd.f32 %v1661, %v1672
    %v1675 = vld [vmem:[%s3 + $0x4f] sm:$0x1]
    %v1676 = vlaneseq
    %v1677 = vshrl.u32 %v1676, 7
    %v1678 = vsub.s32 0, %v1677
    %v1679 = vrot.slane %v1675, %v1678
    %v1680 = vmul.f32 %v1679, %v1649
    %v1681 = vmul.f32 %v1679, %v1650
    %v1682 = vadd.f32 %v1673, %v1680
    %v1683 = vadd.f32 %v1674, %v1681
    %v1684 = vld [vmem:[%s3 + $0x50] sm:$0x1]
    %1685 = vrot.lane.b32.xlu0 %v1649, 126
    %v1686 = vpop.permute.xlu0 %1685
    %1687 = vrot.lane.b32.xlu0 %v1650, 126
    %v1688 = vpop.permute.xlu0 %1687
    %v1689 = vlaneseq
    %v1690 = vshrl.u32 %v1689, 7
    %v1691 = vsub.s32 0, %v1690
    %v1692 = vrot.slane %v1684, %v1691
    %v1693 = vmul.f32 %v1692, %v1686
    %v1694 = vmul.f32 %v1692, %v1688
    %v1695 = vadd.f32 %v1682, %v1693
    %v1696 = vadd.f32 %v1683, %v1694
    %v1697 = vld [vmem:[%s3 + $0x51] sm:$0x1]
    %1698 = vrot.lane.b32.xlu0 %v1649, 124
    %v1699 = vpop.permute.xlu0 %1698
    %1700 = vrot.lane.b32.xlu0 %v1650, 124
    %v1701 = vpop.permute.xlu0 %1700
    %v1702 = vlaneseq
    %v1703 = vshrl.u32 %v1702, 7
    %v1704 = vsub.s32 0, %v1703
    %v1705 = vrot.slane %v1697, %v1704
    %v1706 = vmul.f32 %v1705, %v1699
    %v1707 = vmul.f32 %v1705, %v1701
    %v1708 = vadd.f32 %v1695, %v1706
    %v1709 = vadd.f32 %v1696, %v1707
    %v1710 = vld [vmem:[%s3 + $0x52] sm:$0x1]
    %1711 = vrot.lane.b32.xlu0 %v413, 4
    %v1712 = vpop.permute.xlu0 %1711
    %1713 = vrot.lane.b32.xlu0 %v414, 4
    %v1714 = vpop.permute.xlu0 %1713
    %v1715 = vlaneseq
    %v1716 = vshrl.u32 %v1715, 7
    %v1717 = vsub.s32 0, %v1716
    %v1718 = vrot.slane %v1710, %v1717
    %v1719 = vmul.f32 %v1718, %v1712
    %v1720 = vmul.f32 %v1718, %v1714
    %v1721 = vadd.f32 %v1708, %v1719
    %v1722 = vadd.f32 %v1709, %v1720
    %v1723 = vld [vmem:[%s3 + $0x53] sm:$0x1]
    %v1724 = vlaneseq
    %v1725 = vshrl.u32 %v1724, 7
    %v1726 = vsub.s32 0, %v1725
    %v1727 = vrot.slane %v1723, %v1726
    %v1728 = vmul.f32 %v1727, %v417
    %v1729 = vmul.f32 %v1727, %v419
    %v1730 = vadd.f32 %v1721, %v1728
    %v1731 = vadd.f32 %v1722, %v1729
    %v1732 = vld [vmem:[%s3 + $0x54] sm:$0x1]
    %v1733 = vlaneseq
    %v1734 = vshrl.u32 %v1733, 7
    %v1735 = vsub.s32 0, %v1734
    %v1736 = vrot.slane %v1732, %v1735
    %v1737 = vmul.f32 %v1736, %v413
    %v1738 = vmul.f32 %v1736, %v414
    %v1739 = vadd.f32 %v1730, %v1737
    %v1740 = vadd.f32 %v1731, %v1738
    %v1741 = vld [vmem:[%s3 + $0x55] sm:$0x1]
    %v1742 = vlaneseq
    %v1743 = vshrl.u32 %v1742, 7
    %v1744 = vsub.s32 0, %v1743
    %v1745 = vrot.slane %v1741, %v1744
    %v1746 = vmul.f32 %v1745, %v463
    %v1747 = vmul.f32 %v1745, %v465
    %v1748 = vadd.f32 %v1739, %v1746
    %v1749 = vadd.f32 %v1740, %v1747
    %v1750 = vld [vmem:[%s3 + $0x56] sm:$0x1]
    %1751 = vrot.lane.b32.xlu0 %v413, 124
    %v1752 = vpop.permute.xlu0 %1751
    %1753 = vrot.lane.b32.xlu0 %v414, 124
    %v1754 = vpop.permute.xlu0 %1753
    %v1755 = vlaneseq
    %v1756 = vshrl.u32 %v1755, 7
    %v1757 = vsub.s32 0, %v1756
    %v1758 = vrot.slane %v1750, %v1757
    %v1759 = vmul.f32 %v1758, %v1752
    %v1760 = vmul.f32 %v1758, %v1754
    %v1761 = vadd.f32 %v1748, %v1759
    %v1762 = vadd.f32 %v1749, %v1760
    %v1763 = vld [vmem:[%s3 + $0x57] sm:$0x1]
    %1764 = vrot.lane.b32.xlu0 %v41, 4
    %v1765 = vpop.permute.xlu0 %1764
    %1766 = vrot.lane.b32.xlu0 %v42, 4
    %v1767 = vpop.permute.xlu0 %1766
    %v1768 = vlaneseq
    %v1769 = vshrl.u32 %v1768, 7
    %v1770 = vsub.s32 0, %v1769
    %v1771 = vrot.slane %v1763, %v1770
    %v1772 = vmul.f32 %v1771, %v1765
    %v1773 = vmul.f32 %v1771, %v1767
    %v1774 = vadd.f32 %v1761, %v1772
    %v1775 = vadd.f32 %v1762, %v1773
    %v1776 = vld [vmem:[%s3 + $0x58] sm:$0x1]
    %v1777 = vlaneseq
    %v1778 = vshrl.u32 %v1777, 7
    %v1779 = vsub.s32 0, %v1778
    %v1780 = vrot.slane %v1776, %v1779
    %v1781 = vmul.f32 %v1780, %v529
    %v1782 = vmul.f32 %v1780, %v531
    %v1783 = vadd.f32 %v1774, %v1781
    %v1784 = vadd.f32 %v1775, %v1782
    %v1785 = vld [vmem:[%s3 + $0x59] sm:$0x1]
    %v1786 = vlaneseq
    %v1787 = vshrl.u32 %v1786, 7
    %v1788 = vsub.s32 0, %v1787
    %v1789 = vrot.slane %v1785, %v1788
    %v1790 = vmul.f32 %v1789, %v41
    %v1791 = vmul.f32 %v1789, %v42
    %v1792 = vadd.f32 %v1783, %v1790
    %v1793 = vadd.f32 %v1784, %v1791
    %v1794 = vld [vmem:[%s3 + $0x5a] sm:$0x1]
    %v1795 = vlaneseq
    %v1796 = vshrl.u32 %v1795, 7
    %v1797 = vsub.s32 0, %v1796
    %v1798 = vrot.slane %v1794, %v1797
    %v1799 = vmul.f32 %v1798, %v569
    %v1800 = vmul.f32 %v1798, %v571
    %v1801 = vadd.f32 %v1792, %v1799
    %v1802 = vadd.f32 %v1793, %v1800
    %v1803 = vld [vmem:[%s3 + $0x5b] sm:$0x1]
    %1804 = vrot.lane.b32.xlu0 %v41, 124
    %v1805 = vpop.permute.xlu0 %1804
    %1806 = vrot.lane.b32.xlu0 %v42, 124
    %v1807 = vpop.permute.xlu0 %1806
    %v1808 = vlaneseq
    %v1809 = vshrl.u32 %v1808, 7
    %v1810 = vsub.s32 0, %v1809
    %v1811 = vrot.slane %v1803, %v1810
    %v1812 = vmul.f32 %v1811, %v1805
    %v1813 = vmul.f32 %v1811, %v1807
    %v1814 = vadd.f32 %v1801, %v1812
    %v1815 = vadd.f32 %v1802, %v1813
    %v1816 = vld [vmem:[%s3 + $0x5c] sm:$0x1]
    %1817 = vrot.lane.b32.xlu0 %v640, 4
    %v1818 = vpop.permute.xlu0 %1817
    %1819 = vrot.lane.b32.xlu0 %v641, 4
    %v1820 = vpop.permute.xlu0 %1819
    %v1821 = vlaneseq
    %v1822 = vshrl.u32 %v1821, 7
    %v1823 = vsub.s32 0, %v1822
    %v1824 = vrot.slane %v1816, %v1823
    %v1825 = vmul.f32 %v1824, %v1818
    %v1826 = vmul.f32 %v1824, %v1820
    %v1827 = vadd.f32 %v1814, %v1825
    %v1828 = vadd.f32 %v1815, %v1826
    %v1829 = vld [vmem:[%s3 + $0x5d] sm:$0x1]
    %v1830 = vlaneseq
    %v1831 = vshrl.u32 %v1830, 7
    %v1832 = vsub.s32 0, %v1831
    %v1833 = vrot.slane %v1829, %v1832
    %v1834 = vmul.f32 %v1833, %v644
    %v1835 = vmul.f32 %v1833, %v646
    %v1836 = vadd.f32 %v1827, %v1834
    %v1837 = vadd.f32 %v1828, %v1835
    %v1838 = vld [vmem:[%s3 + $0x5e] sm:$0x1]
    %v1839 = vlaneseq
    %v1840 = vshrl.u32 %v1839, 7
    %v1841 = vsub.s32 0, %v1840
    %v1842 = vrot.slane %v1838, %v1841
    %v1843 = vmul.f32 %v1842, %v640
    %v1844 = vmul.f32 %v1842, %v641
    %v1845 = vadd.f32 %v1836, %v1843
    %v1846 = vadd.f32 %v1837, %v1844
    %v1847 = vld [vmem:[%s3 + $0x5f] sm:$0x1]
    %v1848 = vlaneseq
    %v1849 = vshrl.u32 %v1848, 7
    %v1850 = vsub.s32 0, %v1849
    %v1851 = vrot.slane %v1847, %v1850
    %v1852 = vmul.f32 %v1851, %v692
    %v1853 = vmul.f32 %v1851, %v694
    %v1854 = vadd.f32 %v1845, %v1852
    %v1855 = vadd.f32 %v1846, %v1853
    %v1856 = vld [vmem:[%s3 + $0x60] sm:$0x1]
    %1857 = vrot.lane.b32.xlu0 %v640, 124
    %v1858 = vpop.permute.xlu0 %1857
    %1859 = vrot.lane.b32.xlu0 %v641, 124
    %v1860 = vpop.permute.xlu0 %1859
    %v1861 = vlaneseq
    %v1862 = vshrl.u32 %v1861, 7
    %v1863 = vsub.s32 0, %v1862
    %v1864 = vrot.slane %v1856, %v1863
    %v1865 = vmul.f32 %v1864, %v1858
    %v1866 = vmul.f32 %v1864, %v1860
    %v1867 = vadd.f32 %v1854, %v1865
    %v1868 = vadd.f32 %v1855, %v1866
    %vm1869 = vcmp.lt.s32.totalorder %v45, 12
    %vm1870 = vcmp.lt.s32.totalorder %v46, 12
    %v1871 = vsel %vm1869, %v1645, 0.0
    %v1872 = vsel %vm1870, %v1646, 0.0
    %v1873 = vld [vmem:[%s3 + $0x61] sm:$0x1]
    %1874 = vrot.lane.b32.xlu0 %v1871, 4
    %v1875 = vpop.permute.xlu0 %1874
    %1876 = vrot.lane.b32.xlu0 %v1872, 4
    %v1877 = vpop.permute.xlu0 %1876
    %v1878 = vlaneseq
    %v1879 = vshrl.u32 %v1878, 7
    %v1880 = vsub.s32 0, %v1879
    %v1881 = vrot.slane %v1873, %v1880
    %v1882 = vmul.f32 %v1881, %v1875
    %v1883 = vmul.f32 %v1881, %v1877
    %v1884 = vadd.f32 %v1867, %v1882
    %v1885 = vadd.f32 %v1868, %v1883
    %v1886 = vld [vmem:[%s3 + $0x62] sm:$0x1]
    %1887 = vrot.lane.b32.xlu0 %v1871, 2
    %v1888 = vpop.permute.xlu0 %1887
    %1889 = vrot.lane.b32.xlu0 %v1872, 2
    %v1890 = vpop.permute.xlu0 %1889
    %v1891 = vlaneseq
    %v1892 = vshrl.u32 %v1891, 7
    %v1893 = vsub.s32 0, %v1892
    %v1894 = vrot.slane %v1886, %v1893
    %v1895 = vmul.f32 %v1894, %v1888
    %v1896 = vmul.f32 %v1894, %v1890
    %v1897 = vadd.f32 %v1884, %v1895
    %v1898 = vadd.f32 %v1885, %v1896
    %v1899 = vld [vmem:[%s3 + $0x63] sm:$0x1]
    %v1900 = vlaneseq
    %v1901 = vshrl.u32 %v1900, 7
    %v1902 = vsub.s32 0, %v1901
    %v1903 = vrot.slane %v1899, %v1902
    %v1904 = vmul.f32 %v1903, %v1871
    %v1905 = vmul.f32 %v1903, %v1872
    %v1906 = vadd.f32 %v1897, %v1904
    %v1907 = vadd.f32 %v1898, %v1905
    %v1908 = vld [vmem:[%s3 + $0x64] sm:$0x1]
    %1909 = vrot.lane.b32.xlu0 %v1871, 126
    %v1910 = vpop.permute.xlu0 %1909
    %1911 = vrot.lane.b32.xlu0 %v1872, 126
    %v1912 = vpop.permute.xlu0 %1911
    %v1913 = vlaneseq
    %v1914 = vshrl.u32 %v1913, 7
    %v1915 = vsub.s32 0, %v1914
    %v1916 = vrot.slane %v1908, %v1915
    %v1917 = vmul.f32 %v1916, %v1910
    %v1918 = vmul.f32 %v1916, %v1912
    %v1919 = vadd.f32 %v1906, %v1917
    %v1920 = vadd.f32 %v1907, %v1918
    %v1921 = vld [vmem:[%s3 + $0x65] sm:$0x1]
    %1922 = vrot.lane.b32.xlu0 %v1871, 124
    %v1923 = vpop.permute.xlu0 %1922
    %1924 = vrot.lane.b32.xlu0 %v1872, 124
    %v1925 = vpop.permute.xlu0 %1924
    %v1926 = vlaneseq
    %v1927 = vshrl.u32 %v1926, 7
    %v1928 = vsub.s32 0, %v1927
    %v1929 = vrot.slane %v1921, %v1928
    %v1930 = vmul.f32 %v1929, %v1923
    %v1931 = vmul.f32 %v1929, %v1925
    %v1932 = vadd.f32 %v1919, %v1930
    %v1933 = vadd.f32 %v1920, %v1931
    %v1934 = vld [vmem:[%s4 + $0x14] sm:$0x1]
    %v1935 = vlaneseq
    %v1936 = vshrl.u32 %v1935, 7
    %v1937 = vsub.s32 0, %v1936
    %v1938 = vrot.slane %v1934, %v1937
    %v1939 = vmul.f32 %v1938, %v1932
    %v1940 = vmul.f32 %v1938, %v1933
    %1941 = vrot.lane.b32.xlu0 %v1932, 32
    %v1942 = vpop.permute.xlu0 %1941
    %1943 = vrot.lane.b32.xlu0 %v1933, 32
    %v1944 = vpop.permute.xlu0 %1943
    %v1945 = vld [vmem:[%s4 + $0x15] sm:$0x1]
    %v1946 = vlaneseq
    %v1947 = vshrl.u32 %v1946, 7
    %v1948 = vsub.s32 0, %v1947
    %v1949 = vrot.slane %v1945, %v1948
    %v1950 = vmul.f32 %v1949, %v1942
    %v1951 = vmul.f32 %v1949, %v1944
    %v1952 = vadd.f32 %v1939, %v1950
    %v1953 = vadd.f32 %v1940, %v1951
    %1954 = vrot.lane.b32.xlu0 %v1932, 64
    %v1955 = vpop.permute.xlu0 %1954
    %1956 = vrot.lane.b32.xlu0 %v1933, 64
    %v1957 = vpop.permute.xlu0 %1956
    %v1958 = vld [vmem:[%s4 + $0x16] sm:$0x1]
    %v1959 = vlaneseq
    %v1960 = vshrl.u32 %v1959, 7
    %v1961 = vsub.s32 0, %v1960
    %v1962 = vrot.slane %v1958, %v1961
    %v1963 = vmul.f32 %v1962, %v1955
    %v1964 = vmul.f32 %v1962, %v1957
    %v1965 = vadd.f32 %v1952, %v1963
    %v1966 = vadd.f32 %v1953, %v1964
    %1967 = vrot.lane.b32.xlu0 %v1932, 96
    %v1968 = vpop.permute.xlu0 %1967
    %1969 = vrot.lane.b32.xlu0 %v1933, 96
    %v1970 = vpop.permute.xlu0 %1969
    %v1971 = vld [vmem:[%s4 + $0x17] sm:$0x1]
    %v1972 = vlaneseq
    %v1973 = vshrl.u32 %v1972, 7
    %v1974 = vsub.s32 0, %v1973
    %v1975 = vrot.slane %v1971, %v1974
    %v1976 = vmul.f32 %v1975, %v1968
    %v1977 = vmul.f32 %v1975, %v1970
    %v1978 = vadd.f32 %v1965, %v1976
    %v1979 = vadd.f32 %v1966, %v1977
    %v1980 = vld [vmem:[%s4 + $0x18] sm:$0x1]
    %v1981 = vlaneseq
    %v1982 = vshrl.u32 %v1981, 7
    %v1983 = vsub.s32 0, %v1982
    %v1984 = vrot.slane %v1980, %v1983
    %v1985 = vmul.f32 %v1984, %v41
    %v1986 = vmul.f32 %v1984, %v42
    %1987 = vrot.lane.b32.xlu0 %v41, 32
    %v1988 = vpop.permute.xlu0 %1987
    %1989 = vrot.lane.b32.xlu0 %v42, 32
    %v1990 = vpop.permute.xlu0 %1989
    %v1991 = vld [vmem:[%s4 + $0x19] sm:$0x1]
    %v1992 = vlaneseq
    %v1993 = vshrl.u32 %v1992, 7
    %v1994 = vsub.s32 0, %v1993
    %v1995 = vrot.slane %v1991, %v1994
    %v1996 = vmul.f32 %v1995, %v1988
    %v1997 = vmul.f32 %v1995, %v1990
    %v1998 = vadd.f32 %v1985, %v1996
    %v1999 = vadd.f32 %v1986, %v1997
    %2000 = vrot.lane.b32.xlu0 %v41, 64
    %v2001 = vpop.permute.xlu0 %2000
    %2002 = vrot.lane.b32.xlu0 %v42, 64
    %v2003 = vpop.permute.xlu0 %2002
    %v2004 = vld [vmem:[%s4 + $0x1a] sm:$0x1]
    %v2005 = vlaneseq
    %v2006 = vshrl.u32 %v2005, 7
    %v2007 = vsub.s32 0, %v2006
    %v2008 = vrot.slane %v2004, %v2007
    %v2009 = vmul.f32 %v2008, %v2001
    %v2010 = vmul.f32 %v2008, %v2003
    %v2011 = vadd.f32 %v1998, %v2009
    %v2012 = vadd.f32 %v1999, %v2010
    %2013 = vrot.lane.b32.xlu0 %v41, 96
    %v2014 = vpop.permute.xlu0 %2013
    %2015 = vrot.lane.b32.xlu0 %v42, 96
    %v2016 = vpop.permute.xlu0 %2015
    %v2017 = vld [vmem:[%s4 + $0x1b] sm:$0x1]
    %v2018 = vlaneseq
    %v2019 = vshrl.u32 %v2018, 7
    %v2020 = vsub.s32 0, %v2019
    %v2021 = vrot.slane %v2017, %v2020
    %v2022 = vmul.f32 %v2021, %v2014
    %v2023 = vmul.f32 %v2021, %v2016
    %v2024 = vadd.f32 %v2011, %v2022
    %v2025 = vadd.f32 %v2012, %v2023
    %v2026 = vld [vmem:[%s5] sm:$0x1]
    %v2027 = vlaneseq
    %v2028 = vshrl.u32 %v2027, 7
    %v2029 = vsub.s32 0, %v2028
    %v2030 = vrot.slane %v2026, %v2029
    %v2031 = vmul.f32 %v2030, %v253
    %v2032 = vmul.f32 %v2030, %v255
    %v2033 = vld [vmem:[%s5 + $0x1] sm:$0x1]
    %v2034 = vlaneseq
    %v2035 = vshrl.u32 %v2034, 7
    %v2036 = vsub.s32 0, %v2035
    %v2037 = vrot.slane %v2033, %v2036
    %v2038 = vmul.f32 %v2037, %v253
    %v2039 = vmul.f32 %v2037, %v255
    %v2040 = vld [vmem:[%s5 + $0x2] sm:$0x1]
    %v2041 = vlaneseq
    %v2042 = vshrl.u32 %v2041, 7
    %v2043 = vsub.s32 0, %v2042
    %v2044 = vrot.slane %v2040, %v2043
    %v2045 = vmul.f32 %v2044, %v253
    %v2046 = vmul.f32 %v2044, %v255
    %v2047 = vld [vmem:[%s5 + $0x3] sm:$0x1]
    %v2048 = vlaneseq
    %v2049 = vshrl.u32 %v2048, 7
    %v2050 = vsub.s32 0, %v2049
    %v2051 = vrot.slane %v2047, %v2050
    %v2052 = vmul.f32 %v2051, %v253
    %v2053 = vmul.f32 %v2051, %v255
    %v2054 = vld [vmem:[%s5 + $0x4] sm:$0x1]
    %v2055 = vlaneseq
    %v2056 = vshrl.u32 %v2055, 7
    %v2057 = vsub.s32 0, %v2056
    %v2058 = vrot.slane %v2054, %v2057
    %v2059 = vmul.f32 %v2058, %v249
    %v2060 = vmul.f32 %v2058, %v250
    %v2061 = vadd.f32 %v2031, %v2059
    %v2062 = vadd.f32 %v2032, %v2060
    %v2063 = vld [vmem:[%s5 + $0x5] sm:$0x1]
    %v2064 = vlaneseq
    %v2065 = vshrl.u32 %v2064, 7
    %v2066 = vsub.s32 0, %v2065
    %v2067 = vrot.slane %v2063, %v2066
    %v2068 = vmul.f32 %v2067, %v249
    %v2069 = vmul.f32 %v2067, %v250
    %v2070 = vadd.f32 %v2038, %v2068
    %v2071 = vadd.f32 %v2039, %v2069
    %v2072 = vld [vmem:[%s5 + $0x6] sm:$0x1]
    %v2073 = vlaneseq
    %v2074 = vshrl.u32 %v2073, 7
    %v2075 = vsub.s32 0, %v2074
    %v2076 = vrot.slane %v2072, %v2075
    %v2077 = vmul.f32 %v2076, %v249
    %v2078 = vmul.f32 %v2076, %v250
    %v2079 = vadd.f32 %v2045, %v2077
    %v2080 = vadd.f32 %v2046, %v2078
    %v2081 = vld [vmem:[%s5 + $0x7] sm:$0x1]
    %v2082 = vlaneseq
    %v2083 = vshrl.u32 %v2082, 7
    %v2084 = vsub.s32 0, %v2083
    %v2085 = vrot.slane %v2081, %v2084
    %v2086 = vmul.f32 %v2085, %v249
    %v2087 = vmul.f32 %v2085, %v250
    %v2088 = vadd.f32 %v2052, %v2086
    %v2089 = vadd.f32 %v2053, %v2087
    %v2090 = vld [vmem:[%s5 + $0x8] sm:$0x1]
    %v2091 = vlaneseq
    %v2092 = vshrl.u32 %v2091, 7
    %v2093 = vsub.s32 0, %v2092
    %v2094 = vrot.slane %v2090, %v2093
    %v2095 = vmul.f32 %v2094, %v273
    %v2096 = vmul.f32 %v2094, %v275
    %v2097 = vadd.f32 %v2061, %v2095
    %v2098 = vadd.f32 %v2062, %v2096
    %v2099 = vld [vmem:[%s5 + $0x9] sm:$0x1]
    %v2100 = vlaneseq
    %v2101 = vshrl.u32 %v2100, 7
    %v2102 = vsub.s32 0, %v2101
    %v2103 = vrot.slane %v2099, %v2102
    %v2104 = vmul.f32 %v2103, %v273
    %v2105 = vmul.f32 %v2103, %v275
    %v2106 = vadd.f32 %v2070, %v2104
    %v2107 = vadd.f32 %v2071, %v2105
    %v2108 = vld [vmem:[%s5 + $0xa] sm:$0x1]
    %v2109 = vlaneseq
    %v2110 = vshrl.u32 %v2109, 7
    %v2111 = vsub.s32 0, %v2110
    %v2112 = vrot.slane %v2108, %v2111
    %v2113 = vmul.f32 %v2112, %v273
    %v2114 = vmul.f32 %v2112, %v275
    %v2115 = vadd.f32 %v2079, %v2113
    %v2116 = vadd.f32 %v2080, %v2114
    %v2117 = vld [vmem:[%s5 + $0xb] sm:$0x1]
    %v2118 = vlaneseq
    %v2119 = vshrl.u32 %v2118, 7
    %v2120 = vsub.s32 0, %v2119
    %v2121 = vrot.slane %v2117, %v2120
    %v2122 = vmul.f32 %v2121, %v273
    %v2123 = vmul.f32 %v2121, %v275
    %v2124 = vadd.f32 %v2088, %v2122
    %v2125 = vadd.f32 %v2089, %v2123
    %v2126 = vld [vmem:[%s5 + $0xc] sm:$0x1]
    %v2127 = vlaneseq
    %v2128 = vshrl.u32 %v2127, 7
    %v2129 = vsub.s32 0, %v2128
    %v2130 = vrot.slane %v2126, %v2129
    %v2131 = vmul.f32 %v2130, %v286
    %v2132 = vmul.f32 %v2130, %v288
    %v2133 = vadd.f32 %v2097, %v2131
    %v2134 = vadd.f32 %v2098, %v2132
    %v2135 = vld [vmem:[%s5 + $0xd] sm:$0x1]
    %v2136 = vlaneseq
    %v2137 = vshrl.u32 %v2136, 7
    %v2138 = vsub.s32 0, %v2137
    %v2139 = vrot.slane %v2135, %v2138
    %v2140 = vmul.f32 %v2139, %v286
    %v2141 = vmul.f32 %v2139, %v288
    %v2142 = vadd.f32 %v2106, %v2140
    %v2143 = vadd.f32 %v2107, %v2141
    %v2144 = vld [vmem:[%s5 + $0xe] sm:$0x1]
    %v2145 = vlaneseq
    %v2146 = vshrl.u32 %v2145, 7
    %v2147 = vsub.s32 0, %v2146
    %v2148 = vrot.slane %v2144, %v2147
    %v2149 = vmul.f32 %v2148, %v286
    %v2150 = vmul.f32 %v2148, %v288
    %v2151 = vadd.f32 %v2115, %v2149
    %v2152 = vadd.f32 %v2116, %v2150
    %v2153 = vld [vmem:[%s5 + $0xf] sm:$0x1]
    %v2154 = vlaneseq
    %v2155 = vshrl.u32 %v2154, 7
    %v2156 = vsub.s32 0, %v2155
    %v2157 = vrot.slane %v2153, %v2156
    %v2158 = vmul.f32 %v2157, %v286
    %v2159 = vmul.f32 %v2157, %v288
    %v2160 = vadd.f32 %v2124, %v2158
    %v2161 = vadd.f32 %v2125, %v2159
    %v2162 = vld [vmem:[%s5 + $0x10] sm:$0x1]
    %v2163 = vlaneseq
    %v2164 = vshrl.u32 %v2163, 7
    %v2165 = vsub.s32 0, %v2164
    %v2166 = vrot.slane %v2162, %v2165
    %v2167 = vmul.f32 %v2166, %v41
    %v2168 = vmul.f32 %v2166, %v42
    %v2169 = vadd.f32 %v2133, %v2167
    %v2170 = vadd.f32 %v2134, %v2168
    %v2171 = vld [vmem:[%s5 + $0x11] sm:$0x1]
    %v2172 = vlaneseq
    %v2173 = vshrl.u32 %v2172, 7
    %v2174 = vsub.s32 0, %v2173
    %v2175 = vrot.slane %v2171, %v2174
    %v2176 = vmul.f32 %v2175, %v41
    %v2177 = vmul.f32 %v2175, %v42
    %v2178 = vadd.f32 %v2142, %v2176
    %v2179 = vadd.f32 %v2143, %v2177
    %v2180 = vld [vmem:[%s5 + $0x12] sm:$0x1]
    %v2181 = vlaneseq
    %v2182 = vshrl.u32 %v2181, 7
    %v2183 = vsub.s32 0, %v2182
    %v2184 = vrot.slane %v2180, %v2183
    %v2185 = vmul.f32 %v2184, %v41
    %v2186 = vmul.f32 %v2184, %v42
    %v2187 = vadd.f32 %v2151, %v2185
    %v2188 = vadd.f32 %v2152, %v2186
    %v2189 = vld [vmem:[%s5 + $0x13] sm:$0x1]
    %v2190 = vlaneseq
    %v2191 = vshrl.u32 %v2190, 7
    %v2192 = vsub.s32 0, %v2191
    %v2193 = vrot.slane %v2189, %v2192
    %v2194 = vmul.f32 %v2193, %v41
    %v2195 = vmul.f32 %v2193, %v42
    %v2196 = vadd.f32 %v2160, %v2194
    %v2197 = vadd.f32 %v2161, %v2195
    %v2198 = vld [vmem:[%s5 + $0x14] sm:$0x1]
    %v2199 = vlaneseq
    %v2200 = vshrl.u32 %v2199, 7
    %v2201 = vsub.s32 0, %v2200
    %v2202 = vrot.slane %v2198, %v2201
    %v2203 = vmul.f32 %v2202, %v308
    %v2204 = vmul.f32 %v2202, %v310
    %v2205 = vadd.f32 %v2169, %v2203
    %v2206 = vadd.f32 %v2170, %v2204
    %v2207 = vld [vmem:[%s5 + $0x15] sm:$0x1]
    %v2208 = vlaneseq
    %v2209 = vshrl.u32 %v2208, 7
    %v2210 = vsub.s32 0, %v2209
    %v2211 = vrot.slane %v2207, %v2210
    %v2212 = vmul.f32 %v2211, %v308
    %v2213 = vmul.f32 %v2211, %v310
    %v2214 = vadd.f32 %v2178, %v2212
    %v2215 = vadd.f32 %v2179, %v2213
    %v2216 = vld [vmem:[%s5 + $0x16] sm:$0x1]
    %v2217 = vlaneseq
    %v2218 = vshrl.u32 %v2217, 7
    %v2219 = vsub.s32 0, %v2218
    %v2220 = vrot.slane %v2216, %v2219
    %v2221 = vmul.f32 %v2220, %v308
    %v2222 = vmul.f32 %v2220, %v310
    %v2223 = vadd.f32 %v2187, %v2221
    %v2224 = vadd.f32 %v2188, %v2222
    %v2225 = vld [vmem:[%s5 + $0x17] sm:$0x1]
    %v2226 = vlaneseq
    %v2227 = vshrl.u32 %v2226, 7
    %v2228 = vsub.s32 0, %v2227
    %v2229 = vrot.slane %v2225, %v2228
    %v2230 = vmul.f32 %v2229, %v308
    %v2231 = vmul.f32 %v2229, %v310
    %v2232 = vadd.f32 %v2196, %v2230
    %v2233 = vadd.f32 %v2197, %v2231
    %v2234 = vld [vmem:[%s5 + $0x18] sm:$0x1]
    %v2235 = vlaneseq
    %v2236 = vshrl.u32 %v2235, 7
    %v2237 = vsub.s32 0, %v2236
    %v2238 = vrot.slane %v2234, %v2237
    %v2239 = vmul.f32 %v2238, %v327
    %v2240 = vmul.f32 %v2238, %v329
    %v2241 = vadd.f32 %v2205, %v2239
    %v2242 = vadd.f32 %v2206, %v2240
    %v2243 = vld [vmem:[%s5 + $0x19] sm:$0x1]
    %v2244 = vlaneseq
    %v2245 = vshrl.u32 %v2244, 7
    %v2246 = vsub.s32 0, %v2245
    %v2247 = vrot.slane %v2243, %v2246
    %v2248 = vmul.f32 %v2247, %v327
    %v2249 = vmul.f32 %v2247, %v329
    %v2250 = vadd.f32 %v2214, %v2248
    %v2251 = vadd.f32 %v2215, %v2249
    %v2252 = vld [vmem:[%s5 + $0x1a] sm:$0x1]
    %v2253 = vlaneseq
    %v2254 = vshrl.u32 %v2253, 7
    %v2255 = vsub.s32 0, %v2254
    %v2256 = vrot.slane %v2252, %v2255
    %v2257 = vmul.f32 %v2256, %v327
    %v2258 = vmul.f32 %v2256, %v329
    %v2259 = vadd.f32 %v2223, %v2257
    %v2260 = vadd.f32 %v2224, %v2258
    %v2261 = vld [vmem:[%s5 + $0x1b] sm:$0x1]
    %v2262 = vlaneseq
    %v2263 = vshrl.u32 %v2262, 7
    %v2264 = vsub.s32 0, %v2263
    %v2265 = vrot.slane %v2261, %v2264
    %v2266 = vmul.f32 %v2265, %v327
    %v2267 = vmul.f32 %v2265, %v329
    %v2268 = vadd.f32 %v2232, %v2266
    %v2269 = vadd.f32 %v2233, %v2267
    %v2270 = vld [vmem:[%s5 + $0x1c] sm:$0x1]
    %v2271 = vlaneseq
    %v2272 = vshrl.u32 %v2271, 7
    %v2273 = vsub.s32 0, %v2272
    %v2274 = vrot.slane %v2270, %v2273
    %v2275 = vmul.f32 %v2274, %v323
    %v2276 = vmul.f32 %v2274, %v324
    %v2277 = vadd.f32 %v2241, %v2275
    %v2278 = vadd.f32 %v2242, %v2276
    %v2279 = vld [vmem:[%s5 + $0x1d] sm:$0x1]
    %v2280 = vlaneseq
    %v2281 = vshrl.u32 %v2280, 7
    %v2282 = vsub.s32 0, %v2281
    %v2283 = vrot.slane %v2279, %v2282
    %v2284 = vmul.f32 %v2283, %v323
    %v2285 = vmul.f32 %v2283, %v324
    %v2286 = vadd.f32 %v2250, %v2284
    %v2287 = vadd.f32 %v2251, %v2285
    %v2288 = vld [vmem:[%s5 + $0x1e] sm:$0x1]
    %v2289 = vlaneseq
    %v2290 = vshrl.u32 %v2289, 7
    %v2291 = vsub.s32 0, %v2290
    %v2292 = vrot.slane %v2288, %v2291
    %v2293 = vmul.f32 %v2292, %v323
    %v2294 = vmul.f32 %v2292, %v324
    %v2295 = vadd.f32 %v2259, %v2293
    %v2296 = vadd.f32 %v2260, %v2294
    %v2297 = vld [vmem:[%s5 + $0x1f] sm:$0x1]
    %v2298 = vlaneseq
    %v2299 = vshrl.u32 %v2298, 7
    %v2300 = vsub.s32 0, %v2299
    %v2301 = vrot.slane %v2297, %v2300
    %v2302 = vmul.f32 %v2301, %v323
    %v2303 = vmul.f32 %v2301, %v324
    %v2304 = vadd.f32 %v2268, %v2302
    %v2305 = vadd.f32 %v2269, %v2303
    %v2306 = vld [vmem:[%s5 + $0x20] sm:$0x1]
    %v2307 = vlaneseq
    %v2308 = vshrl.u32 %v2307, 7
    %v2309 = vsub.s32 0, %v2308
    %v2310 = vrot.slane %v2306, %v2309
    %v2311 = vmul.f32 %v2310, %v349
    %v2312 = vmul.f32 %v2310, %v351
    %v2313 = vadd.f32 %v2277, %v2311
    %v2314 = vadd.f32 %v2278, %v2312
    %v2315 = vld [vmem:[%s5 + $0x21] sm:$0x1]
    %v2316 = vlaneseq
    %v2317 = vshrl.u32 %v2316, 7
    %v2318 = vsub.s32 0, %v2317
    %v2319 = vrot.slane %v2315, %v2318
    %v2320 = vmul.f32 %v2319, %v349
    %v2321 = vmul.f32 %v2319, %v351
    %v2322 = vadd.f32 %v2286, %v2320
    %v2323 = vadd.f32 %v2287, %v2321
    %v2324 = vld [vmem:[%s5 + $0x22] sm:$0x1]
    %v2325 = vlaneseq
    %v2326 = vshrl.u32 %v2325, 7
    %v2327 = vsub.s32 0, %v2326
    %v2328 = vrot.slane %v2324, %v2327
    %v2329 = vmul.f32 %v2328, %v349
    %v2330 = vmul.f32 %v2328, %v351
    %v2331 = vadd.f32 %v2295, %v2329
    %v2332 = vadd.f32 %v2296, %v2330
    %v2333 = vld [vmem:[%s5 + $0x23] sm:$0x1]
    %v2334 = vlaneseq
    %v2335 = vshrl.u32 %v2334, 7
    %v2336 = vsub.s32 0, %v2335
    %v2337 = vrot.slane %v2333, %v2336
    %v2338 = vmul.f32 %v2337, %v349
    %v2339 = vmul.f32 %v2337, %v351
    %v2340 = vadd.f32 %v2304, %v2338
    %v2341 = vadd.f32 %v2305, %v2339
    %2342 = vrot.lane.b32.xlu0 %v2322, 32
    %v2343 = vpop.permute.xlu0 %2342
    %2344 = vrot.lane.b32.xlu0 %v2323, 32
    %v2345 = vpop.permute.xlu0 %2344
    %v2346 = vadd.f32 %v2313, %v2343
    %v2347 = vadd.f32 %v2314, %v2345
    %2348 = vrot.lane.b32.xlu0 %v2331, 64
    %v2349 = vpop.permute.xlu0 %2348
    %2350 = vrot.lane.b32.xlu0 %v2332, 64
    %v2351 = vpop.permute.xlu0 %2350
    %v2352 = vadd.f32 %v2346, %v2349
    %v2353 = vadd.f32 %v2347, %v2351
    %2354 = vrot.lane.b32.xlu0 %v2340, 96
    %v2355 = vpop.permute.xlu0 %2354
    %2356 = vrot.lane.b32.xlu0 %v2341, 96
    %v2357 = vpop.permute.xlu0 %2356
    %v2358 = vadd.f32 %v2352, %v2355
    %v2359 = vadd.f32 %v2353, %v2357
    %v2360 = vadd.f32 %v1142, %v1143
    %v2361 = vrot.slane %v2360, 4
    %v2362 = vadd.f32 %v2360, %v2361
    %v2363 = vrot.slane %v2362, 2
    %v2364 = vadd.f32 %v2362, %v2363
    %v2365 = vrot.slane %v2364, 1
    %v2366 = vadd.f32 %v2364, %v2365
    %v2367 = vmul.f32 %v1142, %v1142
    %v2368 = vmul.f32 %v1143, %v1143
    %v2369 = vadd.f32 %v2367, %v2368
    %v2370 = vrot.slane %v2369, 4
    %v2371 = vadd.f32 %v2369, %v2370
    %v2372 = vrot.slane %v2371, 2
    %v2373 = vadd.f32 %v2371, %v2372
    %v2374 = vrot.slane %v2373, 1
    %v2375 = vadd.f32 %v2373, %v2374
    %v2376 = vadd.f32 %v1515, %v1516
    %v2377 = vrot.slane %v2376, 4
    %v2378 = vadd.f32 %v2376, %v2377
    %v2379 = vrot.slane %v2378, 2
    %v2380 = vadd.f32 %v2378, %v2379
    %v2381 = vrot.slane %v2380, 1
    %v2382 = vadd.f32 %v2380, %v2381
    %v2383 = vmul.f32 %v1515, %v1515
    %v2384 = vmul.f32 %v1516, %v1516
    %v2385 = vadd.f32 %v2383, %v2384
    %v2386 = vrot.slane %v2385, 4
    %v2387 = vadd.f32 %v2385, %v2386
    %v2388 = vrot.slane %v2387, 2
    %v2389 = vadd.f32 %v2387, %v2388
    %v2390 = vrot.slane %v2389, 1
    %v2391 = vadd.f32 %v2389, %v2390
    %v2392 = vadd.f32 %v1640, %v1641
    %v2393 = vrot.slane %v2392, 4
    %v2394 = vadd.f32 %v2392, %v2393
    %v2395 = vrot.slane %v2394, 2
    %v2396 = vadd.f32 %v2394, %v2395
    %v2397 = vrot.slane %v2396, 1
    %v2398 = vadd.f32 %v2396, %v2397
    %v2399 = vmul.f32 %v1640, %v1640
    %v2400 = vmul.f32 %v1641, %v1641
    %v2401 = vadd.f32 %v2399, %v2400
    %v2402 = vrot.slane %v2401, 4
    %v2403 = vadd.f32 %v2401, %v2402
    %v2404 = vrot.slane %v2403, 2
    %v2405 = vadd.f32 %v2403, %v2404
    %v2406 = vrot.slane %v2405, 1
    %v2407 = vadd.f32 %v2405, %v2406
    %v2408 = vadd.f32 %v1978, %v1979
    %v2409 = vrot.slane %v2408, 4
    %v2410 = vadd.f32 %v2408, %v2409
    %v2411 = vrot.slane %v2410, 2
    %v2412 = vadd.f32 %v2410, %v2411
    %v2413 = vrot.slane %v2412, 1
    %v2414 = vadd.f32 %v2412, %v2413
    %v2415 = vmul.f32 %v1978, %v1978
    %v2416 = vmul.f32 %v1979, %v1979
    %v2417 = vadd.f32 %v2415, %v2416
    %v2418 = vrot.slane %v2417, 4
    %v2419 = vadd.f32 %v2417, %v2418
    %v2420 = vrot.slane %v2419, 2
    %v2421 = vadd.f32 %v2419, %v2420
    %v2422 = vrot.slane %v2421, 1
    %v2423 = vadd.f32 %v2421, %v2422
    %v2424 = vadd.f32 %v2024, %v2025
    %v2425 = vrot.slane %v2424, 4
    %v2426 = vadd.f32 %v2424, %v2425
    %v2427 = vrot.slane %v2426, 2
    %v2428 = vadd.f32 %v2426, %v2427
    %v2429 = vrot.slane %v2428, 1
    %v2430 = vadd.f32 %v2428, %v2429
    %v2431 = vmul.f32 %v2024, %v2024
    %v2432 = vmul.f32 %v2025, %v2025
    %v2433 = vadd.f32 %v2431, %v2432
    %v2434 = vrot.slane %v2433, 4
    %v2435 = vadd.f32 %v2433, %v2434
    %v2436 = vrot.slane %v2435, 2
    %v2437 = vadd.f32 %v2435, %v2436
    %v2438 = vrot.slane %v2437, 1
    %v2439 = vadd.f32 %v2437, %v2438
    %v2440 = vadd.f32 %v2358, %v2359
    %v2441 = vrot.slane %v2440, 4
    %v2442 = vadd.f32 %v2440, %v2441
    %v2443 = vrot.slane %v2442, 2
    %v2444 = vadd.f32 %v2442, %v2443
    %v2445 = vrot.slane %v2444, 1
    %v2446 = vadd.f32 %v2444, %v2445
    %v2447 = vmul.f32 %v2358, %v2358
    %v2448 = vmul.f32 %v2359, %v2359
    %v2449 = vadd.f32 %v2447, %v2448
    %v2450 = vrot.slane %v2449, 4
    %v2451 = vadd.f32 %v2449, %v2450
    %v2452 = vrot.slane %v2451, 2
    %v2453 = vadd.f32 %v2451, %v2452
    %v2454 = vrot.slane %v2453, 1
    %v2455 = vadd.f32 %v2453, %v2454
    %v2456 = vsel %vm813, %v2366, %v2375
    %v2457 = vsel %vm815, %v2456, %v2382
    %v2458 = vsel %vm817, %v2457, %v2391
    %v2459 = vsel %vm819, %v2458, %v2398
    %v2460 = vsel %vm821, %v2459, %v2407
    %v2461 = vsel %vm823, %v2460, %v2414
    %v2462 = vsel %vm825, %v2461, %v2423
    %v2463 = vsel %vm813, %v2430, %v2439
    %v2464 = vsel %vm815, %v2463, %v2446
    %v2465 = vsel %vm817, %v2464, %v2455
    %v2466 = vsel %vm819, %v2465, 0.0
    %2467 = vmatprep.subr.mxu0 0.0
    %2468 = vmatpush1.msra.mxu0 %v827
    %2469 = vmatprep.subr.mxu0 0.0
    %2470 = vmatpush1.msra.mxu0 %v828
    %2471 = vmatprep.subr.mxu0 0.0
    %2472 = vmatpush1.msra.mxu0 %v829
    %2473 = vmatprep.subr.mxu0 0.0
    %2474 = vmatpush1.msra.mxu0 %v830
    %2475 = vmatprep.subr.mxu0 0.0
    %2476 = vmatpush1.msra.mxu0 %v831
    %2477 = vmatprep.subr.mxu0 0.0
    %2478 = vmatpush1.msra.mxu0 %v832
    %2479 = vmatprep.subr.mxu0 0.0
    %2480 = vmatpush1.msra.mxu0 %v833
    %2481 = vmatprep.subr.mxu0 0.0
    %2482 = vmatpush1.msra.mxu0 %v834
    %2483 = vmatprep.subr.mxu0 0.0
    %2484 = vmatpush1.msra.mxu0 %v835
    %2485 = vmatprep.subr.mxu0 0.0
    %2486 = vmatpush1.msra.mxu0 %v836
    %2487 = vmatprep.subr.mxu0 0.0
    %2488 = vmatpush1.msra.mxu0 %v837
    %2489 = vmatprep.subr.mxu0 0.0
    %2490 = vmatpush1.msra.mxu0 %v838
    %2491 = vmatprep.subr.mxu0 0.0
    %2492 = vmatpush1.msra.mxu0 %v839
    %2493 = vmatprep.subr.mxu0 0.0
    %2494 = vmatpush1.msra.mxu0 %v840
    %2495 = vmatprep.subr.mxu0 0.0
    %2496 = vmatpush1.msra.mxu0 %v841
    %2497 = vmatprep.subr.mxu0 0.0
    %2498 = vmatpush1.msra.mxu0 %v842
    %2499 = vmatprep.subr.mxu0 0.0
    %2500 = vmatpush1.msra.mxu0 0.0
    %2501 = vmatprep.subr.mxu0 0.0
    %2502 = vmatpush1.msra.mxu0 0.0
    %2503 = vmatprep.subr.mxu0 0.0
    %2504 = vmatpush1.msra.mxu0 0.0
    %2505 = vmatprep.subr.mxu0 0.0
    %2506 = vmatpush1.msra.mxu0 0.0
    %2507 = vmatprep.subr.mxu0 0.0
    %2508 = vmatpush1.msra.mxu0 0.0
    %2509 = vmatprep.subr.mxu0 0.0
    %2510 = vmatpush1.msra.mxu0 0.0
    %2511 = vmatprep.subr.mxu0 0.0
    %2512 = vmatpush1.msra.mxu0 0.0
    %2513 = vmatprep.subr.mxu0 0.0
    %2514 = vmatpush1.msra.mxu0 0.0
    %2515 = vmatprep.subr.mxu0 0.0
    %2516 = vmatpush1.msra.mxu0 0.0
    %2517 = vmatprep.subr.mxu0 0.0
    %2518 = vmatpush1.msra.mxu0 0.0
    %2519 = vmatprep.subr.mxu0 0.0
    %2520 = vmatpush1.msra.mxu0 0.0
    %2521 = vmatprep.subr.mxu0 0.0
    %2522 = vmatpush1.msra.mxu0 0.0
    %2523 = vmatprep.subr.mxu0 0.0
    %2524 = vmatpush1.msra.mxu0 0.0
    %2525 = vmatprep.subr.mxu0 0.0
    %2526 = vmatpush1.msra.mxu0 0.0
    %2527 = vmatprep.subr.mxu0 0.0
    %2528 = vmatpush1.msra.mxu0 0.0
    %2529 = vmatprep.subr.mxu0 0.0
    %2530 = vmatpush1.msra.mxu0 0.0
    %2531 = vmatprep.mubr.f32.mxu0 0.0
    %2532 = vmatmul.mubr.f32.gmra.mrb[0].mxu0 %v2462
    %v2533 = vpop.f32.mrb[0].mxu0
    %v2534 = vadd.f32 0.0, %v2533
    %v2535 = vpop.f32.mrb[0].mxu0
    %2536 = vmatprep.mubr.f32.mxu0 0.0
    %2537 = vmatmul.mubr.f32.gmra.mrb[0].mxu0 %v2466
    %v2538 = vpop.f32.mrb[0].mxu0
    %v2539 = vadd.f32 0.0, %v2538
    %v2540 = vpop.f32.mrb[0].mxu0
    %2541 = vdwg.mxu0
    %s2542 = sld [smem:[#allocation2 + $0x4]]
    %v2543 = vmul.f32 %v2534, %v2534
    %v2545 = vrot.slane %v2543, 7
    %v2547 = vsub.f32 %v2534, %v2545
    %v2548 = vmax.f32 %v2547, 0.0
    %v2549 = vlaneseq
    %v2550 = vshrl.u32 %v2549, 7
    %v2551 = vsub.s32 0, %v2550
    %v2552 = vrot.slane %v2534, %v2551
    %v2553 = vsub.f32 %v1142, %v2552
    %v2554 = vsub.f32 %v1143, %v2552
    %v2555 = vadd.f32 %v2548, 1e-05
    %v2556 = vrsqrt.pop %v2555
    %v2557 = vstv %s2542
    %v2558 = vmul.f32 %v2557, %v2556
    %v2559 = vlaneseq
    %v2560 = vshrl.u32 %v2559, 7
    %v2561 = vsub.s32 1, %v2560
    %v2562 = vrot.slane %v2558, %v2561
    %v2563 = vmul.f32 %v2553, %v2562
    %v2564 = vmul.f32 %v2554, %v2562
    %v2565 = vadd.f32 %v953, %v2563
    %v2566 = vadd.f32 %v954, %v2564
    %s2567 = sld [smem:[#allocation2 + $0x5]]
    %v2568 = vlaneseq
    %v2569 = vshrl.u32 %v2568, 7
    %v2570 = vsub.s32 2, %v2569
    %v2571 = vrot.slane %v2534, %v2570
    %v2572 = vsub.f32 %v1515, %v2571
    %v2573 = vsub.f32 %v1516, %v2571
    %v2574 = vstv %s2567
    %v2575 = vmul.f32 %v2574, %v2556
    %v2576 = vlaneseq
    %v2577 = vshrl.u32 %v2576, 7
    %v2578 = vsub.s32 3, %v2577
    %v2579 = vrot.slane %v2575, %v2578
    %v2580 = vmul.f32 %v2572, %v2579
    %v2581 = vmul.f32 %v2573, %v2579
    %v2582 = vadd.f32 %v2565, %v2580
    %v2583 = vadd.f32 %v2566, %v2581
    %s2584 = sld [smem:[#allocation2 + $0x6]]
    %v2585 = vlaneseq
    %v2586 = vshrl.u32 %v2585, 7
    %v2587 = vsub.s32 4, %v2586
    %v2588 = vrot.slane %v2534, %v2587
    %v2589 = vsub.f32 %v1640, %v2588
    %v2590 = vsub.f32 %v1641, %v2588
    %v2591 = vstv %s2584
    %v2592 = vmul.f32 %v2591, %v2556
    %v2593 = vlaneseq
    %v2594 = vshrl.u32 %v2593, 7
    %v2595 = vsub.s32 5, %v2594
    %v2596 = vrot.slane %v2592, %v2595
    %v2597 = vmul.f32 %v2589, %v2596
    %v2598 = vmul.f32 %v2590, %v2596
    %v2599 = vadd.f32 %v2582, %v2597
    %v2600 = vadd.f32 %v2583, %v2598
    %s2601 = sld [smem:[#allocation2 + $0x7]]
    %v2602 = vlaneseq
    %v2603 = vshrl.u32 %v2602, 7
    %v2604 = vsub.s32 6, %v2603
    %v2605 = vrot.slane %v2534, %v2604
    %v2606 = vsub.f32 %v1978, %v2605
    %v2607 = vsub.f32 %v1979, %v2605
    %v2608 = vstv %s2601
    %v2609 = vmul.f32 %v2608, %v2556
    %v2610 = vlaneseq
    %v2611 = vshrl.u32 %v2610, 7
    %v2612 = vsub.s32 7, %v2611
    %v2613 = vrot.slane %v2609, %v2612
    %v2614 = vmul.f32 %v2606, %v2613
    %v2615 = vmul.f32 %v2607, %v2613
    %v2616 = vadd.f32 %v2599, %v2614
    %v2617 = vadd.f32 %v2600, %v2615
    %s2618 = sld [smem:[#allocation2 + $0x8]]
    %v2619 = vmul.f32 %v2539, %v2539
    %v2621 = vrot.slane %v2619, 7
    %v2623 = vsub.f32 %v2539, %v2621
    %v2624 = vmax.f32 %v2623, 0.0
    %v2625 = vlaneseq
    %v2626 = vshrl.u32 %v2625, 7
    %v2627 = vsub.s32 0, %v2626
    %v2628 = vrot.slane %v2539, %v2627
    %v2629 = vsub.f32 %v2024, %v2628
    %v2630 = vsub.f32 %v2025, %v2628
    %v2631 = vadd.f32 %v2624, 1e-05
    %v2632 = vrsqrt.pop %v2631
    %v2633 = vstv %s2618
    %v2634 = vmul.f32 %v2633, %v2632
    %v2635 = vlaneseq
    %v2636 = vshrl.u32 %v2635, 7
    %v2637 = vsub.s32 1, %v2636
    %v2638 = vrot.slane %v2634, %v2637
    %v2639 = vmul.f32 %v2629, %v2638
    %v2640 = vmul.f32 %v2630, %v2638
    %v2641 = vadd.f32 %v2616, %v2639
    %v2642 = vadd.f32 %v2617, %v2640
    %s2643 = sld [smem:[#allocation2 + $0x9]]
    %v2644 = vlaneseq
    %v2645 = vshrl.u32 %v2644, 7
    %v2646 = vsub.s32 2, %v2645
    %v2647 = vrot.slane %v2539, %v2646
    %v2648 = vsub.f32 %v2358, %v2647
    %v2649 = vsub.f32 %v2359, %v2647
    %v2650 = vstv %s2643
    %v2651 = vmul.f32 %v2650, %v2632
    %v2652 = vlaneseq
    %v2653 = vshrl.u32 %v2652, 7
    %v2654 = vsub.s32 3, %v2653
    %v2655 = vrot.slane %v2651, %v2654
    %v2656 = vmul.f32 %v2648, %v2655
    %v2657 = vmul.f32 %v2649, %v2655
    %v2658 = vadd.f32 %v2641, %v2656
    %v2659 = vadd.f32 %v2642, %v2657
    %2660 = vst [vmem:[%s7] sm:$0xff] %v2658
    %2661 = vst [vmem:[%s7 + $0x8] sm:$0xff] %v2659
    // Predicated region
    $region34: #{mixed_op_forward.1} parent=1 // pred_check
      _
    $region35: #{mixed_op_forward.1} parent=1 // pred_check_branch
      %2663 = sbr.rel (0) target = $region37
    $region36: #{mixed_op_forward.1} parent=1 // pred_region
      _
    $region37: #{mixed_op_forward.1} parent=1 // pred_fallthru
      _
    // Predicated region
    $region38: #{mixed_op_forward.1} parent=1 // pred_check
      _
    $region39: #{mixed_op_forward.1} parent=1 // pred_check_branch
      %2665 = sbr.rel (0) target = $region41
    $region40: #{mixed_op_forward.1} parent=1 // pred_region
      _
    $region41: #{mixed_op_forward.1} parent=1 // pred_fallthru
      _
    %2666 = vsyncpa [#allocation3], 1

</llo_original>
